<compile_context>
chip_gen: v7x
topology: tpu7x:2x2x1
jax: 0.10.0
libtpu: 0.0.40
codegen_flags: <defaults>
</compile_context>

<pallas_src>
import functools
import numpy as np
import jax
import jax.numpy as jnp
from jax import lax
from jax.experimental import pallas as pl
from jax.experimental.pallas import tpu as pltpu


_INV_SQRT2 = float(1.0 / np.sqrt(2.0))


def _encoding_augment_kernel(x_ref, wc_ref, cb_ref, g_ref, b_ref, wp_ref, bp_ref,
                             o_ref, *, K, TL, G, Cg):
    # x_ref  : (1, Lp, F)    zero-padded input, one batch element (f32); resident
    #                        across all time tiles of this batch (constant index).
    # wc_ref : (G, K*Cg, Cg) compressed grouped-conv weights (bf16), folded so
    #                        the (tap, in-chan) axis is a single contraction.
    # cb_ref : (1, F)        conv bias (f32)
    # g_ref/b_ref : (1, F)   LayerNorm gamma / beta (f32)
    # wp_ref : (F, 3F)       1x1 conv weight, transposed (bf16)
    # bp_ref : (1, 3F)       1x1 conv bias (f32)
    # o_ref  : (1, TL, 3F)   output time tile
    pad = K // 2
    t = pl.program_id(1)
    start = pl.multiple_of(t * TL, 8)

    # halo window for this time tile: TL rows + (K-1) conv-halo rows.
    xw = x_ref[0, pl.ds(start, TL + K - 1), :]            # (TL+K-1, F) f32

    # K shifted views (fully unrolled; static slices of the window value).
    shifted = [xw[k:k + TL, :] for k in range(K)]         # K x (TL, F)

    # ---- grouped Conv1d: one folded (TL, K*Cg) @ (K*Cg, Cg) bf16 MXU matmul
    #      per group (block-diagonal structure kept compressed).
    group_out = []
    for g in range(G):
        lo = g * Cg
        xg_col = jnp.concatenate([s[:, lo:lo + Cg] for s in shifted], axis=-1)
        group_out.append(
            jnp.dot(xg_col.astype(jnp.bfloat16), wc_ref[g],
                    preferred_element_type=jnp.float32))  # (TL, Cg) f32
    conv = jnp.concatenate(group_out, axis=-1) + cb_ref[...]   # (TL, F)

    # ---- GELU (exact erf form, matches torch.nn.GELU default) ----
    gelu = 0.5 * conv * (1.0 + lax.erf(conv * _INV_SQRT2))

    # ---- residual add with the (unpadded) rows of this tile ----
    y = shifted[pad] + gelu            # shifted[pad] == x rows [start, start+TL)

    # ---- LayerNorm over feature axis (eps=1e-5, biased variance) ----
    mean = jnp.mean(y, axis=-1, keepdims=True)
    cent = y - mean
    var = jnp.mean(cent * cent, axis=-1, keepdims=True)
    ln = cent * lax.rsqrt(var + 1e-5)
    ln = ln * g_ref[...] + b_ref[...]

    # ---- 1x1 conv == (TL, F) @ (F, 3F) + bias (bf16 MXU, f32 accumulation) ----
    out = jnp.dot(ln.astype(jnp.bfloat16), wp_ref[...],
                  preferred_element_type=jnp.float32) + bp_ref[...]
    o_ref[0] = out.astype(o_ref.dtype)


def encoding_augment_forward(x, params, mask_t=None, mask_c=None, tile_l=256):
    """x: (B, F, L) float32 (PyTorch NCL layout). Returns (B, 3F, L) float32."""
    B, F, L = x.shape
    wc = params["conv_w_folded"]                  # (G, K*Cg, Cg) bf16
    G, KCg, Cg = wc.shape
    K = KCg // Cg
    assert G * Cg == F, "in_features must be divisible by groups"
    pad = K // 2

    # --- optional masking (eval-mode glue; mirrors the PyTorch branches) ---
    if mask_t is not None:     # x.transpose(2,1)[mask_t] = mask_replacement
        x = jnp.where(mask_t[:, None, :],
                      params["mask_replacement"][None, :, None], x)
    if mask_c is not None:     # x[mask_c] = 0
        x = jnp.where(mask_c[:, :, None], 0.0, x)
    # TODO(synk): fold the optional masks (and training-time host-side numpy
    # _make_mask generation / dropout) into the kernel via scalar-prefetch inputs.

    # time tile: 256 is a safe cross-generation default (v7x has only 64 MiB
    # VMEM); bump to 512-1024 on v5e/v6e if profiling shows exposed DMA.
    TL = tile_l if L > tile_l else ((L + 7) // 8) * 8
    nT = (L + TL - 1) // TL
    L2 = nT * TL
    Lp = L2 + K - 1                                # padded time extent

    # kernel layout (B, T, F); zero-pad time for the conv halo + tile round-up
    # (the transpose + pad fuse into a single XLA pass before the kernel).
    xt = jnp.transpose(x, (0, 2, 1)).astype(jnp.float32)
    xpad = jnp.pad(xt, ((0, 0), (pad, pad + (L2 - L)), (0, 0)))

    single_buf = dict(pipeline_mode=pl.Buffered(1))   # constants: no double-buffer
    out = pl.pallas_call(
        functools.partial(_encoding_augment_kernel, K=K, TL=TL, G=G, Cg=Cg),
        out_shape=jax.ShapeDtypeStruct((B, L2, 3 * F), jnp.float32),
        grid_spec=pltpu.PrefetchScalarGridSpec(
            num_scalar_prefetch=0,
            grid=(B, nT),
            in_specs=[
                # per-batch padded input; index constant over the time axis ->
                # DMA'd once per batch, halo windows sliced in-kernel.
                pl.BlockSpec((1, Lp, F), lambda b, t: (b, 0, 0)),
                pl.BlockSpec((G, KCg, Cg), lambda b, t: (0, 0, 0), **single_buf),
                pl.BlockSpec((1, F), lambda b, t: (0, 0), **single_buf),
                pl.BlockSpec((1, F), lambda b, t: (0, 0), **single_buf),
                pl.BlockSpec((1, F), lambda b, t: (0, 0), **single_buf),
                pl.BlockSpec((F, 3 * F), lambda b, t: (0, 0), **single_buf),
                pl.BlockSpec((1, 3 * F), lambda b, t: (0, 0), **single_buf),
            ],
            out_specs=pl.BlockSpec((1, TL, 3 * F), lambda b, t: (b, t, 0)),
        ),
        compiler_params=pltpu.CompilerParams(
            dimension_semantics=("parallel", "parallel"),
            vmem_limit_bytes=64 * 1024 * 1024),
    )(xpad, wc, params["conv_bias"], params["ln_gamma"], params["ln_beta"],
      params["proj_w_t"], params["proj_bias"])

    out = out[:, :L, :]
    # NOTE: if production F < 128 the 3F output lanes are still partially
    # masked stores; repack/pad the feature axis to a multiple of 128 there.
    return jnp.transpose(out, (0, 2, 1))   # back to PyTorch (B, 3F, L)


def init_params(key, in_features, groups=16, position_encoder=25):
    """Deterministic init mirroring EncodingAugment.__init__, stored in the
    compressed / kernel-ready layouts (matmul weights in bf16)."""
    F = in_features
    K = position_encoder
    G = groups
    Cg = F // G
    transformer_dim = 3 * F
    k1, k2, k3 = jax.random.split(key, 3)

    # grouped conv weight v (F, F//G, K) ~ N(0, 2/transformer_dim), bias 0.
    # weight_norm(dim=2): w = g * v / ||v||_{dims 0,1}, with g initialized to
    # ||v||  =>  w == v at init.
    v = (2.0 / transformer_dim) * jax.random.normal(k1, (F, Cg, K), jnp.float32)
    w = np.asarray(v)                                   # (F_out, Cg_in, K)

    # compressed, folded grouped-conv weights: wc[g, k*Cg + ci, d] = w[g*Cg+d, ci, k]
    wc = w.reshape(G, Cg, Cg, K)                        # [g, d, ci, k]
    wc = np.transpose(wc, (0, 3, 2, 1)).reshape(G, K * Cg, Cg)
    conv_w_folded = jnp.asarray(wc, jnp.bfloat16)
    conv_bias = jnp.zeros((1, F), jnp.float32)

    # LayerNorm(F): default gamma=1, beta=0
    ln_gamma = jnp.ones((1, F), jnp.float32)
    ln_beta = jnp.zeros((1, F), jnp.float32)

    # Conv1d(F, 3F, 1): PyTorch default uniform(-1/sqrt(fan_in), 1/sqrt(fan_in))
    bound = 1.0 / np.sqrt(F)
    proj_w = jax.random.uniform(k2, (3 * F, F), jnp.float32, -bound, bound)
    proj_b = jax.random.uniform(k3, (1, 3 * F), jnp.float32, -bound, bound)

    return {
        "mask_replacement": jnp.zeros((F,), jnp.float32),
        "conv_w_folded": conv_w_folded,                              # (G, K*Cg, Cg) bf16
        "conv_bias": conv_bias,
        "ln_gamma": ln_gamma,
        "ln_beta": ln_beta,
        "proj_w_t": jnp.asarray(np.transpose(np.asarray(proj_w)),
                                jnp.bfloat16),                       # (F, 3F) bf16
        "proj_bias": proj_b,
    }


if __name__ == "__main__":
    key = jax.random.PRNGKey(0)
    kx, kp = jax.random.split(key)
    B, F, L = 2, 32, 16                     # feat divisible by groups=16
    x = jax.random.normal(kx, (B, F, L), jnp.float32)
    params = init_params(kp, F)

    out = encoding_augment_forward(x, params)
    out = jax.block_until_ready(out)
    assert out.shape == (B, 3 * F, L), out.shape
    assert bool(jnp.all(jnp.isfinite(out)))
    print("KERNEL_OK")
</pallas_src>

<mosaic_0001>
module attributes {stable_mosaic.version = 11 : i64} {
  func.func @_encoding_augment_kernel(%arg0: i32, %arg1: i32, %arg2: memref<1x40x32xf32, #tpu.memory_space<vmem>>, %arg3: memref<16x50x2xbf16, #tpu.memory_space<vmem>>, %arg4: memref<1x32xf32, #tpu.memory_space<vmem>>, %arg5: memref<1x32xf32, #tpu.memory_space<vmem>>, %arg6: memref<1x32xf32, #tpu.memory_space<vmem>>, %arg7: memref<32x96xbf16, #tpu.memory_space<vmem>>, %arg8: memref<1x96xf32, #tpu.memory_space<vmem>>, %arg9: memref<1x16x96xf32, #tpu.memory_space<vmem>>) attributes {dimension_semantics = [#tpu.dimension_semantics<parallel>, #tpu.dimension_semantics<parallel>], iteration_bounds = array<i64: 2, 1>, scalar_prefetch = 0 : i64, scratch_operands = 0 : i64, tpu.core_type = #tpu.core_type<tc>, window_params = [{transform_indices = @transform_0, window_bounds = array<i64: 1, 40, 32>}, {pipeline_mode = #tpu.pipeline_mode<synchronous>, transform_indices = @transform_1, window_bounds = array<i64: 16, 50, 2>}, {pipeline_mode = #tpu.pipeline_mode<synchronous>, transform_indices = @transform_2, window_bounds = array<i64: 1, 32>}, {pipeline_mode = #tpu.pipeline_mode<synchronous>, transform_indices = @transform_3, window_bounds = array<i64: 1, 32>}, {pipeline_mode = #tpu.pipeline_mode<synchronous>, transform_indices = @transform_4, window_bounds = array<i64: 1, 32>}, {pipeline_mode = #tpu.pipeline_mode<synchronous>, transform_indices = @transform_5, window_bounds = array<i64: 32, 96>}, {pipeline_mode = #tpu.pipeline_mode<synchronous>, transform_indices = @transform_6, window_bounds = array<i64: 1, 96>}, {transform_indices = @transform_7, window_bounds = array<i64: 1, 16, 96>}]} {
    %c16_i32 = arith.constant 16 : i32
    %0 = arith.muli %arg1, %c16_i32 : i32
    %1 = tpu.assume_multiple %0, 8 : i32
    %c0 = arith.constant 0 : index
    %2 = arith.index_cast %1 : i32 to index
    %c0_0 = arith.constant 0 : index
    %3 = vector.load %arg2[%c0, %2, %c0_0] : memref<1x40x32xf32, #tpu.memory_space<vmem>>, vector<1x40x32xf32>
    %4 = vector.shape_cast %3 : vector<1x40x32xf32> to vector<40x32xf32>
    %5 = vector.extract_strided_slice %4 {offsets = [0, 0], sizes = [16, 32], strides = [1, 1]} : vector<40x32xf32> to vector<16x32xf32>
    %6 = vector.extract_strided_slice %4 {offsets = [1, 0], sizes = [16, 32], strides = [1, 1]} : vector<40x32xf32> to vector<16x32xf32>
    %7 = vector.extract_strided_slice %4 {offsets = [2, 0], sizes = [16, 32], strides = [1, 1]} : vector<40x32xf32> to vector<16x32xf32>
    %8 = vector.extract_strided_slice %4 {offsets = [3, 0], sizes = [16, 32], strides = [1, 1]} : vector<40x32xf32> to vector<16x32xf32>
    %9 = vector.extract_strided_slice %4 {offsets = [4, 0], sizes = [16, 32], strides = [1, 1]} : vector<40x32xf32> to vector<16x32xf32>
    %10 = vector.extract_strided_slice %4 {offsets = [5, 0], sizes = [16, 32], strides = [1, 1]} : vector<40x32xf32> to vector<16x32xf32>
    %11 = vector.extract_strided_slice %4 {offsets = [6, 0], sizes = [16, 32], strides = [1, 1]} : vector<40x32xf32> to vector<16x32xf32>
    %12 = vector.extract_strided_slice %4 {offsets = [7, 0], sizes = [16, 32], strides = [1, 1]} : vector<40x32xf32> to vector<16x32xf32>
    %13 = vector.extract_strided_slice %4 {offsets = [8, 0], sizes = [16, 32], strides = [1, 1]} : vector<40x32xf32> to vector<16x32xf32>
    %14 = vector.extract_strided_slice %4 {offsets = [9, 0], sizes = [16, 32], strides = [1, 1]} : vector<40x32xf32> to vector<16x32xf32>
    %15 = vector.extract_strided_slice %4 {offsets = [10, 0], sizes = [16, 32], strides = [1, 1]} : vector<40x32xf32> to vector<16x32xf32>
    %16 = vector.extract_strided_slice %4 {offsets = [11, 0], sizes = [16, 32], strides = [1, 1]} : vector<40x32xf32> to vector<16x32xf32>
    %17 = vector.extract_strided_slice %4 {offsets = [12, 0], sizes = [16, 32], strides = [1, 1]} : vector<40x32xf32> to vector<16x32xf32>
    %18 = vector.extract_strided_slice %4 {offsets = [13, 0], sizes = [16, 32], strides = [1, 1]} : vector<40x32xf32> to vector<16x32xf32>
    %19 = vector.extract_strided_slice %4 {offsets = [14, 0], sizes = [16, 32], strides = [1, 1]} : vector<40x32xf32> to vector<16x32xf32>
    %20 = vector.extract_strided_slice %4 {offsets = [15, 0], sizes = [16, 32], strides = [1, 1]} : vector<40x32xf32> to vector<16x32xf32>
    %21 = vector.extract_strided_slice %4 {offsets = [16, 0], sizes = [16, 32], strides = [1, 1]} : vector<40x32xf32> to vector<16x32xf32>
    %22 = vector.extract_strided_slice %4 {offsets = [17, 0], sizes = [16, 32], strides = [1, 1]} : vector<40x32xf32> to vector<16x32xf32>
    %23 = vector.extract_strided_slice %4 {offsets = [18, 0], sizes = [16, 32], strides = [1, 1]} : vector<40x32xf32> to vector<16x32xf32>
    %24 = vector.extract_strided_slice %4 {offsets = [19, 0], sizes = [16, 32], strides = [1, 1]} : vector<40x32xf32> to vector<16x32xf32>
    %25 = vector.extract_strided_slice %4 {offsets = [20, 0], sizes = [16, 32], strides = [1, 1]} : vector<40x32xf32> to vector<16x32xf32>
    %26 = vector.extract_strided_slice %4 {offsets = [21, 0], sizes = [16, 32], strides = [1, 1]} : vector<40x32xf32> to vector<16x32xf32>
    %27 = vector.extract_strided_slice %4 {offsets = [22, 0], sizes = [16, 32], strides = [1, 1]} : vector<40x32xf32> to vector<16x32xf32>
    %28 = vector.extract_strided_slice %4 {offsets = [23, 0], sizes = [16, 32], strides = [1, 1]} : vector<40x32xf32> to vector<16x32xf32>
    %29 = vector.extract_strided_slice %4 {offsets = [24, 0], sizes = [16, 32], strides = [1, 1]} : vector<40x32xf32> to vector<16x32xf32>
    %30 = vector.extract_strided_slice %5 {offsets = [0, 0], sizes = [16, 2], strides = [1, 1]} : vector<16x32xf32> to vector<16x2xf32>
    %31 = vector.extract_strided_slice %6 {offsets = [0, 0], sizes = [16, 2], strides = [1, 1]} : vector<16x32xf32> to vector<16x2xf32>
    %32 = vector.extract_strided_slice %7 {offsets = [0, 0], sizes = [16, 2], strides = [1, 1]} : vector<16x32xf32> to vector<16x2xf32>
    %33 = vector.extract_strided_slice %8 {offsets = [0, 0], sizes = [16, 2], strides = [1, 1]} : vector<16x32xf32> to vector<16x2xf32>
    %34 = vector.extract_strided_slice %9 {offsets = [0, 0], sizes = [16, 2], strides = [1, 1]} : vector<16x32xf32> to vector<16x2xf32>
    %35 = vector.extract_strided_slice %10 {offsets = [0, 0], sizes = [16, 2], strides = [1, 1]} : vector<16x32xf32> to vector<16x2xf32>
    %36 = vector.extract_strided_slice %11 {offsets = [0, 0], sizes = [16, 2], strides = [1, 1]} : vector<16x32xf32> to vector<16x2xf32>
    %37 = vector.extract_strided_slice %12 {offsets = [0, 0], sizes = [16, 2], strides = [1, 1]} : vector<16x32xf32> to vector<16x2xf32>
    %38 = vector.extract_strided_slice %13 {offsets = [0, 0], sizes = [16, 2], strides = [1, 1]} : vector<16x32xf32> to vector<16x2xf32>
    %39 = vector.extract_strided_slice %14 {offsets = [0, 0], sizes = [16, 2], strides = [1, 1]} : vector<16x32xf32> to vector<16x2xf32>
    %40 = vector.extract_strided_slice %15 {offsets = [0, 0], sizes = [16, 2], strides = [1, 1]} : vector<16x32xf32> to vector<16x2xf32>
    %41 = vector.extract_strided_slice %16 {offsets = [0, 0], sizes = [16, 2], strides = [1, 1]} : vector<16x32xf32> to vector<16x2xf32>
    %42 = vector.extract_strided_slice %17 {offsets = [0, 0], sizes = [16, 2], strides = [1, 1]} : vector<16x32xf32> to vector<16x2xf32>
    %43 = vector.extract_strided_slice %18 {offsets = [0, 0], sizes = [16, 2], strides = [1, 1]} : vector<16x32xf32> to vector<16x2xf32>
    %44 = vector.extract_strided_slice %19 {offsets = [0, 0], sizes = [16, 2], strides = [1, 1]} : vector<16x32xf32> to vector<16x2xf32>
    %45 = vector.extract_strided_slice %20 {offsets = [0, 0], sizes = [16, 2], strides = [1, 1]} : vector<16x32xf32> to vector<16x2xf32>
    %46 = vector.extract_strided_slice %21 {offsets = [0, 0], sizes = [16, 2], strides = [1, 1]} : vector<16x32xf32> to vector<16x2xf32>
    %47 = vector.extract_strided_slice %22 {offsets = [0, 0], sizes = [16, 2], strides = [1, 1]} : vector<16x32xf32> to vector<16x2xf32>
    %48 = vector.extract_strided_slice %23 {offsets = [0, 0], sizes = [16, 2], strides = [1, 1]} : vector<16x32xf32> to vector<16x2xf32>
    %49 = vector.extract_strided_slice %24 {offsets = [0, 0], sizes = [16, 2], strides = [1, 1]} : vector<16x32xf32> to vector<16x2xf32>
    %50 = vector.extract_strided_slice %25 {offsets = [0, 0], sizes = [16, 2], strides = [1, 1]} : vector<16x32xf32> to vector<16x2xf32>
    %51 = vector.extract_strided_slice %26 {offsets = [0, 0], sizes = [16, 2], strides = [1, 1]} : vector<16x32xf32> to vector<16x2xf32>
    %52 = vector.extract_strided_slice %27 {offsets = [0, 0], sizes = [16, 2], strides = [1, 1]} : vector<16x32xf32> to vector<16x2xf32>
    %53 = vector.extract_strided_slice %28 {offsets = [0, 0], sizes = [16, 2], strides = [1, 1]} : vector<16x32xf32> to vector<16x2xf32>
    %54 = vector.extract_strided_slice %29 {offsets = [0, 0], sizes = [16, 2], strides = [1, 1]} : vector<16x32xf32> to vector<16x2xf32>
    %55 = tpu.concatenate %30, %31, %32, %33, %34, %35, %36, %37, %38, %39, %40, %41, %42, %43, %44, %45 in 1 : vector<16x2xf32>, vector<16x2xf32>, vector<16x2xf32>, vector<16x2xf32>, vector<16x2xf32>, vector<16x2xf32>, vector<16x2xf32>, vector<16x2xf32>, vector<16x2xf32>, vector<16x2xf32>, vector<16x2xf32>, vector<16x2xf32>, vector<16x2xf32>, vector<16x2xf32>, vector<16x2xf32>, vector<16x2xf32> -> vector<16x32xf32>
    %56 = tpu.concatenate %46, %47, %48, %49, %50, %51, %52, %53, %54 in 1 : vector<16x2xf32>, vector<16x2xf32>, vector<16x2xf32>, vector<16x2xf32>, vector<16x2xf32>, vector<16x2xf32>, vector<16x2xf32>, vector<16x2xf32>, vector<16x2xf32> -> vector<16x18xf32>
    %57 = tpu.concatenate %55, %56 in 1 : vector<16x32xf32>, vector<16x18xf32> -> vector<16x50xf32>
    %58 = arith.truncf %57 : vector<16x50xf32> to vector<16x50xbf16>
    %c0_1 = arith.constant 0 : index
    %c0_2 = arith.constant 0 : index
    %c0_3 = arith.constant 0 : index
    %59 = vector.load %arg3[%c0_1, %c0_2, %c0_3] : memref<16x50x2xbf16, #tpu.memory_space<vmem>>, vector<1x50x2xbf16>
    %60 = vector.shape_cast %59 : vector<1x50x2xbf16> to vector<50x2xbf16>
    %cst = arith.constant dense<0.000000e+00> : vector<16x2xf32>
    %61 = tpu.matmul %58, %60, %cst {dimension_numbers = #tpu.dot_dimension_numbers<[1], [0], [0], [1], [0, 0, 1, 1], [], []>} : vector<16x50xbf16>, vector<50x2xbf16>, vector<16x2xf32> -> vector<16x2xf32>
    %62 = vector.extract_strided_slice %5 {offsets = [0, 2], sizes = [16, 2], strides = [1, 1]} : vector<16x32xf32> to vector<16x2xf32>
    %63 = vector.extract_strided_slice %6 {offsets = [0, 2], sizes = [16, 2], strides = [1, 1]} : vector<16x32xf32> to vector<16x2xf32>
    %64 = vector.extract_strided_slice %7 {offsets = [0, 2], sizes = [16, 2], strides = [1, 1]} : vector<16x32xf32> to vector<16x2xf32>
    %65 = vector.extract_strided_slice %8 {offsets = [0, 2], sizes = [16, 2], strides = [1, 1]} : vector<16x32xf32> to vector<16x2xf32>
    %66 = vector.extract_strided_slice %9 {offsets = [0, 2], sizes = [16, 2], strides = [1, 1]} : vector<16x32xf32> to vector<16x2xf32>
    %67 = vector.extract_strided_slice %10 {offsets = [0, 2], sizes = [16, 2], strides = [1, 1]} : vector<16x32xf32> to vector<16x2xf32>
    %68 = vector.extract_strided_slice %11 {offsets = [0, 2], sizes = [16, 2], strides = [1, 1]} : vector<16x32xf32> to vector<16x2xf32>
    %69 = vector.extract_strided_slice %12 {offsets = [0, 2], sizes = [16, 2], strides = [1, 1]} : vector<16x32xf32> to vector<16x2xf32>
    %70 = vector.extract_strided_slice %13 {offsets = [0, 2], sizes = [16, 2], strides = [1, 1]} : vector<16x32xf32> to vector<16x2xf32>
    %71 = vector.extract_strided_slice %14 {offsets = [0, 2], sizes = [16, 2], strides = [1, 1]} : vector<16x32xf32> to vector<16x2xf32>
    %72 = vector.extract_strided_slice %15 {offsets = [0, 2], sizes = [16, 2], strides = [1, 1]} : vector<16x32xf32> to vector<16x2xf32>
    %73 = vector.extract_strided_slice %16 {offsets = [0, 2], sizes = [16, 2], strides = [1, 1]} : vector<16x32xf32> to vector<16x2xf32>
    %74 = vector.extract_strided_slice %17 {offsets = [0, 2], sizes = [16, 2], strides = [1, 1]} : vector<16x32xf32> to vector<16x2xf32>
    %75 = vector.extract_strided_slice %18 {offsets = [0, 2], sizes = [16, 2], strides = [1, 1]} : vector<16x32xf32> to vector<16x2xf32>
    %76 = vector.extract_strided_slice %19 {offsets = [0, 2], sizes = [16, 2], strides = [1, 1]} : vector<16x32xf32> to vector<16x2xf32>
    %77 = vector.extract_strided_slice %20 {offsets = [0, 2], sizes = [16, 2], strides = [1, 1]} : vector<16x32xf32> to vector<16x2xf32>
    %78 = vector.extract_strided_slice %21 {offsets = [0, 2], sizes = [16, 2], strides = [1, 1]} : vector<16x32xf32> to vector<16x2xf32>
    %79 = vector.extract_strided_slice %22 {offsets = [0, 2], sizes = [16, 2], strides = [1, 1]} : vector<16x32xf32> to vector<16x2xf32>
    %80 = vector.extract_strided_slice %23 {offsets = [0, 2], sizes = [16, 2], strides = [1, 1]} : vector<16x32xf32> to vector<16x2xf32>
    %81 = vector.extract_strided_slice %24 {offsets = [0, 2], sizes = [16, 2], strides = [1, 1]} : vector<16x32xf32> to vector<16x2xf32>
    %82 = vector.extract_strided_slice %25 {offsets = [0, 2], sizes = [16, 2], strides = [1, 1]} : vector<16x32xf32> to vector<16x2xf32>
    %83 = vector.extract_strided_slice %26 {offsets = [0, 2], sizes = [16, 2], strides = [1, 1]} : vector<16x32xf32> to vector<16x2xf32>
    %84 = vector.extract_strided_slice %27 {offsets = [0, 2], sizes = [16, 2], strides = [1, 1]} : vector<16x32xf32> to vector<16x2xf32>
    %85 = vector.extract_strided_slice %28 {offsets = [0, 2], sizes = [16, 2], strides = [1, 1]} : vector<16x32xf32> to vector<16x2xf32>
    %86 = vector.extract_strided_slice %29 {offsets = [0, 2], sizes = [16, 2], strides = [1, 1]} : vector<16x32xf32> to vector<16x2xf32>
    %87 = tpu.concatenate %62, %63, %64, %65, %66, %67, %68, %69, %70, %71, %72, %73, %74, %75, %76, %77 in 1 : vector<16x2xf32>, vector<16x2xf32>, vector<16x2xf32>, vector<16x2xf32>, vector<16x2xf32>, vector<16x2xf32>, vector<16x2xf32>, vector<16x2xf32>, vector<16x2xf32>, vector<16x2xf32>, vector<16x2xf32>, vector<16x2xf32>, vector<16x2xf32>, vector<16x2xf32>, vector<16x2xf32>, vector<16x2xf32> -> vector<16x32xf32>
    %88 = tpu.concatenate %78, %79, %80, %81, %82, %83, %84, %85, %86 in 1 : vector<16x2xf32>, vector<16x2xf32>, vector<16x2xf32>, vector<16x2xf32>, vector<16x2xf32>, vector<16x2xf32>, vector<16x2xf32>, vector<16x2xf32>, vector<16x2xf32> -> vector<16x18xf32>
    %89 = tpu.concatenate %87, %88 in 1 : vector<16x32xf32>, vector<16x18xf32> -> vector<16x50xf32>
    %90 = arith.truncf %89 : vector<16x50xf32> to vector<16x50xbf16>
    %c1 = arith.constant 1 : index
    %c0_4 = arith.constant 0 : index
    %c0_5 = arith.constant 0 : index
    %91 = vector.load %arg3[%c1, %c0_4, %c0_5] : memref<16x50x2xbf16, #tpu.memory_space<vmem>>, vector<1x50x2xbf16>
    %92 = vector.shape_cast %91 : vector<1x50x2xbf16> to vector<50x2xbf16>
    %cst_6 = arith.constant dense<0.000000e+00> : vector<16x2xf32>
    %93 = tpu.matmul %90, %92, %cst_6 {dimension_numbers = #tpu.dot_dimension_numbers<[1], [0], [0], [1], [0, 0, 1, 1], [], []>} : vector<16x50xbf16>, vector<50x2xbf16>, vector<16x2xf32> -> vector<16x2xf32>
    %94 = vector.extract_strided_slice %5 {offsets = [0, 4], sizes = [16, 2], strides = [1, 1]} : vector<16x32xf32> to vector<16x2xf32>
    %95 = vector.extract_strided_slice %6 {offsets = [0, 4], sizes = [16, 2], strides = [1, 1]} : vector<16x32xf32> to vector<16x2xf32>
    %96 = vector.extract_strided_slice %7 {offsets = [0, 4], sizes = [16, 2], strides = [1, 1]} : vector<16x32xf32> to vector<16x2xf32>
    %97 = vector.extract_strided_slice %8 {offsets = [0, 4], sizes = [16, 2], strides = [1, 1]} : vector<16x32xf32> to vector<16x2xf32>
    %98 = vector.extract_strided_slice %9 {offsets = [0, 4], sizes = [16, 2], strides = [1, 1]} : vector<16x32xf32> to vector<16x2xf32>
    %99 = vector.extract_strided_slice %10 {offsets = [0, 4], sizes = [16, 2], strides = [1, 1]} : vector<16x32xf32> to vector<16x2xf32>
    %100 = vector.extract_strided_slice %11 {offsets = [0, 4], sizes = [16, 2], strides = [1, 1]} : vector<16x32xf32> to vector<16x2xf32>
    %101 = vector.extract_strided_slice %12 {offsets = [0, 4], sizes = [16, 2], strides = [1, 1]} : vector<16x32xf32> to vector<16x2xf32>
    %102 = vector.extract_strided_slice %13 {offsets = [0, 4], sizes = [16, 2], strides = [1, 1]} : vector<16x32xf32> to vector<16x2xf32>
    %103 = vector.extract_strided_slice %14 {offsets = [0, 4], sizes = [16, 2], strides = [1, 1]} : vector<16x32xf32> to vector<16x2xf32>
    %104 = vector.extract_strided_slice %15 {offsets = [0, 4], sizes = [16, 2], strides = [1, 1]} : vector<16x32xf32> to vector<16x2xf32>
    %105 = vector.extract_strided_slice %16 {offsets = [0, 4], sizes = [16, 2], strides = [1, 1]} : vector<16x32xf32> to vector<16x2xf32>
    %106 = vector.extract_strided_slice %17 {offsets = [0, 4], sizes = [16, 2], strides = [1, 1]} : vector<16x32xf32> to vector<16x2xf32>
    %107 = vector.extract_strided_slice %18 {offsets = [0, 4], sizes = [16, 2], strides = [1, 1]} : vector<16x32xf32> to vector<16x2xf32>
    %108 = vector.extract_strided_slice %19 {offsets = [0, 4], sizes = [16, 2], strides = [1, 1]} : vector<16x32xf32> to vector<16x2xf32>
    %109 = vector.extract_strided_slice %20 {offsets = [0, 4], sizes = [16, 2], strides = [1, 1]} : vector<16x32xf32> to vector<16x2xf32>
    %110 = vector.extract_strided_slice %21 {offsets = [0, 4], sizes = [16, 2], strides = [1, 1]} : vector<16x32xf32> to vector<16x2xf32>
    %111 = vector.extract_strided_slice %22 {offsets = [0, 4], sizes = [16, 2], strides = [1, 1]} : vector<16x32xf32> to vector<16x2xf32>
    %112 = vector.extract_strided_slice %23 {offsets = [0, 4], sizes = [16, 2], strides = [1, 1]} : vector<16x32xf32> to vector<16x2xf32>
    %113 = vector.extract_strided_slice %24 {offsets = [0, 4], sizes = [16, 2], strides = [1, 1]} : vector<16x32xf32> to vector<16x2xf32>
    %114 = vector.extract_strided_slice %25 {offsets = [0, 4], sizes = [16, 2], strides = [1, 1]} : vector<16x32xf32> to vector<16x2xf32>
    %115 = vector.extract_strided_slice %26 {offsets = [0, 4], sizes = [16, 2], strides = [1, 1]} : vector<16x32xf32> to vector<16x2xf32>
    %116 = vector.extract_strided_slice %27 {offsets = [0, 4], sizes = [16, 2], strides = [1, 1]} : vector<16x32xf32> to vector<16x2xf32>
    %117 = vector.extract_strided_slice %28 {offsets = [0, 4], sizes = [16, 2], strides = [1, 1]} : vector<16x32xf32> to vector<16x2xf32>
    %118 = vector.extract_strided_slice %29 {offsets = [0, 4], sizes = [16, 2], strides = [1, 1]} : vector<16x32xf32> to vector<16x2xf32>
    %119 = tpu.concatenate %94, %95, %96, %97, %98, %99, %100, %101, %102, %103, %104, %105, %106, %107, %108, %109 in 1 : vector<16x2xf32>, vector<16x2xf32>, vector<16x2xf32>, vector<16x2xf32>, vector<16x2xf32>, vector<16x2xf32>, vector<16x2xf32>, vector<16x2xf32>, vector<16x2xf32>, vector<16x2xf32>, vector<16x2xf32>, vector<16x2xf32>, vector<16x2xf32>, vector<16x2xf32>, vector<16x2xf32>, vector<16x2xf32> -> vector<16x32xf32>
    %120 = tpu.concatenate %110, %111, %112, %113, %114, %115, %116, %117, %118 in 1 : vector<16x2xf32>, vector<16x2xf32>, vector<16x2xf32>, vector<16x2xf32>, vector<16x2xf32>, vector<16x2xf32>, vector<16x2xf32>, vector<16x2xf32>, vector<16x2xf32> -> vector<16x18xf32>
    %121 = tpu.concatenate %119, %120 in 1 : vector<16x32xf32>, vector<16x18xf32> -> vector<16x50xf32>
    %122 = arith.truncf %121 : vector<16x50xf32> to vector<16x50xbf16>
    %c2 = arith.constant 2 : index
    %c0_7 = arith.constant 0 : index
    %c0_8 = arith.constant 0 : index
    %123 = vector.load %arg3[%c2, %c0_7, %c0_8] : memref<16x50x2xbf16, #tpu.memory_space<vmem>>, vector<1x50x2xbf16>
    %124 = vector.shape_cast %123 : vector<1x50x2xbf16> to vector<50x2xbf16>
    %cst_9 = arith.constant dense<0.000000e+00> : vector<16x2xf32>
    %125 = tpu.matmul %122, %124, %cst_9 {dimension_numbers = #tpu.dot_dimension_numbers<[1], [0], [0], [1], [0, 0, 1, 1], [], []>} : vector<16x50xbf16>, vector<50x2xbf16>, vector<16x2xf32> -> vector<16x2xf32>
    %126 = vector.extract_strided_slice %5 {offsets = [0, 6], sizes = [16, 2], strides = [1, 1]} : vector<16x32xf32> to vector<16x2xf32>
    %127 = vector.extract_strided_slice %6 {offsets = [0, 6], sizes = [16, 2], strides = [1, 1]} : vector<16x32xf32> to vector<16x2xf32>
    %128 = vector.extract_strided_slice %7 {offsets = [0, 6], sizes = [16, 2], strides = [1, 1]} : vector<16x32xf32> to vector<16x2xf32>
    %129 = vector.extract_strided_slice %8 {offsets = [0, 6], sizes = [16, 2], strides = [1, 1]} : vector<16x32xf32> to vector<16x2xf32>
    %130 = vector.extract_strided_slice %9 {offsets = [0, 6], sizes = [16, 2], strides = [1, 1]} : vector<16x32xf32> to vector<16x2xf32>
    %131 = vector.extract_strided_slice %10 {offsets = [0, 6], sizes = [16, 2], strides = [1, 1]} : vector<16x32xf32> to vector<16x2xf32>
    %132 = vector.extract_strided_slice %11 {offsets = [0, 6], sizes = [16, 2], strides = [1, 1]} : vector<16x32xf32> to vector<16x2xf32>
    %133 = vector.extract_strided_slice %12 {offsets = [0, 6], sizes = [16, 2], strides = [1, 1]} : vector<16x32xf32> to vector<16x2xf32>
    %134 = vector.extract_strided_slice %13 {offsets = [0, 6], sizes = [16, 2], strides = [1, 1]} : vector<16x32xf32> to vector<16x2xf32>
    %135 = vector.extract_strided_slice %14 {offsets = [0, 6], sizes = [16, 2], strides = [1, 1]} : vector<16x32xf32> to vector<16x2xf32>
    %136 = vector.extract_strided_slice %15 {offsets = [0, 6], sizes = [16, 2], strides = [1, 1]} : vector<16x32xf32> to vector<16x2xf32>
    %137 = vector.extract_strided_slice %16 {offsets = [0, 6], sizes = [16, 2], strides = [1, 1]} : vector<16x32xf32> to vector<16x2xf32>
    %138 = vector.extract_strided_slice %17 {offsets = [0, 6], sizes = [16, 2], strides = [1, 1]} : vector<16x32xf32> to vector<16x2xf32>
    %139 = vector.extract_strided_slice %18 {offsets = [0, 6], sizes = [16, 2], strides = [1, 1]} : vector<16x32xf32> to vector<16x2xf32>
    %140 = vector.extract_strided_slice %19 {offsets = [0, 6], sizes = [16, 2], strides = [1, 1]} : vector<16x32xf32> to vector<16x2xf32>
    %141 = vector.extract_strided_slice %20 {offsets = [0, 6], sizes = [16, 2], strides = [1, 1]} : vector<16x32xf32> to vector<16x2xf32>
    %142 = vector.extract_strided_slice %21 {offsets = [0, 6], sizes = [16, 2], strides = [1, 1]} : vector<16x32xf32> to vector<16x2xf32>
    %143 = vector.extract_strided_slice %22 {offsets = [0, 6], sizes = [16, 2], strides = [1, 1]} : vector<16x32xf32> to vector<16x2xf32>
    %144 = vector.extract_strided_slice %23 {offsets = [0, 6], sizes = [16, 2], strides = [1, 1]} : vector<16x32xf32> to vector<16x2xf32>
    %145 = vector.extract_strided_slice %24 {offsets = [0, 6], sizes = [16, 2], strides = [1, 1]} : vector<16x32xf32> to vector<16x2xf32>
    %146 = vector.extract_strided_slice %25 {offsets = [0, 6], sizes = [16, 2], strides = [1, 1]} : vector<16x32xf32> to vector<16x2xf32>
    %147 = vector.extract_strided_slice %26 {offsets = [0, 6], sizes = [16, 2], strides = [1, 1]} : vector<16x32xf32> to vector<16x2xf32>
    %148 = vector.extract_strided_slice %27 {offsets = [0, 6], sizes = [16, 2], strides = [1, 1]} : vector<16x32xf32> to vector<16x2xf32>
    %149 = vector.extract_strided_slice %28 {offsets = [0, 6], sizes = [16, 2], strides = [1, 1]} : vector<16x32xf32> to vector<16x2xf32>
    %150 = vector.extract_strided_slice %29 {offsets = [0, 6], sizes = [16, 2], strides = [1, 1]} : vector<16x32xf32> to vector<16x2xf32>
    %151 = tpu.concatenate %126, %127, %128, %129, %130, %131, %132, %133, %134, %135, %136, %137, %138, %139, %140, %141 in 1 : vector<16x2xf32>, vector<16x2xf32>, vector<16x2xf32>, vector<16x2xf32>, vector<16x2xf32>, vector<16x2xf32>, vector<16x2xf32>, vector<16x2xf32>, vector<16x2xf32>, vector<16x2xf32>, vector<16x2xf32>, vector<16x2xf32>, vector<16x2xf32>, vector<16x2xf32>, vector<16x2xf32>, vector<16x2xf32> -> vector<16x32xf32>
    %152 = tpu.concatenate %142, %143, %144, %145, %146, %147, %148, %149, %150 in 1 : vector<16x2xf32>, vector<16x2xf32>, vector<16x2xf32>, vector<16x2xf32>, vector<16x2xf32>, vector<16x2xf32>, vector<16x2xf32>, vector<16x2xf32>, vector<16x2xf32> -> vector<16x18xf32>
    %153 = tpu.concatenate %151, %152 in 1 : vector<16x32xf32>, vector<16x18xf32> -> vector<16x50xf32>
    %154 = arith.truncf %153 : vector<16x50xf32> to vector<16x50xbf16>
    %c3 = arith.constant 3 : index
    %c0_10 = arith.constant 0 : index
    %c0_11 = arith.constant 0 : index
    %155 = vector.load %arg3[%c3, %c0_10, %c0_11] : memref<16x50x2xbf16, #tpu.memory_space<vmem>>, vector<1x50x2xbf16>
    %156 = vector.shape_cast %155 : vector<1x50x2xbf16> to vector<50x2xbf16>
    %cst_12 = arith.constant dense<0.000000e+00> : vector<16x2xf32>
    %157 = tpu.matmul %154, %156, %cst_12 {dimension_numbers = #tpu.dot_dimension_numbers<[1], [0], [0], [1], [0, 0, 1, 1], [], []>} : vector<16x50xbf16>, vector<50x2xbf16>, vector<16x2xf32> -> vector<16x2xf32>
    %158 = vector.extract_strided_slice %5 {offsets = [0, 8], sizes = [16, 2], strides = [1, 1]} : vector<16x32xf32> to vector<16x2xf32>
    %159 = vector.extract_strided_slice %6 {offsets = [0, 8], sizes = [16, 2], strides = [1, 1]} : vector<16x32xf32> to vector<16x2xf32>
    %160 = vector.extract_strided_slice %7 {offsets = [0, 8], sizes = [16, 2], strides = [1, 1]} : vector<16x32xf32> to vector<16x2xf32>
    %161 = vector.extract_strided_slice %8 {offsets = [0, 8], sizes = [16, 2], strides = [1, 1]} : vector<16x32xf32> to vector<16x2xf32>
    %162 = vector.extract_strided_slice %9 {offsets = [0, 8], sizes = [16, 2], strides = [1, 1]} : vector<16x32xf32> to vector<16x2xf32>
    %163 = vector.extract_strided_slice %10 {offsets = [0, 8], sizes = [16, 2], strides = [1, 1]} : vector<16x32xf32> to vector<16x2xf32>
    %164 = vector.extract_strided_slice %11 {offsets = [0, 8], sizes = [16, 2], strides = [1, 1]} : vector<16x32xf32> to vector<16x2xf32>
    %165 = vector.extract_strided_slice %12 {offsets = [0, 8], sizes = [16, 2], strides = [1, 1]} : vector<16x32xf32> to vector<16x2xf32>
    %166 = vector.extract_strided_slice %13 {offsets = [0, 8], sizes = [16, 2], strides = [1, 1]} : vector<16x32xf32> to vector<16x2xf32>
    %167 = vector.extract_strided_slice %14 {offsets = [0, 8], sizes = [16, 2], strides = [1, 1]} : vector<16x32xf32> to vector<16x2xf32>
    %168 = vector.extract_strided_slice %15 {offsets = [0, 8], sizes = [16, 2], strides = [1, 1]} : vector<16x32xf32> to vector<16x2xf32>
    %169 = vector.extract_strided_slice %16 {offsets = [0, 8], sizes = [16, 2], strides = [1, 1]} : vector<16x32xf32> to vector<16x2xf32>
    %170 = vector.extract_strided_slice %17 {offsets = [0, 8], sizes = [16, 2], strides = [1, 1]} : vector<16x32xf32> to vector<16x2xf32>
    %171 = vector.extract_strided_slice %18 {offsets = [0, 8], sizes = [16, 2], strides = [1, 1]} : vector<16x32xf32> to vector<16x2xf32>
    %172 = vector.extract_strided_slice %19 {offsets = [0, 8], sizes = [16, 2], strides = [1, 1]} : vector<16x32xf32> to vector<16x2xf32>
    %173 = vector.extract_strided_slice %20 {offsets = [0, 8], sizes = [16, 2], strides = [1, 1]} : vector<16x32xf32> to vector<16x2xf32>
    %174 = vector.extract_strided_slice %21 {offsets = [0, 8], sizes = [16, 2], strides = [1, 1]} : vector<16x32xf32> to vector<16x2xf32>
    %175 = vector.extract_strided_slice %22 {offsets = [0, 8], sizes = [16, 2], strides = [1, 1]} : vector<16x32xf32> to vector<16x2xf32>
    %176 = vector.extract_strided_slice %23 {offsets = [0, 8], sizes = [16, 2], strides = [1, 1]} : vector<16x32xf32> to vector<16x2xf32>
    %177 = vector.extract_strided_slice %24 {offsets = [0, 8], sizes = [16, 2], strides = [1, 1]} : vector<16x32xf32> to vector<16x2xf32>
    %178 = vector.extract_strided_slice %25 {offsets = [0, 8], sizes = [16, 2], strides = [1, 1]} : vector<16x32xf32> to vector<16x2xf32>
    %179 = vector.extract_strided_slice %26 {offsets = [0, 8], sizes = [16, 2], strides = [1, 1]} : vector<16x32xf32> to vector<16x2xf32>
    %180 = vector.extract_strided_slice %27 {offsets = [0, 8], sizes = [16, 2], strides = [1, 1]} : vector<16x32xf32> to vector<16x2xf32>
    %181 = vector.extract_strided_slice %28 {offsets = [0, 8], sizes = [16, 2], strides = [1, 1]} : vector<16x32xf32> to vector<16x2xf32>
    %182 = vector.extract_strided_slice %29 {offsets = [0, 8], sizes = [16, 2], strides = [1, 1]} : vector<16x32xf32> to vector<16x2xf32>
    %183 = tpu.concatenate %158, %159, %160, %161, %162, %163, %164, %165, %166, %167, %168, %169, %170, %171, %172, %173 in 1 : vector<16x2xf32>, vector<16x2xf32>, vector<16x2xf32>, vector<16x2xf32>, vector<16x2xf32>, vector<16x2xf32>, vector<16x2xf32>, vector<16x2xf32>, vector<16x2xf32>, vector<16x2xf32>, vector<16x2xf32>, vector<16x2xf32>, vector<16x2xf32>, vector<16x2xf32>, vector<16x2xf32>, vector<16x2xf32> -> vector<16x32xf32>
    %184 = tpu.concatenate %174, %175, %176, %177, %178, %179, %180, %181, %182 in 1 : vector<16x2xf32>, vector<16x2xf32>, vector<16x2xf32>, vector<16x2xf32>, vector<16x2xf32>, vector<16x2xf32>, vector<16x2xf32>, vector<16x2xf32>, vector<16x2xf32> -> vector<16x18xf32>
    %185 = tpu.concatenate %183, %184 in 1 : vector<16x32xf32>, vector<16x18xf32> -> vector<16x50xf32>
    %186 = arith.truncf %185 : vector<16x50xf32> to vector<16x50xbf16>
    %c4 = arith.constant 4 : index
    %c0_13 = arith.constant 0 : index
    %c0_14 = arith.constant 0 : index
    %187 = vector.load %arg3[%c4, %c0_13, %c0_14] : memref<16x50x2xbf16, #tpu.memory_space<vmem>>, vector<1x50x2xbf16>
    %188 = vector.shape_cast %187 : vector<1x50x2xbf16> to vector<50x2xbf16>
    %cst_15 = arith.constant dense<0.000000e+00> : vector<16x2xf32>
    %189 = tpu.matmul %186, %188, %cst_15 {dimension_numbers = #tpu.dot_dimension_numbers<[1], [0], [0], [1], [0, 0, 1, 1], [], []>} : vector<16x50xbf16>, vector<50x2xbf16>, vector<16x2xf32> -> vector<16x2xf32>
    %190 = vector.extract_strided_slice %5 {offsets = [0, 10], sizes = [16, 2], strides = [1, 1]} : vector<16x32xf32> to vector<16x2xf32>
    %191 = vector.extract_strided_slice %6 {offsets = [0, 10], sizes = [16, 2], strides = [1, 1]} : vector<16x32xf32> to vector<16x2xf32>
    %192 = vector.extract_strided_slice %7 {offsets = [0, 10], sizes = [16, 2], strides = [1, 1]} : vector<16x32xf32> to vector<16x2xf32>
    %193 = vector.extract_strided_slice %8 {offsets = [0, 10], sizes = [16, 2], strides = [1, 1]} : vector<16x32xf32> to vector<16x2xf32>
    %194 = vector.extract_strided_slice %9 {offsets = [0, 10], sizes = [16, 2], strides = [1, 1]} : vector<16x32xf32> to vector<16x2xf32>
    %195 = vector.extract_strided_slice %10 {offsets = [0, 10], sizes = [16, 2], strides = [1, 1]} : vector<16x32xf32> to vector<16x2xf32>
    %196 = vector.extract_strided_slice %11 {offsets = [0, 10], sizes = [16, 2], strides = [1, 1]} : vector<16x32xf32> to vector<16x2xf32>
    %197 = vector.extract_strided_slice %12 {offsets = [0, 10], sizes = [16, 2], strides = [1, 1]} : vector<16x32xf32> to vector<16x2xf32>
    %198 = vector.extract_strided_slice %13 {offsets = [0, 10], sizes = [16, 2], strides = [1, 1]} : vector<16x32xf32> to vector<16x2xf32>
    %199 = vector.extract_strided_slice %14 {offsets = [0, 10], sizes = [16, 2], strides = [1, 1]} : vector<16x32xf32> to vector<16x2xf32>
    %200 = vector.extract_strided_slice %15 {offsets = [0, 10], sizes = [16, 2], strides = [1, 1]} : vector<16x32xf32> to vector<16x2xf32>
    %201 = vector.extract_strided_slice %16 {offsets = [0, 10], sizes = [16, 2], strides = [1, 1]} : vector<16x32xf32> to vector<16x2xf32>
    %202 = vector.extract_strided_slice %17 {offsets = [0, 10], sizes = [16, 2], strides = [1, 1]} : vector<16x32xf32> to vector<16x2xf32>
    %203 = vector.extract_strided_slice %18 {offsets = [0, 10], sizes = [16, 2], strides = [1, 1]} : vector<16x32xf32> to vector<16x2xf32>
    %204 = vector.extract_strided_slice %19 {offsets = [0, 10], sizes = [16, 2], strides = [1, 1]} : vector<16x32xf32> to vector<16x2xf32>
    %205 = vector.extract_strided_slice %20 {offsets = [0, 10], sizes = [16, 2], strides = [1, 1]} : vector<16x32xf32> to vector<16x2xf32>
    %206 = vector.extract_strided_slice %21 {offsets = [0, 10], sizes = [16, 2], strides = [1, 1]} : vector<16x32xf32> to vector<16x2xf32>
    %207 = vector.extract_strided_slice %22 {offsets = [0, 10], sizes = [16, 2], strides = [1, 1]} : vector<16x32xf32> to vector<16x2xf32>
    %208 = vector.extract_strided_slice %23 {offsets = [0, 10], sizes = [16, 2], strides = [1, 1]} : vector<16x32xf32> to vector<16x2xf32>
    %209 = vector.extract_strided_slice %24 {offsets = [0, 10], sizes = [16, 2], strides = [1, 1]} : vector<16x32xf32> to vector<16x2xf32>
    %210 = vector.extract_strided_slice %25 {offsets = [0, 10], sizes = [16, 2], strides = [1, 1]} : vector<16x32xf32> to vector<16x2xf32>
    %211 = vector.extract_strided_slice %26 {offsets = [0, 10], sizes = [16, 2], strides = [1, 1]} : vector<16x32xf32> to vector<16x2xf32>
    %212 = vector.extract_strided_slice %27 {offsets = [0, 10], sizes = [16, 2], strides = [1, 1]} : vector<16x32xf32> to vector<16x2xf32>
    %213 = vector.extract_strided_slice %28 {offsets = [0, 10], sizes = [16, 2], strides = [1, 1]} : vector<16x32xf32> to vector<16x2xf32>
    %214 = vector.extract_strided_slice %29 {offsets = [0, 10], sizes = [16, 2], strides = [1, 1]} : vector<16x32xf32> to vector<16x2xf32>
    %215 = tpu.concatenate %190, %191, %192, %193, %194, %195, %196, %197, %198, %199, %200, %201, %202, %203, %204, %205 in 1 : vector<16x2xf32>, vector<16x2xf32>, vector<16x2xf32>, vector<16x2xf32>, vector<16x2xf32>, vector<16x2xf32>, vector<16x2xf32>, vector<16x2xf32>, vector<16x2xf32>, vector<16x2xf32>, vector<16x2xf32>, vector<16x2xf32>, vector<16x2xf32>, vector<16x2xf32>, vector<16x2xf32>, vector<16x2xf32> -> vector<16x32xf32>
    %216 = tpu.concatenate %206, %207, %208, %209, %210, %211, %212, %213, %214 in 1 : vector<16x2xf32>, vector<16x2xf32>, vector<16x2xf32>, vector<16x2xf32>, vector<16x2xf32>, vector<16x2xf32>, vector<16x2xf32>, vector<16x2xf32>, vector<16x2xf32> -> vector<16x18xf32>
    %217 = tpu.concatenate %215, %216 in 1 : vector<16x32xf32>, vector<16x18xf32> -> vector<16x50xf32>
    %218 = arith.truncf %217 : vector<16x50xf32> to vector<16x50xbf16>
    %c5 = arith.constant 5 : index
    %c0_16 = arith.constant 0 : index
    %c0_17 = arith.constant 0 : index
    %219 = vector.load %arg3[%c5, %c0_16, %c0_17] : memref<16x50x2xbf16, #tpu.memory_space<vmem>>, vector<1x50x2xbf16>
    %220 = vector.shape_cast %219 : vector<1x50x2xbf16> to vector<50x2xbf16>
    %cst_18 = arith.constant dense<0.000000e+00> : vector<16x2xf32>
    %221 = tpu.matmul %218, %220, %cst_18 {dimension_numbers = #tpu.dot_dimension_numbers<[1], [0], [0], [1], [0, 0, 1, 1], [], []>} : vector<16x50xbf16>, vector<50x2xbf16>, vector<16x2xf32> -> vector<16x2xf32>
    %222 = vector.extract_strided_slice %5 {offsets = [0, 12], sizes = [16, 2], strides = [1, 1]} : vector<16x32xf32> to vector<16x2xf32>
    %223 = vector.extract_strided_slice %6 {offsets = [0, 12], sizes = [16, 2], strides = [1, 1]} : vector<16x32xf32> to vector<16x2xf32>
    %224 = vector.extract_strided_slice %7 {offsets = [0, 12], sizes = [16, 2], strides = [1, 1]} : vector<16x32xf32> to vector<16x2xf32>
    %225 = vector.extract_strided_slice %8 {offsets = [0, 12], sizes = [16, 2], strides = [1, 1]} : vector<16x32xf32> to vector<16x2xf32>
    %226 = vector.extract_strided_slice %9 {offsets = [0, 12], sizes = [16, 2], strides = [1, 1]} : vector<16x32xf32> to vector<16x2xf32>
    %227 = vector.extract_strided_slice %10 {offsets = [0, 12], sizes = [16, 2], strides = [1, 1]} : vector<16x32xf32> to vector<16x2xf32>
    %228 = vector.extract_strided_slice %11 {offsets = [0, 12], sizes = [16, 2], strides = [1, 1]} : vector<16x32xf32> to vector<16x2xf32>
    %229 = vector.extract_strided_slice %12 {offsets = [0, 12], sizes = [16, 2], strides = [1, 1]} : vector<16x32xf32> to vector<16x2xf32>
    %230 = vector.extract_strided_slice %13 {offsets = [0, 12], sizes = [16, 2], strides = [1, 1]} : vector<16x32xf32> to vector<16x2xf32>
    %231 = vector.extract_strided_slice %14 {offsets = [0, 12], sizes = [16, 2], strides = [1, 1]} : vector<16x32xf32> to vector<16x2xf32>
    %232 = vector.extract_strided_slice %15 {offsets = [0, 12], sizes = [16, 2], strides = [1, 1]} : vector<16x32xf32> to vector<16x2xf32>
    %233 = vector.extract_strided_slice %16 {offsets = [0, 12], sizes = [16, 2], strides = [1, 1]} : vector<16x32xf32> to vector<16x2xf32>
    %234 = vector.extract_strided_slice %17 {offsets = [0, 12], sizes = [16, 2], strides = [1, 1]} : vector<16x32xf32> to vector<16x2xf32>
    %235 = vector.extract_strided_slice %18 {offsets = [0, 12], sizes = [16, 2], strides = [1, 1]} : vector<16x32xf32> to vector<16x2xf32>
    %236 = vector.extract_strided_slice %19 {offsets = [0, 12], sizes = [16, 2], strides = [1, 1]} : vector<16x32xf32> to vector<16x2xf32>
    %237 = vector.extract_strided_slice %20 {offsets = [0, 12], sizes = [16, 2], strides = [1, 1]} : vector<16x32xf32> to vector<16x2xf32>
    %238 = vector.extract_strided_slice %21 {offsets = [0, 12], sizes = [16, 2], strides = [1, 1]} : vector<16x32xf32> to vector<16x2xf32>
    %239 = vector.extract_strided_slice %22 {offsets = [0, 12], sizes = [16, 2], strides = [1, 1]} : vector<16x32xf32> to vector<16x2xf32>
    %240 = vector.extract_strided_slice %23 {offsets = [0, 12], sizes = [16, 2], strides = [1, 1]} : vector<16x32xf32> to vector<16x2xf32>
    %241 = vector.extract_strided_slice %24 {offsets = [0, 12], sizes = [16, 2], strides = [1, 1]} : vector<16x32xf32> to vector<16x2xf32>
    %242 = vector.extract_strided_slice %25 {offsets = [0, 12], sizes = [16, 2], strides = [1, 1]} : vector<16x32xf32> to vector<16x2xf32>
    %243 = vector.extract_strided_slice %26 {offsets = [0, 12], sizes = [16, 2], strides = [1, 1]} : vector<16x32xf32> to vector<16x2xf32>
    %244 = vector.extract_strided_slice %27 {offsets = [0, 12], sizes = [16, 2], strides = [1, 1]} : vector<16x32xf32> to vector<16x2xf32>
    %245 = vector.extract_strided_slice %28 {offsets = [0, 12], sizes = [16, 2], strides = [1, 1]} : vector<16x32xf32> to vector<16x2xf32>
    %246 = vector.extract_strided_slice %29 {offsets = [0, 12], sizes = [16, 2], strides = [1, 1]} : vector<16x32xf32> to vector<16x2xf32>
    %247 = tpu.concatenate %222, %223, %224, %225, %226, %227, %228, %229, %230, %231, %232, %233, %234, %235, %236, %237 in 1 : vector<16x2xf32>, vector<16x2xf32>, vector<16x2xf32>, vector<16x2xf32>, vector<16x2xf32>, vector<16x2xf32>, vector<16x2xf32>, vector<16x2xf32>, vector<16x2xf32>, vector<16x2xf32>, vector<16x2xf32>, vector<16x2xf32>, vector<16x2xf32>, vector<16x2xf32>, vector<16x2xf32>, vector<16x2xf32> -> vector<16x32xf32>
    %248 = tpu.concatenate %238, %239, %240, %241, %242, %243, %244, %245, %246 in 1 : vector<16x2xf32>, vector<16x2xf32>, vector<16x2xf32>, vector<16x2xf32>, vector<16x2xf32>, vector<16x2xf32>, vector<16x2xf32>, vector<16x2xf32>, vector<16x2xf32> -> vector<16x18xf32>
    %249 = tpu.concatenate %247, %248 in 1 : vector<16x32xf32>, vector<16x18xf32> -> vector<16x50xf32>
    %250 = arith.truncf %249 : vector<16x50xf32> to vector<16x50xbf16>
    %c6 = arith.constant 6 : index
    %c0_19 = arith.constant 0 : index
    %c0_20 = arith.constant 0 : index
    %251 = vector.load %arg3[%c6, %c0_19, %c0_20] : memref<16x50x2xbf16, #tpu.memory_space<vmem>>, vector<1x50x2xbf16>
    %252 = vector.shape_cast %251 : vector<1x50x2xbf16> to vector<50x2xbf16>
    %cst_21 = arith.constant dense<0.000000e+00> : vector<16x2xf32>
    %253 = tpu.matmul %250, %252, %cst_21 {dimension_numbers = #tpu.dot_dimension_numbers<[1], [0], [0], [1], [0, 0, 1, 1], [], []>} : vector<16x50xbf16>, vector<50x2xbf16>, vector<16x2xf32> -> vector<16x2xf32>
    %254 = vector.extract_strided_slice %5 {offsets = [0, 14], sizes = [16, 2], strides = [1, 1]} : vector<16x32xf32> to vector<16x2xf32>
    %255 = vector.extract_strided_slice %6 {offsets = [0, 14], sizes = [16, 2], strides = [1, 1]} : vector<16x32xf32> to vector<16x2xf32>
    %256 = vector.extract_strided_slice %7 {offsets = [0, 14], sizes = [16, 2], strides = [1, 1]} : vector<16x32xf32> to vector<16x2xf32>
    %257 = vector.extract_strided_slice %8 {offsets = [0, 14], sizes = [16, 2], strides = [1, 1]} : vector<16x32xf32> to vector<16x2xf32>
    %258 = vector.extract_strided_slice %9 {offsets = [0, 14], sizes = [16, 2], strides = [1, 1]} : vector<16x32xf32> to vector<16x2xf32>
    %259 = vector.extract_strided_slice %10 {offsets = [0, 14], sizes = [16, 2], strides = [1, 1]} : vector<16x32xf32> to vector<16x2xf32>
    %260 = vector.extract_strided_slice %11 {offsets = [0, 14], sizes = [16, 2], strides = [1, 1]} : vector<16x32xf32> to vector<16x2xf32>
    %261 = vector.extract_strided_slice %12 {offsets = [0, 14], sizes = [16, 2], strides = [1, 1]} : vector<16x32xf32> to vector<16x2xf32>
    %262 = vector.extract_strided_slice %13 {offsets = [0, 14], sizes = [16, 2], strides = [1, 1]} : vector<16x32xf32> to vector<16x2xf32>
    %263 = vector.extract_strided_slice %14 {offsets = [0, 14], sizes = [16, 2], strides = [1, 1]} : vector<16x32xf32> to vector<16x2xf32>
    %264 = vector.extract_strided_slice %15 {offsets = [0, 14], sizes = [16, 2], strides = [1, 1]} : vector<16x32xf32> to vector<16x2xf32>
    %265 = vector.extract_strided_slice %16 {offsets = [0, 14], sizes = [16, 2], strides = [1, 1]} : vector<16x32xf32> to vector<16x2xf32>
    %266 = vector.extract_strided_slice %17 {offsets = [0, 14], sizes = [16, 2], strides = [1, 1]} : vector<16x32xf32> to vector<16x2xf32>
    %267 = vector.extract_strided_slice %18 {offsets = [0, 14], sizes = [16, 2], strides = [1, 1]} : vector<16x32xf32> to vector<16x2xf32>
    %268 = vector.extract_strided_slice %19 {offsets = [0, 14], sizes = [16, 2], strides = [1, 1]} : vector<16x32xf32> to vector<16x2xf32>
    %269 = vector.extract_strided_slice %20 {offsets = [0, 14], sizes = [16, 2], strides = [1, 1]} : vector<16x32xf32> to vector<16x2xf32>
    %270 = vector.extract_strided_slice %21 {offsets = [0, 14], sizes = [16, 2], strides = [1, 1]} : vector<16x32xf32> to vector<16x2xf32>
    %271 = vector.extract_strided_slice %22 {offsets = [0, 14], sizes = [16, 2], strides = [1, 1]} : vector<16x32xf32> to vector<16x2xf32>
    %272 = vector.extract_strided_slice %23 {offsets = [0, 14], sizes = [16, 2], strides = [1, 1]} : vector<16x32xf32> to vector<16x2xf32>
    %273 = vector.extract_strided_slice %24 {offsets = [0, 14], sizes = [16, 2], strides = [1, 1]} : vector<16x32xf32> to vector<16x2xf32>
    %274 = vector.extract_strided_slice %25 {offsets = [0, 14], sizes = [16, 2], strides = [1, 1]} : vector<16x32xf32> to vector<16x2xf32>
    %275 = vector.extract_strided_slice %26 {offsets = [0, 14], sizes = [16, 2], strides = [1, 1]} : vector<16x32xf32> to vector<16x2xf32>
    %276 = vector.extract_strided_slice %27 {offsets = [0, 14], sizes = [16, 2], strides = [1, 1]} : vector<16x32xf32> to vector<16x2xf32>
    %277 = vector.extract_strided_slice %28 {offsets = [0, 14], sizes = [16, 2], strides = [1, 1]} : vector<16x32xf32> to vector<16x2xf32>
    %278 = vector.extract_strided_slice %29 {offsets = [0, 14], sizes = [16, 2], strides = [1, 1]} : vector<16x32xf32> to vector<16x2xf32>
    %279 = tpu.concatenate %254, %255, %256, %257, %258, %259, %260, %261, %262, %263, %264, %265, %266, %267, %268, %269 in 1 : vector<16x2xf32>, vector<16x2xf32>, vector<16x2xf32>, vector<16x2xf32>, vector<16x2xf32>, vector<16x2xf32>, vector<16x2xf32>, vector<16x2xf32>, vector<16x2xf32>, vector<16x2xf32>, vector<16x2xf32>, vector<16x2xf32>, vector<16x2xf32>, vector<16x2xf32>, vector<16x2xf32>, vector<16x2xf32> -> vector<16x32xf32>
    %280 = tpu.concatenate %270, %271, %272, %273, %274, %275, %276, %277, %278 in 1 : vector<16x2xf32>, vector<16x2xf32>, vector<16x2xf32>, vector<16x2xf32>, vector<16x2xf32>, vector<16x2xf32>, vector<16x2xf32>, vector<16x2xf32>, vector<16x2xf32> -> vector<16x18xf32>
    %281 = tpu.concatenate %279, %280 in 1 : vector<16x32xf32>, vector<16x18xf32> -> vector<16x50xf32>
    %282 = arith.truncf %281 : vector<16x50xf32> to vector<16x50xbf16>
    %c7 = arith.constant 7 : index
    %c0_22 = arith.constant 0 : index
    %c0_23 = arith.constant 0 : index
    %283 = vector.load %arg3[%c7, %c0_22, %c0_23] : memref<16x50x2xbf16, #tpu.memory_space<vmem>>, vector<1x50x2xbf16>
    %284 = vector.shape_cast %283 : vector<1x50x2xbf16> to vector<50x2xbf16>
    %cst_24 = arith.constant dense<0.000000e+00> : vector<16x2xf32>
    %285 = tpu.matmul %282, %284, %cst_24 {dimension_numbers = #tpu.dot_dimension_numbers<[1], [0], [0], [1], [0, 0, 1, 1], [], []>} : vector<16x50xbf16>, vector<50x2xbf16>, vector<16x2xf32> -> vector<16x2xf32>
    %286 = vector.extract_strided_slice %5 {offsets = [0, 16], sizes = [16, 2], strides = [1, 1]} : vector<16x32xf32> to vector<16x2xf32>
    %287 = vector.extract_strided_slice %6 {offsets = [0, 16], sizes = [16, 2], strides = [1, 1]} : vector<16x32xf32> to vector<16x2xf32>
    %288 = vector.extract_strided_slice %7 {offsets = [0, 16], sizes = [16, 2], strides = [1, 1]} : vector<16x32xf32> to vector<16x2xf32>
    %289 = vector.extract_strided_slice %8 {offsets = [0, 16], sizes = [16, 2], strides = [1, 1]} : vector<16x32xf32> to vector<16x2xf32>
    %290 = vector.extract_strided_slice %9 {offsets = [0, 16], sizes = [16, 2], strides = [1, 1]} : vector<16x32xf32> to vector<16x2xf32>
    %291 = vector.extract_strided_slice %10 {offsets = [0, 16], sizes = [16, 2], strides = [1, 1]} : vector<16x32xf32> to vector<16x2xf32>
    %292 = vector.extract_strided_slice %11 {offsets = [0, 16], sizes = [16, 2], strides = [1, 1]} : vector<16x32xf32> to vector<16x2xf32>
    %293 = vector.extract_strided_slice %12 {offsets = [0, 16], sizes = [16, 2], strides = [1, 1]} : vector<16x32xf32> to vector<16x2xf32>
    %294 = vector.extract_strided_slice %13 {offsets = [0, 16], sizes = [16, 2], strides = [1, 1]} : vector<16x32xf32> to vector<16x2xf32>
    %295 = vector.extract_strided_slice %14 {offsets = [0, 16], sizes = [16, 2], strides = [1, 1]} : vector<16x32xf32> to vector<16x2xf32>
    %296 = vector.extract_strided_slice %15 {offsets = [0, 16], sizes = [16, 2], strides = [1, 1]} : vector<16x32xf32> to vector<16x2xf32>
    %297 = vector.extract_strided_slice %16 {offsets = [0, 16], sizes = [16, 2], strides = [1, 1]} : vector<16x32xf32> to vector<16x2xf32>
    %298 = vector.extract_strided_slice %17 {offsets = [0, 16], sizes = [16, 2], strides = [1, 1]} : vector<16x32xf32> to vector<16x2xf32>
    %299 = vector.extract_strided_slice %18 {offsets = [0, 16], sizes = [16, 2], strides = [1, 1]} : vector<16x32xf32> to vector<16x2xf32>
    %300 = vector.extract_strided_slice %19 {offsets = [0, 16], sizes = [16, 2], strides = [1, 1]} : vector<16x32xf32> to vector<16x2xf32>
    %301 = vector.extract_strided_slice %20 {offsets = [0, 16], sizes = [16, 2], strides = [1, 1]} : vector<16x32xf32> to vector<16x2xf32>
    %302 = vector.extract_strided_slice %21 {offsets = [0, 16], sizes = [16, 2], strides = [1, 1]} : vector<16x32xf32> to vector<16x2xf32>
    %303 = vector.extract_strided_slice %22 {offsets = [0, 16], sizes = [16, 2], strides = [1, 1]} : vector<16x32xf32> to vector<16x2xf32>
    %304 = vector.extract_strided_slice %23 {offsets = [0, 16], sizes = [16, 2], strides = [1, 1]} : vector<16x32xf32> to vector<16x2xf32>
    %305 = vector.extract_strided_slice %24 {offsets = [0, 16], sizes = [16, 2], strides = [1, 1]} : vector<16x32xf32> to vector<16x2xf32>
    %306 = vector.extract_strided_slice %25 {offsets = [0, 16], sizes = [16, 2], strides = [1, 1]} : vector<16x32xf32> to vector<16x2xf32>
    %307 = vector.extract_strided_slice %26 {offsets = [0, 16], sizes = [16, 2], strides = [1, 1]} : vector<16x32xf32> to vector<16x2xf32>
    %308 = vector.extract_strided_slice %27 {offsets = [0, 16], sizes = [16, 2], strides = [1, 1]} : vector<16x32xf32> to vector<16x2xf32>
    %309 = vector.extract_strided_slice %28 {offsets = [0, 16], sizes = [16, 2], strides = [1, 1]} : vector<16x32xf32> to vector<16x2xf32>
    %310 = vector.extract_strided_slice %29 {offsets = [0, 16], sizes = [16, 2], strides = [1, 1]} : vector<16x32xf32> to vector<16x2xf32>
    %311 = tpu.concatenate %286, %287, %288, %289, %290, %291, %292, %293, %294, %295, %296, %297, %298, %299, %300, %301 in 1 : vector<16x2xf32>, vector<16x2xf32>, vector<16x2xf32>, vector<16x2xf32>, vector<16x2xf32>, vector<16x2xf32>, vector<16x2xf32>, vector<16x2xf32>, vector<16x2xf32>, vector<16x2xf32>, vector<16x2xf32>, vector<16x2xf32>, vector<16x2xf32>, vector<16x2xf32>, vector<16x2xf32>, vector<16x2xf32> -> vector<16x32xf32>
    %312 = tpu.concatenate %302, %303, %304, %305, %306, %307, %308, %309, %310 in 1 : vector<16x2xf32>, vector<16x2xf32>, vector<16x2xf32>, vector<16x2xf32>, vector<16x2xf32>, vector<16x2xf32>, vector<16x2xf32>, vector<16x2xf32>, vector<16x2xf32> -> vector<16x18xf32>
    %313 = tpu.concatenate %311, %312 in 1 : vector<16x32xf32>, vector<16x18xf32> -> vector<16x50xf32>
    %314 = arith.truncf %313 : vector<16x50xf32> to vector<16x50xbf16>
    %c8 = arith.constant 8 : index
    %c0_25 = arith.constant 0 : index
    %c0_26 = arith.constant 0 : index
    %315 = vector.load %arg3[%c8, %c0_25, %c0_26] : memref<16x50x2xbf16, #tpu.memory_space<vmem>>, vector<1x50x2xbf16>
    %316 = vector.shape_cast %315 : vector<1x50x2xbf16> to vector<50x2xbf16>
    %cst_27 = arith.constant dense<0.000000e+00> : vector<16x2xf32>
    %317 = tpu.matmul %314, %316, %cst_27 {dimension_numbers = #tpu.dot_dimension_numbers<[1], [0], [0], [1], [0, 0, 1, 1], [], []>} : vector<16x50xbf16>, vector<50x2xbf16>, vector<16x2xf32> -> vector<16x2xf32>
    %318 = vector.extract_strided_slice %5 {offsets = [0, 18], sizes = [16, 2], strides = [1, 1]} : vector<16x32xf32> to vector<16x2xf32>
    %319 = vector.extract_strided_slice %6 {offsets = [0, 18], sizes = [16, 2], strides = [1, 1]} : vector<16x32xf32> to vector<16x2xf32>
    %320 = vector.extract_strided_slice %7 {offsets = [0, 18], sizes = [16, 2], strides = [1, 1]} : vector<16x32xf32> to vector<16x2xf32>
    %321 = vector.extract_strided_slice %8 {offsets = [0, 18], sizes = [16, 2], strides = [1, 1]} : vector<16x32xf32> to vector<16x2xf32>
    %322 = vector.extract_strided_slice %9 {offsets = [0, 18], sizes = [16, 2], strides = [1, 1]} : vector<16x32xf32> to vector<16x2xf32>
    %323 = vector.extract_strided_slice %10 {offsets = [0, 18], sizes = [16, 2], strides = [1, 1]} : vector<16x32xf32> to vector<16x2xf32>
    %324 = vector.extract_strided_slice %11 {offsets = [0, 18], sizes = [16, 2], strides = [1, 1]} : vector<16x32xf32> to vector<16x2xf32>
    %325 = vector.extract_strided_slice %12 {offsets = [0, 18], sizes = [16, 2], strides = [1, 1]} : vector<16x32xf32> to vector<16x2xf32>
    %326 = vector.extract_strided_slice %13 {offsets = [0, 18], sizes = [16, 2], strides = [1, 1]} : vector<16x32xf32> to vector<16x2xf32>
    %327 = vector.extract_strided_slice %14 {offsets = [0, 18], sizes = [16, 2], strides = [1, 1]} : vector<16x32xf32> to vector<16x2xf32>
    %328 = vector.extract_strided_slice %15 {offsets = [0, 18], sizes = [16, 2], strides = [1, 1]} : vector<16x32xf32> to vector<16x2xf32>
    %329 = vector.extract_strided_slice %16 {offsets = [0, 18], sizes = [16, 2], strides = [1, 1]} : vector<16x32xf32> to vector<16x2xf32>
    %330 = vector.extract_strided_slice %17 {offsets = [0, 18], sizes = [16, 2], strides = [1, 1]} : vector<16x32xf32> to vector<16x2xf32>
    %331 = vector.extract_strided_slice %18 {offsets = [0, 18], sizes = [16, 2], strides = [1, 1]} : vector<16x32xf32> to vector<16x2xf32>
    %332 = vector.extract_strided_slice %19 {offsets = [0, 18], sizes = [16, 2], strides = [1, 1]} : vector<16x32xf32> to vector<16x2xf32>
    %333 = vector.extract_strided_slice %20 {offsets = [0, 18], sizes = [16, 2], strides = [1, 1]} : vector<16x32xf32> to vector<16x2xf32>
    %334 = vector.extract_strided_slice %21 {offsets = [0, 18], sizes = [16, 2], strides = [1, 1]} : vector<16x32xf32> to vector<16x2xf32>
    %335 = vector.extract_strided_slice %22 {offsets = [0, 18], sizes = [16, 2], strides = [1, 1]} : vector<16x32xf32> to vector<16x2xf32>
    %336 = vector.extract_strided_slice %23 {offsets = [0, 18], sizes = [16, 2], strides = [1, 1]} : vector<16x32xf32> to vector<16x2xf32>
    %337 = vector.extract_strided_slice %24 {offsets = [0, 18], sizes = [16, 2], strides = [1, 1]} : vector<16x32xf32> to vector<16x2xf32>
    %338 = vector.extract_strided_slice %25 {offsets = [0, 18], sizes = [16, 2], strides = [1, 1]} : vector<16x32xf32> to vector<16x2xf32>
    %339 = vector.extract_strided_slice %26 {offsets = [0, 18], sizes = [16, 2], strides = [1, 1]} : vector<16x32xf32> to vector<16x2xf32>
    %340 = vector.extract_strided_slice %27 {offsets = [0, 18], sizes = [16, 2], strides = [1, 1]} : vector<16x32xf32> to vector<16x2xf32>
    %341 = vector.extract_strided_slice %28 {offsets = [0, 18], sizes = [16, 2], strides = [1, 1]} : vector<16x32xf32> to vector<16x2xf32>
    %342 = vector.extract_strided_slice %29 {offsets = [0, 18], sizes = [16, 2], strides = [1, 1]} : vector<16x32xf32> to vector<16x2xf32>
    %343 = tpu.concatenate %318, %319, %320, %321, %322, %323, %324, %325, %326, %327, %328, %329, %330, %331, %332, %333 in 1 : vector<16x2xf32>, vector<16x2xf32>, vector<16x2xf32>, vector<16x2xf32>, vector<16x2xf32>, vector<16x2xf32>, vector<16x2xf32>, vector<16x2xf32>, vector<16x2xf32>, vector<16x2xf32>, vector<16x2xf32>, vector<16x2xf32>, vector<16x2xf32>, vector<16x2xf32>, vector<16x2xf32>, vector<16x2xf32> -> vector<16x32xf32>
    %344 = tpu.concatenate %334, %335, %336, %337, %338, %339, %340, %341, %342 in 1 : vector<16x2xf32>, vector<16x2xf32>, vector<16x2xf32>, vector<16x2xf32>, vector<16x2xf32>, vector<16x2xf32>, vector<16x2xf32>, vector<16x2xf32>, vector<16x2xf32> -> vector<16x18xf32>
    %345 = tpu.concatenate %343, %344 in 1 : vector<16x32xf32>, vector<16x18xf32> -> vector<16x50xf32>
    %346 = arith.truncf %345 : vector<16x50xf32> to vector<16x50xbf16>
    %c9 = arith.constant 9 : index
    %c0_28 = arith.constant 0 : index
    %c0_29 = arith.constant 0 : index
    %347 = vector.load %arg3[%c9, %c0_28, %c0_29] : memref<16x50x2xbf16, #tpu.memory_space<vmem>>, vector<1x50x2xbf16>
    %348 = vector.shape_cast %347 : vector<1x50x2xbf16> to vector<50x2xbf16>
    %cst_30 = arith.constant dense<0.000000e+00> : vector<16x2xf32>
    %349 = tpu.matmul %346, %348, %cst_30 {dimension_numbers = #tpu.dot_dimension_numbers<[1], [0], [0], [1], [0, 0, 1, 1], [], []>} : vector<16x50xbf16>, vector<50x2xbf16>, vector<16x2xf32> -> vector<16x2xf32>
    %350 = vector.extract_strided_slice %5 {offsets = [0, 20], sizes = [16, 2], strides = [1, 1]} : vector<16x32xf32> to vector<16x2xf32>
    %351 = vector.extract_strided_slice %6 {offsets = [0, 20], sizes = [16, 2], strides = [1, 1]} : vector<16x32xf32> to vector<16x2xf32>
    %352 = vector.extract_strided_slice %7 {offsets = [0, 20], sizes = [16, 2], strides = [1, 1]} : vector<16x32xf32> to vector<16x2xf32>
    %353 = vector.extract_strided_slice %8 {offsets = [0, 20], sizes = [16, 2], strides = [1, 1]} : vector<16x32xf32> to vector<16x2xf32>
    %354 = vector.extract_strided_slice %9 {offsets = [0, 20], sizes = [16, 2], strides = [1, 1]} : vector<16x32xf32> to vector<16x2xf32>
    %355 = vector.extract_strided_slice %10 {offsets = [0, 20], sizes = [16, 2], strides = [1, 1]} : vector<16x32xf32> to vector<16x2xf32>
    %356 = vector.extract_strided_slice %11 {offsets = [0, 20], sizes = [16, 2], strides = [1, 1]} : vector<16x32xf32> to vector<16x2xf32>
    %357 = vector.extract_strided_slice %12 {offsets = [0, 20], sizes = [16, 2], strides = [1, 1]} : vector<16x32xf32> to vector<16x2xf32>
    %358 = vector.extract_strided_slice %13 {offsets = [0, 20], sizes = [16, 2], strides = [1, 1]} : vector<16x32xf32> to vector<16x2xf32>
    %359 = vector.extract_strided_slice %14 {offsets = [0, 20], sizes = [16, 2], strides = [1, 1]} : vector<16x32xf32> to vector<16x2xf32>
    %360 = vector.extract_strided_slice %15 {offsets = [0, 20], sizes = [16, 2], strides = [1, 1]} : vector<16x32xf32> to vector<16x2xf32>
    %361 = vector.extract_strided_slice %16 {offsets = [0, 20], sizes = [16, 2], strides = [1, 1]} : vector<16x32xf32> to vector<16x2xf32>
    %362 = vector.extract_strided_slice %17 {offsets = [0, 20], sizes = [16, 2], strides = [1, 1]} : vector<16x32xf32> to vector<16x2xf32>
    %363 = vector.extract_strided_slice %18 {offsets = [0, 20], sizes = [16, 2], strides = [1, 1]} : vector<16x32xf32> to vector<16x2xf32>
    %364 = vector.extract_strided_slice %19 {offsets = [0, 20], sizes = [16, 2], strides = [1, 1]} : vector<16x32xf32> to vector<16x2xf32>
    %365 = vector.extract_strided_slice %20 {offsets = [0, 20], sizes = [16, 2], strides = [1, 1]} : vector<16x32xf32> to vector<16x2xf32>
    %366 = vector.extract_strided_slice %21 {offsets = [0, 20], sizes = [16, 2], strides = [1, 1]} : vector<16x32xf32> to vector<16x2xf32>
    %367 = vector.extract_strided_slice %22 {offsets = [0, 20], sizes = [16, 2], strides = [1, 1]} : vector<16x32xf32> to vector<16x2xf32>
    %368 = vector.extract_strided_slice %23 {offsets = [0, 20], sizes = [16, 2], strides = [1, 1]} : vector<16x32xf32> to vector<16x2xf32>
    %369 = vector.extract_strided_slice %24 {offsets = [0, 20], sizes = [16, 2], strides = [1, 1]} : vector<16x32xf32> to vector<16x2xf32>
    %370 = vector.extract_strided_slice %25 {offsets = [0, 20], sizes = [16, 2], strides = [1, 1]} : vector<16x32xf32> to vector<16x2xf32>
    %371 = vector.extract_strided_slice %26 {offsets = [0, 20], sizes = [16, 2], strides = [1, 1]} : vector<16x32xf32> to vector<16x2xf32>
    %372 = vector.extract_strided_slice %27 {offsets = [0, 20], sizes = [16, 2], strides = [1, 1]} : vector<16x32xf32> to vector<16x2xf32>
    %373 = vector.extract_strided_slice %28 {offsets = [0, 20], sizes = [16, 2], strides = [1, 1]} : vector<16x32xf32> to vector<16x2xf32>
    %374 = vector.extract_strided_slice %29 {offsets = [0, 20], sizes = [16, 2], strides = [1, 1]} : vector<16x32xf32> to vector<16x2xf32>
    %375 = tpu.concatenate %350, %351, %352, %353, %354, %355, %356, %357, %358, %359, %360, %361, %362, %363, %364, %365 in 1 : vector<16x2xf32>, vector<16x2xf32>, vector<16x2xf32>, vector<16x2xf32>, vector<16x2xf32>, vector<16x2xf32>, vector<16x2xf32>, vector<16x2xf32>, vector<16x2xf32>, vector<16x2xf32>, vector<16x2xf32>, vector<16x2xf32>, vector<16x2xf32>, vector<16x2xf32>, vector<16x2xf32>, vector<16x2xf32> -> vector<16x32xf32>
    %376 = tpu.concatenate %366, %367, %368, %369, %370, %371, %372, %373, %374 in 1 : vector<16x2xf32>, vector<16x2xf32>, vector<16x2xf32>, vector<16x2xf32>, vector<16x2xf32>, vector<16x2xf32>, vector<16x2xf32>, vector<16x2xf32>, vector<16x2xf32> -> vector<16x18xf32>
    %377 = tpu.concatenate %375, %376 in 1 : vector<16x32xf32>, vector<16x18xf32> -> vector<16x50xf32>
    %378 = arith.truncf %377 : vector<16x50xf32> to vector<16x50xbf16>
    %c10 = arith.constant 10 : index
    %c0_31 = arith.constant 0 : index
    %c0_32 = arith.constant 0 : index
    %379 = vector.load %arg3[%c10, %c0_31, %c0_32] : memref<16x50x2xbf16, #tpu.memory_space<vmem>>, vector<1x50x2xbf16>
    %380 = vector.shape_cast %379 : vector<1x50x2xbf16> to vector<50x2xbf16>
    %cst_33 = arith.constant dense<0.000000e+00> : vector<16x2xf32>
    %381 = tpu.matmul %378, %380, %cst_33 {dimension_numbers = #tpu.dot_dimension_numbers<[1], [0], [0], [1], [0, 0, 1, 1], [], []>} : vector<16x50xbf16>, vector<50x2xbf16>, vector<16x2xf32> -> vector<16x2xf32>
    %382 = vector.extract_strided_slice %5 {offsets = [0, 22], sizes = [16, 2], strides = [1, 1]} : vector<16x32xf32> to vector<16x2xf32>
    %383 = vector.extract_strided_slice %6 {offsets = [0, 22], sizes = [16, 2], strides = [1, 1]} : vector<16x32xf32> to vector<16x2xf32>
    %384 = vector.extract_strided_slice %7 {offsets = [0, 22], sizes = [16, 2], strides = [1, 1]} : vector<16x32xf32> to vector<16x2xf32>
    %385 = vector.extract_strided_slice %8 {offsets = [0, 22], sizes = [16, 2], strides = [1, 1]} : vector<16x32xf32> to vector<16x2xf32>
    %386 = vector.extract_strided_slice %9 {offsets = [0, 22], sizes = [16, 2], strides = [1, 1]} : vector<16x32xf32> to vector<16x2xf32>
    %387 = vector.extract_strided_slice %10 {offsets = [0, 22], sizes = [16, 2], strides = [1, 1]} : vector<16x32xf32> to vector<16x2xf32>
    %388 = vector.extract_strided_slice %11 {offsets = [0, 22], sizes = [16, 2], strides = [1, 1]} : vector<16x32xf32> to vector<16x2xf32>
    %389 = vector.extract_strided_slice %12 {offsets = [0, 22], sizes = [16, 2], strides = [1, 1]} : vector<16x32xf32> to vector<16x2xf32>
    %390 = vector.extract_strided_slice %13 {offsets = [0, 22], sizes = [16, 2], strides = [1, 1]} : vector<16x32xf32> to vector<16x2xf32>
    %391 = vector.extract_strided_slice %14 {offsets = [0, 22], sizes = [16, 2], strides = [1, 1]} : vector<16x32xf32> to vector<16x2xf32>
    %392 = vector.extract_strided_slice %15 {offsets = [0, 22], sizes = [16, 2], strides = [1, 1]} : vector<16x32xf32> to vector<16x2xf32>
    %393 = vector.extract_strided_slice %16 {offsets = [0, 22], sizes = [16, 2], strides = [1, 1]} : vector<16x32xf32> to vector<16x2xf32>
    %394 = vector.extract_strided_slice %17 {offsets = [0, 22], sizes = [16, 2], strides = [1, 1]} : vector<16x32xf32> to vector<16x2xf32>
    %395 = vector.extract_strided_slice %18 {offsets = [0, 22], sizes = [16, 2], strides = [1, 1]} : vector<16x32xf32> to vector<16x2xf32>
    %396 = vector.extract_strided_slice %19 {offsets = [0, 22], sizes = [16, 2], strides = [1, 1]} : vector<16x32xf32> to vector<16x2xf32>
    %397 = vector.extract_strided_slice %20 {offsets = [0, 22], sizes = [16, 2], strides = [1, 1]} : vector<16x32xf32> to vector<16x2xf32>
    %398 = vector.extract_strided_slice %21 {offsets = [0, 22], sizes = [16, 2], strides = [1, 1]} : vector<16x32xf32> to vector<16x2xf32>
    %399 = vector.extract_strided_slice %22 {offsets = [0, 22], sizes = [16, 2], strides = [1, 1]} : vector<16x32xf32> to vector<16x2xf32>
    %400 = vector.extract_strided_slice %23 {offsets = [0, 22], sizes = [16, 2], strides = [1, 1]} : vector<16x32xf32> to vector<16x2xf32>
    %401 = vector.extract_strided_slice %24 {offsets = [0, 22], sizes = [16, 2], strides = [1, 1]} : vector<16x32xf32> to vector<16x2xf32>
    %402 = vector.extract_strided_slice %25 {offsets = [0, 22], sizes = [16, 2], strides = [1, 1]} : vector<16x32xf32> to vector<16x2xf32>
    %403 = vector.extract_strided_slice %26 {offsets = [0, 22], sizes = [16, 2], strides = [1, 1]} : vector<16x32xf32> to vector<16x2xf32>
    %404 = vector.extract_strided_slice %27 {offsets = [0, 22], sizes = [16, 2], strides = [1, 1]} : vector<16x32xf32> to vector<16x2xf32>
    %405 = vector.extract_strided_slice %28 {offsets = [0, 22], sizes = [16, 2], strides = [1, 1]} : vector<16x32xf32> to vector<16x2xf32>
    %406 = vector.extract_strided_slice %29 {offsets = [0, 22], sizes = [16, 2], strides = [1, 1]} : vector<16x32xf32> to vector<16x2xf32>
    %407 = tpu.concatenate %382, %383, %384, %385, %386, %387, %388, %389, %390, %391, %392, %393, %394, %395, %396, %397 in 1 : vector<16x2xf32>, vector<16x2xf32>, vector<16x2xf32>, vector<16x2xf32>, vector<16x2xf32>, vector<16x2xf32>, vector<16x2xf32>, vector<16x2xf32>, vector<16x2xf32>, vector<16x2xf32>, vector<16x2xf32>, vector<16x2xf32>, vector<16x2xf32>, vector<16x2xf32>, vector<16x2xf32>, vector<16x2xf32> -> vector<16x32xf32>
    %408 = tpu.concatenate %398, %399, %400, %401, %402, %403, %404, %405, %406 in 1 : vector<16x2xf32>, vector<16x2xf32>, vector<16x2xf32>, vector<16x2xf32>, vector<16x2xf32>, vector<16x2xf32>, vector<16x2xf32>, vector<16x2xf32>, vector<16x2xf32> -> vector<16x18xf32>
    %409 = tpu.concatenate %407, %408 in 1 : vector<16x32xf32>, vector<16x18xf32> -> vector<16x50xf32>
    %410 = arith.truncf %409 : vector<16x50xf32> to vector<16x50xbf16>
    %c11 = arith.constant 11 : index
    %c0_34 = arith.constant 0 : index
    %c0_35 = arith.constant 0 : index
    %411 = vector.load %arg3[%c11, %c0_34, %c0_35] : memref<16x50x2xbf16, #tpu.memory_space<vmem>>, vector<1x50x2xbf16>
    %412 = vector.shape_cast %411 : vector<1x50x2xbf16> to vector<50x2xbf16>
    %cst_36 = arith.constant dense<0.000000e+00> : vector<16x2xf32>
    %413 = tpu.matmul %410, %412, %cst_36 {dimension_numbers = #tpu.dot_dimension_numbers<[1], [0], [0], [1], [0, 0, 1, 1], [], []>} : vector<16x50xbf16>, vector<50x2xbf16>, vector<16x2xf32> -> vector<16x2xf32>
    %414 = vector.extract_strided_slice %5 {offsets = [0, 24], sizes = [16, 2], strides = [1, 1]} : vector<16x32xf32> to vector<16x2xf32>
    %415 = vector.extract_strided_slice %6 {offsets = [0, 24], sizes = [16, 2], strides = [1, 1]} : vector<16x32xf32> to vector<16x2xf32>
    %416 = vector.extract_strided_slice %7 {offsets = [0, 24], sizes = [16, 2], strides = [1, 1]} : vector<16x32xf32> to vector<16x2xf32>
    %417 = vector.extract_strided_slice %8 {offsets = [0, 24], sizes = [16, 2], strides = [1, 1]} : vector<16x32xf32> to vector<16x2xf32>
    %418 = vector.extract_strided_slice %9 {offsets = [0, 24], sizes = [16, 2], strides = [1, 1]} : vector<16x32xf32> to vector<16x2xf32>
    %419 = vector.extract_strided_slice %10 {offsets = [0, 24], sizes = [16, 2], strides = [1, 1]} : vector<16x32xf32> to vector<16x2xf32>
    %420 = vector.extract_strided_slice %11 {offsets = [0, 24], sizes = [16, 2], strides = [1, 1]} : vector<16x32xf32> to vector<16x2xf32>
    %421 = vector.extract_strided_slice %12 {offsets = [0, 24], sizes = [16, 2], strides = [1, 1]} : vector<16x32xf32> to vector<16x2xf32>
    %422 = vector.extract_strided_slice %13 {offsets = [0, 24], sizes = [16, 2], strides = [1, 1]} : vector<16x32xf32> to vector<16x2xf32>
    %423 = vector.extract_strided_slice %14 {offsets = [0, 24], sizes = [16, 2], strides = [1, 1]} : vector<16x32xf32> to vector<16x2xf32>
    %424 = vector.extract_strided_slice %15 {offsets = [0, 24], sizes = [16, 2], strides = [1, 1]} : vector<16x32xf32> to vector<16x2xf32>
    %425 = vector.extract_strided_slice %16 {offsets = [0, 24], sizes = [16, 2], strides = [1, 1]} : vector<16x32xf32> to vector<16x2xf32>
    %426 = vector.extract_strided_slice %17 {offsets = [0, 24], sizes = [16, 2], strides = [1, 1]} : vector<16x32xf32> to vector<16x2xf32>
    %427 = vector.extract_strided_slice %18 {offsets = [0, 24], sizes = [16, 2], strides = [1, 1]} : vector<16x32xf32> to vector<16x2xf32>
    %428 = vector.extract_strided_slice %19 {offsets = [0, 24], sizes = [16, 2], strides = [1, 1]} : vector<16x32xf32> to vector<16x2xf32>
    %429 = vector.extract_strided_slice %20 {offsets = [0, 24], sizes = [16, 2], strides = [1, 1]} : vector<16x32xf32> to vector<16x2xf32>
    %430 = vector.extract_strided_slice %21 {offsets = [0, 24], sizes = [16, 2], strides = [1, 1]} : vector<16x32xf32> to vector<16x2xf32>
    %431 = vector.extract_strided_slice %22 {offsets = [0, 24], sizes = [16, 2], strides = [1, 1]} : vector<16x32xf32> to vector<16x2xf32>
    %432 = vector.extract_strided_slice %23 {offsets = [0, 24], sizes = [16, 2], strides = [1, 1]} : vector<16x32xf32> to vector<16x2xf32>
    %433 = vector.extract_strided_slice %24 {offsets = [0, 24], sizes = [16, 2], strides = [1, 1]} : vector<16x32xf32> to vector<16x2xf32>
    %434 = vector.extract_strided_slice %25 {offsets = [0, 24], sizes = [16, 2], strides = [1, 1]} : vector<16x32xf32> to vector<16x2xf32>
    %435 = vector.extract_strided_slice %26 {offsets = [0, 24], sizes = [16, 2], strides = [1, 1]} : vector<16x32xf32> to vector<16x2xf32>
    %436 = vector.extract_strided_slice %27 {offsets = [0, 24], sizes = [16, 2], strides = [1, 1]} : vector<16x32xf32> to vector<16x2xf32>
    %437 = vector.extract_strided_slice %28 {offsets = [0, 24], sizes = [16, 2], strides = [1, 1]} : vector<16x32xf32> to vector<16x2xf32>
    %438 = vector.extract_strided_slice %29 {offsets = [0, 24], sizes = [16, 2], strides = [1, 1]} : vector<16x32xf32> to vector<16x2xf32>
    %439 = tpu.concatenate %414, %415, %416, %417, %418, %419, %420, %421, %422, %423, %424, %425, %426, %427, %428, %429 in 1 : vector<16x2xf32>, vector<16x2xf32>, vector<16x2xf32>, vector<16x2xf32>, vector<16x2xf32>, vector<16x2xf32>, vector<16x2xf32>, vector<16x2xf32>, vector<16x2xf32>, vector<16x2xf32>, vector<16x2xf32>, vector<16x2xf32>, vector<16x2xf32>, vector<16x2xf32>, vector<16x2xf32>, vector<16x2xf32> -> vector<16x32xf32>
    %440 = tpu.concatenate %430, %431, %432, %433, %434, %435, %436, %437, %438 in 1 : vector<16x2xf32>, vector<16x2xf32>, vector<16x2xf32>, vector<16x2xf32>, vector<16x2xf32>, vector<16x2xf32>, vector<16x2xf32>, vector<16x2xf32>, vector<16x2xf32> -> vector<16x18xf32>
    %441 = tpu.concatenate %439, %440 in 1 : vector<16x32xf32>, vector<16x18xf32> -> vector<16x50xf32>
    %442 = arith.truncf %441 : vector<16x50xf32> to vector<16x50xbf16>
    %c12 = arith.constant 12 : index
    %c0_37 = arith.constant 0 : index
    %c0_38 = arith.constant 0 : index
    %443 = vector.load %arg3[%c12, %c0_37, %c0_38] : memref<16x50x2xbf16, #tpu.memory_space<vmem>>, vector<1x50x2xbf16>
    %444 = vector.shape_cast %443 : vector<1x50x2xbf16> to vector<50x2xbf16>
    %cst_39 = arith.constant dense<0.000000e+00> : vector<16x2xf32>
    %445 = tpu.matmul %442, %444, %cst_39 {dimension_numbers = #tpu.dot_dimension_numbers<[1], [0], [0], [1], [0, 0, 1, 1], [], []>} : vector<16x50xbf16>, vector<50x2xbf16>, vector<16x2xf32> -> vector<16x2xf32>
    %446 = vector.extract_strided_slice %5 {offsets = [0, 26], sizes = [16, 2], strides = [1, 1]} : vector<16x32xf32> to vector<16x2xf32>
    %447 = vector.extract_strided_slice %6 {offsets = [0, 26], sizes = [16, 2], strides = [1, 1]} : vector<16x32xf32> to vector<16x2xf32>
    %448 = vector.extract_strided_slice %7 {offsets = [0, 26], sizes = [16, 2], strides = [1, 1]} : vector<16x32xf32> to vector<16x2xf32>
    %449 = vector.extract_strided_slice %8 {offsets = [0, 26], sizes = [16, 2], strides = [1, 1]} : vector<16x32xf32> to vector<16x2xf32>
    %450 = vector.extract_strided_slice %9 {offsets = [0, 26], sizes = [16, 2], strides = [1, 1]} : vector<16x32xf32> to vector<16x2xf32>
    %451 = vector.extract_strided_slice %10 {offsets = [0, 26], sizes = [16, 2], strides = [1, 1]} : vector<16x32xf32> to vector<16x2xf32>
    %452 = vector.extract_strided_slice %11 {offsets = [0, 26], sizes = [16, 2], strides = [1, 1]} : vector<16x32xf32> to vector<16x2xf32>
    %453 = vector.extract_strided_slice %12 {offsets = [0, 26], sizes = [16, 2], strides = [1, 1]} : vector<16x32xf32> to vector<16x2xf32>
    %454 = vector.extract_strided_slice %13 {offsets = [0, 26], sizes = [16, 2], strides = [1, 1]} : vector<16x32xf32> to vector<16x2xf32>
    %455 = vector.extract_strided_slice %14 {offsets = [0, 26], sizes = [16, 2], strides = [1, 1]} : vector<16x32xf32> to vector<16x2xf32>
    %456 = vector.extract_strided_slice %15 {offsets = [0, 26], sizes = [16, 2], strides = [1, 1]} : vector<16x32xf32> to vector<16x2xf32>
    %457 = vector.extract_strided_slice %16 {offsets = [0, 26], sizes = [16, 2], strides = [1, 1]} : vector<16x32xf32> to vector<16x2xf32>
    %458 = vector.extract_strided_slice %17 {offsets = [0, 26], sizes = [16, 2], strides = [1, 1]} : vector<16x32xf32> to vector<16x2xf32>
    %459 = vector.extract_strided_slice %18 {offsets = [0, 26], sizes = [16, 2], strides = [1, 1]} : vector<16x32xf32> to vector<16x2xf32>
    %460 = vector.extract_strided_slice %19 {offsets = [0, 26], sizes = [16, 2], strides = [1, 1]} : vector<16x32xf32> to vector<16x2xf32>
    %461 = vector.extract_strided_slice %20 {offsets = [0, 26], sizes = [16, 2], strides = [1, 1]} : vector<16x32xf32> to vector<16x2xf32>
    %462 = vector.extract_strided_slice %21 {offsets = [0, 26], sizes = [16, 2], strides = [1, 1]} : vector<16x32xf32> to vector<16x2xf32>
    %463 = vector.extract_strided_slice %22 {offsets = [0, 26], sizes = [16, 2], strides = [1, 1]} : vector<16x32xf32> to vector<16x2xf32>
    %464 = vector.extract_strided_slice %23 {offsets = [0, 26], sizes = [16, 2], strides = [1, 1]} : vector<16x32xf32> to vector<16x2xf32>
    %465 = vector.extract_strided_slice %24 {offsets = [0, 26], sizes = [16, 2], strides = [1, 1]} : vector<16x32xf32> to vector<16x2xf32>
    %466 = vector.extract_strided_slice %25 {offsets = [0, 26], sizes = [16, 2], strides = [1, 1]} : vector<16x32xf32> to vector<16x2xf32>
    %467 = vector.extract_strided_slice %26 {offsets = [0, 26], sizes = [16, 2], strides = [1, 1]} : vector<16x32xf32> to vector<16x2xf32>
    %468 = vector.extract_strided_slice %27 {offsets = [0, 26], sizes = [16, 2], strides = [1, 1]} : vector<16x32xf32> to vector<16x2xf32>
    %469 = vector.extract_strided_slice %28 {offsets = [0, 26], sizes = [16, 2], strides = [1, 1]} : vector<16x32xf32> to vector<16x2xf32>
    %470 = vector.extract_strided_slice %29 {offsets = [0, 26], sizes = [16, 2], strides = [1, 1]} : vector<16x32xf32> to vector<16x2xf32>
    %471 = tpu.concatenate %446, %447, %448, %449, %450, %451, %452, %453, %454, %455, %456, %457, %458, %459, %460, %461 in 1 : vector<16x2xf32>, vector<16x2xf32>, vector<16x2xf32>, vector<16x2xf32>, vector<16x2xf32>, vector<16x2xf32>, vector<16x2xf32>, vector<16x2xf32>, vector<16x2xf32>, vector<16x2xf32>, vector<16x2xf32>, vector<16x2xf32>, vector<16x2xf32>, vector<16x2xf32>, vector<16x2xf32>, vector<16x2xf32> -> vector<16x32xf32>
    %472 = tpu.concatenate %462, %463, %464, %465, %466, %467, %468, %469, %470 in 1 : vector<16x2xf32>, vector<16x2xf32>, vector<16x2xf32>, vector<16x2xf32>, vector<16x2xf32>, vector<16x2xf32>, vector<16x2xf32>, vector<16x2xf32>, vector<16x2xf32> -> vector<16x18xf32>
    %473 = tpu.concatenate %471, %472 in 1 : vector<16x32xf32>, vector<16x18xf32> -> vector<16x50xf32>
    %474 = arith.truncf %473 : vector<16x50xf32> to vector<16x50xbf16>
    %c13 = arith.constant 13 : index
    %c0_40 = arith.constant 0 : index
    %c0_41 = arith.constant 0 : index
    %475 = vector.load %arg3[%c13, %c0_40, %c0_41] : memref<16x50x2xbf16, #tpu.memory_space<vmem>>, vector<1x50x2xbf16>
    %476 = vector.shape_cast %475 : vector<1x50x2xbf16> to vector<50x2xbf16>
    %cst_42 = arith.constant dense<0.000000e+00> : vector<16x2xf32>
    %477 = tpu.matmul %474, %476, %cst_42 {dimension_numbers = #tpu.dot_dimension_numbers<[1], [0], [0], [1], [0, 0, 1, 1], [], []>} : vector<16x50xbf16>, vector<50x2xbf16>, vector<16x2xf32> -> vector<16x2xf32>
    %478 = vector.extract_strided_slice %5 {offsets = [0, 28], sizes = [16, 2], strides = [1, 1]} : vector<16x32xf32> to vector<16x2xf32>
    %479 = vector.extract_strided_slice %6 {offsets = [0, 28], sizes = [16, 2], strides = [1, 1]} : vector<16x32xf32> to vector<16x2xf32>
    %480 = vector.extract_strided_slice %7 {offsets = [0, 28], sizes = [16, 2], strides = [1, 1]} : vector<16x32xf32> to vector<16x2xf32>
    %481 = vector.extract_strided_slice %8 {offsets = [0, 28], sizes = [16, 2], strides = [1, 1]} : vector<16x32xf32> to vector<16x2xf32>
    %482 = vector.extract_strided_slice %9 {offsets = [0, 28], sizes = [16, 2], strides = [1, 1]} : vector<16x32xf32> to vector<16x2xf32>
    %483 = vector.extract_strided_slice %10 {offsets = [0, 28], sizes = [16, 2], strides = [1, 1]} : vector<16x32xf32> to vector<16x2xf32>
    %484 = vector.extract_strided_slice %11 {offsets = [0, 28], sizes = [16, 2], strides = [1, 1]} : vector<16x32xf32> to vector<16x2xf32>
    %485 = vector.extract_strided_slice %12 {offsets = [0, 28], sizes = [16, 2], strides = [1, 1]} : vector<16x32xf32> to vector<16x2xf32>
    %486 = vector.extract_strided_slice %13 {offsets = [0, 28], sizes = [16, 2], strides = [1, 1]} : vector<16x32xf32> to vector<16x2xf32>
    %487 = vector.extract_strided_slice %14 {offsets = [0, 28], sizes = [16, 2], strides = [1, 1]} : vector<16x32xf32> to vector<16x2xf32>
    %488 = vector.extract_strided_slice %15 {offsets = [0, 28], sizes = [16, 2], strides = [1, 1]} : vector<16x32xf32> to vector<16x2xf32>
    %489 = vector.extract_strided_slice %16 {offsets = [0, 28], sizes = [16, 2], strides = [1, 1]} : vector<16x32xf32> to vector<16x2xf32>
    %490 = vector.extract_strided_slice %17 {offsets = [0, 28], sizes = [16, 2], strides = [1, 1]} : vector<16x32xf32> to vector<16x2xf32>
    %491 = vector.extract_strided_slice %18 {offsets = [0, 28], sizes = [16, 2], strides = [1, 1]} : vector<16x32xf32> to vector<16x2xf32>
    %492 = vector.extract_strided_slice %19 {offsets = [0, 28], sizes = [16, 2], strides = [1, 1]} : vector<16x32xf32> to vector<16x2xf32>
    %493 = vector.extract_strided_slice %20 {offsets = [0, 28], sizes = [16, 2], strides = [1, 1]} : vector<16x32xf32> to vector<16x2xf32>
    %494 = vector.extract_strided_slice %21 {offsets = [0, 28], sizes = [16, 2], strides = [1, 1]} : vector<16x32xf32> to vector<16x2xf32>
    %495 = vector.extract_strided_slice %22 {offsets = [0, 28], sizes = [16, 2], strides = [1, 1]} : vector<16x32xf32> to vector<16x2xf32>
    %496 = vector.extract_strided_slice %23 {offsets = [0, 28], sizes = [16, 2], strides = [1, 1]} : vector<16x32xf32> to vector<16x2xf32>
    %497 = vector.extract_strided_slice %24 {offsets = [0, 28], sizes = [16, 2], strides = [1, 1]} : vector<16x32xf32> to vector<16x2xf32>
    %498 = vector.extract_strided_slice %25 {offsets = [0, 28], sizes = [16, 2], strides = [1, 1]} : vector<16x32xf32> to vector<16x2xf32>
    %499 = vector.extract_strided_slice %26 {offsets = [0, 28], sizes = [16, 2], strides = [1, 1]} : vector<16x32xf32> to vector<16x2xf32>
    %500 = vector.extract_strided_slice %27 {offsets = [0, 28], sizes = [16, 2], strides = [1, 1]} : vector<16x32xf32> to vector<16x2xf32>
    %501 = vector.extract_strided_slice %28 {offsets = [0, 28], sizes = [16, 2], strides = [1, 1]} : vector<16x32xf32> to vector<16x2xf32>
    %502 = vector.extract_strided_slice %29 {offsets = [0, 28], sizes = [16, 2], strides = [1, 1]} : vector<16x32xf32> to vector<16x2xf32>
    %503 = tpu.concatenate %478, %479, %480, %481, %482, %483, %484, %485, %486, %487, %488, %489, %490, %491, %492, %493 in 1 : vector<16x2xf32>, vector<16x2xf32>, vector<16x2xf32>, vector<16x2xf32>, vector<16x2xf32>, vector<16x2xf32>, vector<16x2xf32>, vector<16x2xf32>, vector<16x2xf32>, vector<16x2xf32>, vector<16x2xf32>, vector<16x2xf32>, vector<16x2xf32>, vector<16x2xf32>, vector<16x2xf32>, vector<16x2xf32> -> vector<16x32xf32>
    %504 = tpu.concatenate %494, %495, %496, %497, %498, %499, %500, %501, %502 in 1 : vector<16x2xf32>, vector<16x2xf32>, vector<16x2xf32>, vector<16x2xf32>, vector<16x2xf32>, vector<16x2xf32>, vector<16x2xf32>, vector<16x2xf32>, vector<16x2xf32> -> vector<16x18xf32>
    %505 = tpu.concatenate %503, %504 in 1 : vector<16x32xf32>, vector<16x18xf32> -> vector<16x50xf32>
    %506 = arith.truncf %505 : vector<16x50xf32> to vector<16x50xbf16>
    %c14 = arith.constant 14 : index
    %c0_43 = arith.constant 0 : index
    %c0_44 = arith.constant 0 : index
    %507 = vector.load %arg3[%c14, %c0_43, %c0_44] : memref<16x50x2xbf16, #tpu.memory_space<vmem>>, vector<1x50x2xbf16>
    %508 = vector.shape_cast %507 : vector<1x50x2xbf16> to vector<50x2xbf16>
    %cst_45 = arith.constant dense<0.000000e+00> : vector<16x2xf32>
    %509 = tpu.matmul %506, %508, %cst_45 {dimension_numbers = #tpu.dot_dimension_numbers<[1], [0], [0], [1], [0, 0, 1, 1], [], []>} : vector<16x50xbf16>, vector<50x2xbf16>, vector<16x2xf32> -> vector<16x2xf32>
    %510 = vector.extract_strided_slice %5 {offsets = [0, 30], sizes = [16, 2], strides = [1, 1]} : vector<16x32xf32> to vector<16x2xf32>
    %511 = vector.extract_strided_slice %6 {offsets = [0, 30], sizes = [16, 2], strides = [1, 1]} : vector<16x32xf32> to vector<16x2xf32>
    %512 = vector.extract_strided_slice %7 {offsets = [0, 30], sizes = [16, 2], strides = [1, 1]} : vector<16x32xf32> to vector<16x2xf32>
    %513 = vector.extract_strided_slice %8 {offsets = [0, 30], sizes = [16, 2], strides = [1, 1]} : vector<16x32xf32> to vector<16x2xf32>
    %514 = vector.extract_strided_slice %9 {offsets = [0, 30], sizes = [16, 2], strides = [1, 1]} : vector<16x32xf32> to vector<16x2xf32>
    %515 = vector.extract_strided_slice %10 {offsets = [0, 30], sizes = [16, 2], strides = [1, 1]} : vector<16x32xf32> to vector<16x2xf32>
    %516 = vector.extract_strided_slice %11 {offsets = [0, 30], sizes = [16, 2], strides = [1, 1]} : vector<16x32xf32> to vector<16x2xf32>
    %517 = vector.extract_strided_slice %12 {offsets = [0, 30], sizes = [16, 2], strides = [1, 1]} : vector<16x32xf32> to vector<16x2xf32>
    %518 = vector.extract_strided_slice %13 {offsets = [0, 30], sizes = [16, 2], strides = [1, 1]} : vector<16x32xf32> to vector<16x2xf32>
    %519 = vector.extract_strided_slice %14 {offsets = [0, 30], sizes = [16, 2], strides = [1, 1]} : vector<16x32xf32> to vector<16x2xf32>
    %520 = vector.extract_strided_slice %15 {offsets = [0, 30], sizes = [16, 2], strides = [1, 1]} : vector<16x32xf32> to vector<16x2xf32>
    %521 = vector.extract_strided_slice %16 {offsets = [0, 30], sizes = [16, 2], strides = [1, 1]} : vector<16x32xf32> to vector<16x2xf32>
    %522 = vector.extract_strided_slice %17 {offsets = [0, 30], sizes = [16, 2], strides = [1, 1]} : vector<16x32xf32> to vector<16x2xf32>
    %523 = vector.extract_strided_slice %18 {offsets = [0, 30], sizes = [16, 2], strides = [1, 1]} : vector<16x32xf32> to vector<16x2xf32>
    %524 = vector.extract_strided_slice %19 {offsets = [0, 30], sizes = [16, 2], strides = [1, 1]} : vector<16x32xf32> to vector<16x2xf32>
    %525 = vector.extract_strided_slice %20 {offsets = [0, 30], sizes = [16, 2], strides = [1, 1]} : vector<16x32xf32> to vector<16x2xf32>
    %526 = vector.extract_strided_slice %21 {offsets = [0, 30], sizes = [16, 2], strides = [1, 1]} : vector<16x32xf32> to vector<16x2xf32>
    %527 = vector.extract_strided_slice %22 {offsets = [0, 30], sizes = [16, 2], strides = [1, 1]} : vector<16x32xf32> to vector<16x2xf32>
    %528 = vector.extract_strided_slice %23 {offsets = [0, 30], sizes = [16, 2], strides = [1, 1]} : vector<16x32xf32> to vector<16x2xf32>
    %529 = vector.extract_strided_slice %24 {offsets = [0, 30], sizes = [16, 2], strides = [1, 1]} : vector<16x32xf32> to vector<16x2xf32>
    %530 = vector.extract_strided_slice %25 {offsets = [0, 30], sizes = [16, 2], strides = [1, 1]} : vector<16x32xf32> to vector<16x2xf32>
    %531 = vector.extract_strided_slice %26 {offsets = [0, 30], sizes = [16, 2], strides = [1, 1]} : vector<16x32xf32> to vector<16x2xf32>
    %532 = vector.extract_strided_slice %27 {offsets = [0, 30], sizes = [16, 2], strides = [1, 1]} : vector<16x32xf32> to vector<16x2xf32>
    %533 = vector.extract_strided_slice %28 {offsets = [0, 30], sizes = [16, 2], strides = [1, 1]} : vector<16x32xf32> to vector<16x2xf32>
    %534 = vector.extract_strided_slice %29 {offsets = [0, 30], sizes = [16, 2], strides = [1, 1]} : vector<16x32xf32> to vector<16x2xf32>
    %535 = tpu.concatenate %510, %511, %512, %513, %514, %515, %516, %517, %518, %519, %520, %521, %522, %523, %524, %525 in 1 : vector<16x2xf32>, vector<16x2xf32>, vector<16x2xf32>, vector<16x2xf32>, vector<16x2xf32>, vector<16x2xf32>, vector<16x2xf32>, vector<16x2xf32>, vector<16x2xf32>, vector<16x2xf32>, vector<16x2xf32>, vector<16x2xf32>, vector<16x2xf32>, vector<16x2xf32>, vector<16x2xf32>, vector<16x2xf32> -> vector<16x32xf32>
    %536 = tpu.concatenate %526, %527, %528, %529, %530, %531, %532, %533, %534 in 1 : vector<16x2xf32>, vector<16x2xf32>, vector<16x2xf32>, vector<16x2xf32>, vector<16x2xf32>, vector<16x2xf32>, vector<16x2xf32>, vector<16x2xf32>, vector<16x2xf32> -> vector<16x18xf32>
    %537 = tpu.concatenate %535, %536 in 1 : vector<16x32xf32>, vector<16x18xf32> -> vector<16x50xf32>
    %538 = arith.truncf %537 : vector<16x50xf32> to vector<16x50xbf16>
    %c15 = arith.constant 15 : index
    %c0_46 = arith.constant 0 : index
    %c0_47 = arith.constant 0 : index
    %539 = vector.load %arg3[%c15, %c0_46, %c0_47] : memref<16x50x2xbf16, #tpu.memory_space<vmem>>, vector<1x50x2xbf16>
    %540 = vector.shape_cast %539 : vector<1x50x2xbf16> to vector<50x2xbf16>
    %cst_48 = arith.constant dense<0.000000e+00> : vector<16x2xf32>
    %541 = tpu.matmul %538, %540, %cst_48 {dimension_numbers = #tpu.dot_dimension_numbers<[1], [0], [0], [1], [0, 0, 1, 1], [], []>} : vector<16x50xbf16>, vector<50x2xbf16>, vector<16x2xf32> -> vector<16x2xf32>
    %542 = tpu.concatenate %61, %93, %125, %157, %189, %221, %253, %285, %317, %349, %381, %413, %445, %477, %509, %541 in 1 : vector<16x2xf32>, vector<16x2xf32>, vector<16x2xf32>, vector<16x2xf32>, vector<16x2xf32>, vector<16x2xf32>, vector<16x2xf32>, vector<16x2xf32>, vector<16x2xf32>, vector<16x2xf32>, vector<16x2xf32>, vector<16x2xf32>, vector<16x2xf32>, vector<16x2xf32>, vector<16x2xf32>, vector<16x2xf32> -> vector<16x32xf32>
    %c0_49 = arith.constant 0 : index
    %c0_50 = arith.constant 0 : index
    %543 = vector.load %arg4[%c0_49, %c0_50] : memref<1x32xf32, #tpu.memory_space<vmem>>, vector<1x32xf32>
    %544 = vector.broadcast %543 : vector<1x32xf32> to vector<16x32xf32>
    %545 = arith.addf %542, %544 : vector<16x32xf32>
    %cst_51 = arith.constant 5.000000e-01 : f32
    %546 = vector.broadcast %cst_51 : f32 to vector<16x32xf32>
    %547 = arith.mulf %546, %545 : vector<16x32xf32>
    %cst_52 = arith.constant 0.707106769 : f32
    %548 = vector.broadcast %cst_52 : f32 to vector<16x32xf32>
    %549 = arith.mulf %545, %548 : vector<16x32xf32>
    %550 = math.erf %549 : vector<16x32xf32>
    %cst_53 = arith.constant 1.000000e+00 : f32
    %551 = vector.broadcast %cst_53 : f32 to vector<16x32xf32>
    %552 = arith.addf %551, %550 : vector<16x32xf32>
    %553 = arith.mulf %547, %552 : vector<16x32xf32>
    %554 = arith.addf %17, %553 : vector<16x32xf32>
    %cst_54 = arith.constant dense<0.000000e+00> : vector<16xf32>
    %555 = vector.multi_reduction <add>, %554, %cst_54 [1] : vector<16x32xf32> to vector<16xf32>
    %556 = vector.shape_cast %555 : vector<16xf32> to vector<16x1xf32>
    %cst_55 = arith.constant 3.200000e+01 : f32
    %557 = vector.broadcast %cst_55 : f32 to vector<16x1xf32>
    %558 = arith.divf %556, %557 : vector<16x1xf32>
    %559 = vector.broadcast %558 : vector<16x1xf32> to vector<16x32xf32>
    %560 = arith.subf %554, %559 : vector<16x32xf32>
    %561 = arith.mulf %560, %560 : vector<16x32xf32>
    %cst_56 = arith.constant dense<0.000000e+00> : vector<16xf32>
    %562 = vector.multi_reduction <add>, %561, %cst_56 [1] : vector<16x32xf32> to vector<16xf32>
    %563 = vector.shape_cast %562 : vector<16xf32> to vector<16x1xf32>
    %cst_57 = arith.constant 3.200000e+01 : f32
    %564 = vector.broadcast %cst_57 : f32 to vector<16x1xf32>
    %565 = arith.divf %563, %564 : vector<16x1xf32>
    %cst_58 = arith.constant 9.99999974E-6 : f32
    %566 = vector.broadcast %cst_58 : f32 to vector<16x1xf32>
    %567 = arith.addf %565, %566 : vector<16x1xf32>
    %568 = math.rsqrt %567 : vector<16x1xf32>
    %569 = vector.broadcast %568 : vector<16x1xf32> to vector<16x32xf32>
    %570 = arith.mulf %560, %569 : vector<16x32xf32>
    %c0_59 = arith.constant 0 : index
    %c0_60 = arith.constant 0 : index
    %571 = vector.load %arg5[%c0_59, %c0_60] : memref<1x32xf32, #tpu.memory_space<vmem>>, vector<1x32xf32>
    %572 = vector.broadcast %571 : vector<1x32xf32> to vector<16x32xf32>
    %573 = arith.mulf %570, %572 : vector<16x32xf32>
    %c0_61 = arith.constant 0 : index
    %c0_62 = arith.constant 0 : index
    %574 = vector.load %arg6[%c0_61, %c0_62] : memref<1x32xf32, #tpu.memory_space<vmem>>, vector<1x32xf32>
    %575 = vector.broadcast %574 : vector<1x32xf32> to vector<16x32xf32>
    %576 = arith.addf %573, %575 : vector<16x32xf32>
    %577 = arith.truncf %576 : vector<16x32xf32> to vector<16x32xbf16>
    %c0_63 = arith.constant 0 : index
    %c0_64 = arith.constant 0 : index
    %578 = vector.load %arg7[%c0_63, %c0_64] : memref<32x96xbf16, #tpu.memory_space<vmem>>, vector<32x96xbf16>
    %cst_65 = arith.constant dense<0.000000e+00> : vector<16x96xf32>
    %579 = tpu.matmul %577, %578, %cst_65 {dimension_numbers = #tpu.dot_dimension_numbers<[1], [0], [0], [1], [0, 0, 1, 1], [], []>} : vector<16x32xbf16>, vector<32x96xbf16>, vector<16x96xf32> -> vector<16x96xf32>
    %c0_66 = arith.constant 0 : index
    %c0_67 = arith.constant 0 : index
    %580 = vector.load %arg8[%c0_66, %c0_67] : memref<1x96xf32, #tpu.memory_space<vmem>>, vector<1x96xf32>
    %581 = vector.broadcast %580 : vector<1x96xf32> to vector<16x96xf32>
    %582 = arith.addf %579, %581 : vector<16x96xf32>
    %c0_68 = arith.constant 0 : index
    %c0_69 = arith.constant 0 : index
    %c0_70 = arith.constant 0 : index
    %583 = vector.load %arg9[%c0_68, %c0_69, %c0_70] : memref<1x16x96xf32, #tpu.memory_space<vmem>>, vector<1x16x96xf32>
    %584 = vector.shape_cast %583 : vector<1x16x96xf32> to vector<16x96xf32>
    %585 = vector.shape_cast %582 : vector<16x96xf32> to vector<1x16x96xf32>
    tpu.vector_store %arg9[%c0_68, %c0_69, %c0_70], %585 {strides = array<i32>} : memref<1x16x96xf32, #tpu.memory_space<vmem>>, vector<1x16x96xf32>,
    return
  }
  func.func @transform_0(%arg0: i32, %arg1: i32) -> (i32, i32, i32) {
    %c0_i32 = arith.constant 0 : i32
    %c0_i32_0 = arith.constant 0 : i32
    %c0_i32_1 = arith.constant 0 : i32
    return %arg0, %c0_i32, %c0_i32_0 : i32, i32, i32
  }
  func.func @transform_1(%arg0: i32, %arg1: i32) -> (i32, i32, i32) {
    %c0_i32 = arith.constant 0 : i32
    %c0_i32_0 = arith.constant 0 : i32
    %c0_i32_1 = arith.constant 0 : i32
    %c0_i32_2 = arith.constant 0 : i32
    return %c0_i32, %c0_i32_0, %c0_i32_1 : i32, i32, i32
  }
  func.func @transform_2(%arg0: i32, %arg1: i32) -> (i32, i32) {
    %c0_i32 = arith.constant 0 : i32
    %c0_i32_0 = arith.constant 0 : i32
    %c0_i32_1 = arith.constant 0 : i32
    return %c0_i32, %c0_i32_0 : i32, i32
  }
  func.func @transform_3(%arg0: i32, %arg1: i32) -> (i32, i32) {
    %c0_i32 = arith.constant 0 : i32
    %c0_i32_0 = arith.constant 0 : i32
    %c0_i32_1 = arith.constant 0 : i32
    return %c0_i32, %c0_i32_0 : i32, i32
  }
  func.func @transform_4(%arg0: i32, %arg1: i32) -> (i32, i32) {
    %c0_i32 = arith.constant 0 : i32
    %c0_i32_0 = arith.constant 0 : i32
    %c0_i32_1 = arith.constant 0 : i32
    return %c0_i32, %c0_i32_0 : i32, i32
  }
  func.func @transform_5(%arg0: i32, %arg1: i32) -> (i32, i32) {
    %c0_i32 = arith.constant 0 : i32
    %c0_i32_0 = arith.constant 0 : i32
    %c0_i32_1 = arith.constant 0 : i32
    return %c0_i32, %c0_i32_0 : i32, i32
  }
  func.func @transform_6(%arg0: i32, %arg1: i32) -> (i32, i32) {
    %c0_i32 = arith.constant 0 : i32
    %c0_i32_0 = arith.constant 0 : i32
    %c0_i32_1 = arith.constant 0 : i32
    return %c0_i32, %c0_i32_0 : i32, i32
  }
  func.func @transform_7(%arg0: i32, %arg1: i32) -> (i32, i32, i32) {
    %c0_i32 = arith.constant 0 : i32
    %c0_i32_0 = arith.constant 0 : i32
    return %arg0, %arg1, %c0_i32 : i32, i32, i32
  }
}

</mosaic_0001>

<llo_original>
// kernel: tpu_custom_call.1
$region0: #{tpu_custom_call.1}
  #allocation0 [shape = 'u32[]', space=smem, size = 0x4, offset = 0x4, fixed_abs, tag = 'smem constant byte address 0x4 - core index']
  #allocation1 [shape = 'u32[144,128]{1,0:T(1,128)}', space=vmem, size = 0x12000, scoped, tag = 'internal scratch']
  %s0 = inlined_call_operand.hbm [shape: f32[2,40,32], index: 0, kind: input, shape index: {}]
  %s1 = inlined_call_operand.hbm [shape: bf16[16,50,2], index: 1, kind: input, shape index: {}]
  %s2 = inlined_call_operand.hbm [shape: f32[1,32], index: 2, kind: input, shape index: {}]
  %s3 = inlined_call_operand.hbm [shape: f32[1,32], index: 3, kind: input, shape index: {}]
  %s4 = inlined_call_operand.hbm [shape: f32[1,32], index: 4, kind: input, shape index: {}]
  %s5 = inlined_call_operand.hbm [shape: bf16[32,96], index: 5, kind: input, shape index: {}]
  %s6 = inlined_call_operand.hbm [shape: f32[1,96], index: 6, kind: input, shape index: {}]
  %s7 = inlined_call_operand.hbm [shape: f32[2,16,96], index: 7, kind: output, shape index: {}]
  %s8 = sld [smem:[#allocation0]]
  $region89: #{tpu_custom_call.1} parent=0
    _
  %s10 = ssub.s32 1, %s8
  %s11 = scalar_select 0, %s10, %s8
  $region1: #{tpu_custom_call.1} parent=0
    #allocation2 [shape = 'u8[40960]{0}', space=vmem, size = 0xa000, scoped, tag = 'input window, operand 0']
    #allocation3 [shape = 's32[2]{0}', space=sflag, size = 0x8, scoped, tag = 'scoped memory for tpu_custom_call.1']
    #allocation4 [shape = 's32[2]{0}', space=sflag, size = 0x8, scoped, tag = 'scoped memory for tpu_custom_call.1']
    #allocation5 [shape = 'u8[229376]{0}', space=vmem, size = 0x38000, scoped, tag = 'input window, operand 1, single buffered']
    #allocation6 [shape = 's32[1]{0}', space=sflag, size = 0x4, scoped, tag = 'scoped memory for tpu_custom_call.1']
    #allocation7 [shape = 'u8[512]{0}', space=vmem, size = 0x400, scoped, tag = 'input window, operand 2, single buffered']
    #allocation8 [shape = 'u8[512]{0}', space=vmem, size = 0x400, scoped, tag = 'input window, operand 3, single buffered']
    #allocation9 [shape = 's32[1]{0}', space=sflag, size = 0x4, scoped, tag = 'scoped memory for tpu_custom_call.1']
    #allocation10 [shape = 'u8[512]{0}', space=vmem, size = 0x400, scoped, tag = 'input window, operand 4, single buffered']
    #allocation11 [shape = 'u8[8192]{0}', space=vmem, size = 0x2000, scoped, tag = 'input window, operand 5, single buffered']
    #allocation12 [shape = 's32[1]{0}', space=sflag, size = 0x4, scoped, tag = 'scoped memory for tpu_custom_call.1']
    #allocation13 [shape = 'u8[512]{0}', space=vmem, size = 0x400, scoped, tag = 'input window, operand 6, single buffered']
    #allocation14 [shape = 'u8[16384]{0}', space=vmem, size = 0x4000, scoped, tag = 'output window, operand 0']
    %12 = vsyncpa [#allocation3], 0
    %s13 = scalar_lea.sflag [#allocation3], 1
    %14 = vsyncpa %s13, 0
    %15 = vsyncpa [#allocation6], 0
    %16 = vsyncpa [#allocation9], 0
    %17 = vsyncpa [#allocation12], 0
    %18 = vsyncpa [#allocation4], 0
    %s19 = scalar_lea.sflag [#allocation4], 1
    %20 = vsyncpa %s19, 0
    loop: start=0, step=1, limit=4
    $region2: #{tpu_custom_call.1} parent=1 // loop_pre_header
      _
    $region3: #{tpu_custom_call.1} parent=1 // loop_header
      %s22 = sphi 0, %s26
      %p23 = scmp.ge.s32.totalorder %s22, 4
      %s29 = sphi 0, %s41
      %s30 = sphi 0, %s37
      %s31 = sphi 0, %s29
      %s32 = sphi 0, %s30
      %s33 = sphi 0, %s31
      %s34 = sphi 0, %s32
      %s44 = sphi 0, %s46
      %s47 = sphi 0, %s44
      %s48 = sphi 0, %s47
      %s64 = sphi 0, %s48
      %s68 = sphi 0, %s68
      %s70 = sphi 0, %s68
      %s71 = sphi 0, %s70
      %s85 = sphi 0, %s71
      %s89 = sphi 0, %s89
      %s91 = sphi 0, %s89
      %s92 = sphi 0, %s91
      %s106 = sphi 0, %s92
      %s110 = sphi 0, %s110
      %s112 = sphi 0, %s110
      %s113 = sphi 0, %s112
      %s127 = sphi 0, %s113
      %s131 = sphi 0, %s131
      %s133 = sphi 0, %s131
      %s134 = sphi 0, %s133
      %s148 = sphi 0, %s134
      %s152 = sphi 0, %s152
      %s154 = sphi 0, %s152
      %s155 = sphi 0, %s154
      %s169 = sphi 0, %s155
      %s173 = sphi 0, %s173
      %s175 = sphi 0, %s173
      %s176 = sphi 0, %s175
      %s190 = sphi 0, %s176
      %s198 = sphi 0, %s200
      %s201 = sphi 0, %s198
      %s202 = sphi 0, %s201
      %s218 = sphi 0, %s202
    $region4: #{tpu_custom_call.1} parent=1 // loop_header_branch
      %25 = sbr.rel (%p23) target = $region8
    $region5: #{tpu_custom_call.1} parent=1 // loop_body
      %s27 = ssub.s32 %s22, 1
      %s28 = ssub.s32 %s22, 2
      %s35 = sadd.s32 1, %s30
      %p36 = scmp.ge.s32.totalorder %s35, 1
      %s37 = scalar_select %p36, 0, %s35
      %s38 = sadd.s32 1, %s29
      %s39 = scalar_select %p36, %s38, %s29
      %p40 = scmp.ge.s32.totalorder %s39, 2
      %s41 = scalar_select %p40, 0, %s39
      %s42 = ssub.s32 %s29, %s41
      %p43 = scmp.eq.s32.totalorder %s42, 0
      %s45 = sadd.s32 %s44, 1
      %s46 = scalar_select %p43, %s44, %s45
      %p49 = pneg %p43
      %p50 = scmp.eq.s32.totalorder %s22, 1
      %p51 = por %p49, %p50
      %p52 = scmp.ne.s32.totalorder %s44, %s47
      %p53 = scmp.eq.s32.totalorder %s22, 0
      %p54 = por %p52, %p53
      %p55 = scmp.ne.s32.totalorder %s44, %s47
      %p56 = scmp.eq.s32.totalorder %s27, 1
      %p57 = por %p55, %p56
      %p58 = scmp.ne.s32.totalorder %s47, %s48
      %p59 = scmp.eq.s32.totalorder %s27, 0
      %p60 = por %p58, %p59
      %p61 = scmp.ne.s32.totalorder %s47, %s48
      %p62 = scmp.eq.s32.totalorder %s28, 1
      %p63 = por %p61, %p62
      %p65 = scmp.ne.s32.totalorder %s48, %s64
      %p66 = scmp.eq.s32.totalorder %s28, 0
      %p67 = por %p65, %p66
      %s69 = sadd.s32 %s68, 1
      %p72 = scmp.eq.s32.totalorder %s22, 1
      %p73 = scmp.ne.s32.totalorder %s68, %s70
      %p74 = scmp.eq.s32.totalorder %s22, 0
      %p75 = por %p73, %p74
      %p76 = scmp.ne.s32.totalorder %s68, %s70
      %p77 = scmp.eq.s32.totalorder %s27, 1
      %p78 = por %p76, %p77
      %p79 = scmp.ne.s32.totalorder %s70, %s71
      %p80 = scmp.eq.s32.totalorder %s27, 0
      %p81 = por %p79, %p80
      %p82 = scmp.ne.s32.totalorder %s70, %s71
      %p83 = scmp.eq.s32.totalorder %s28, 1
      %p84 = por %p82, %p83
      %p86 = scmp.ne.s32.totalorder %s71, %s85
      %p87 = scmp.eq.s32.totalorder %s28, 0
      %p88 = por %p86, %p87
      %s90 = sadd.s32 %s89, 1
      %p93 = scmp.eq.s32.totalorder %s22, 1
      %p94 = scmp.ne.s32.totalorder %s89, %s91
      %p95 = scmp.eq.s32.totalorder %s22, 0
      %p96 = por %p94, %p95
      %p97 = scmp.ne.s32.totalorder %s89, %s91
      %p98 = scmp.eq.s32.totalorder %s27, 1
      %p99 = por %p97, %p98
      %p100 = scmp.ne.s32.totalorder %s91, %s92
      %p101 = scmp.eq.s32.totalorder %s27, 0
      %p102 = por %p100, %p101
      %p103 = scmp.ne.s32.totalorder %s91, %s92
      %p104 = scmp.eq.s32.totalorder %s28, 1
      %p105 = por %p103, %p104
      %p107 = scmp.ne.s32.totalorder %s92, %s106
      %p108 = scmp.eq.s32.totalorder %s28, 0
      %p109 = por %p107, %p108
      %s111 = sadd.s32 %s110, 1
      %p114 = scmp.eq.s32.totalorder %s22, 1
      %p115 = scmp.ne.s32.totalorder %s110, %s112
      %p116 = scmp.eq.s32.totalorder %s22, 0
      %p117 = por %p115, %p116
      %p118 = scmp.ne.s32.totalorder %s110, %s112
      %p119 = scmp.eq.s32.totalorder %s27, 1
      %p120 = por %p118, %p119
      %p121 = scmp.ne.s32.totalorder %s112, %s113
      %p122 = scmp.eq.s32.totalorder %s27, 0
      %p123 = por %p121, %p122
      %p124 = scmp.ne.s32.totalorder %s112, %s113
      %p125 = scmp.eq.s32.totalorder %s28, 1
      %p126 = por %p124, %p125
      %p128 = scmp.ne.s32.totalorder %s113, %s127
      %p129 = scmp.eq.s32.totalorder %s28, 0
      %p130 = por %p128, %p129
      %s132 = sadd.s32 %s131, 1
      %p135 = scmp.eq.s32.totalorder %s22, 1
      %p136 = scmp.ne.s32.totalorder %s131, %s133
      %p137 = scmp.eq.s32.totalorder %s22, 0
      %p138 = por %p136, %p137
      %p139 = scmp.ne.s32.totalorder %s131, %s133
      %p140 = scmp.eq.s32.totalorder %s27, 1
      %p141 = por %p139, %p140
      %p142 = scmp.ne.s32.totalorder %s133, %s134
      %p143 = scmp.eq.s32.totalorder %s27, 0
      %p144 = por %p142, %p143
      %p145 = scmp.ne.s32.totalorder %s133, %s134
      %p146 = scmp.eq.s32.totalorder %s28, 1
      %p147 = por %p145, %p146
      %p149 = scmp.ne.s32.totalorder %s134, %s148
      %p150 = scmp.eq.s32.totalorder %s28, 0
      %p151 = por %p149, %p150
      %s153 = sadd.s32 %s152, 1
      %p156 = scmp.eq.s32.totalorder %s22, 1
      %p157 = scmp.ne.s32.totalorder %s152, %s154
      %p158 = scmp.eq.s32.totalorder %s22, 0
      %p159 = por %p157, %p158
      %p160 = scmp.ne.s32.totalorder %s152, %s154
      %p161 = scmp.eq.s32.totalorder %s27, 1
      %p162 = por %p160, %p161
      %p163 = scmp.ne.s32.totalorder %s154, %s155
      %p164 = scmp.eq.s32.totalorder %s27, 0
      %p165 = por %p163, %p164
      %p166 = scmp.ne.s32.totalorder %s154, %s155
      %p167 = scmp.eq.s32.totalorder %s28, 1
      %p168 = por %p166, %p167
      %p170 = scmp.ne.s32.totalorder %s155, %s169
      %p171 = scmp.eq.s32.totalorder %s28, 0
      %p172 = por %p170, %p171
      %s174 = sadd.s32 %s173, 1
      %p177 = scmp.eq.s32.totalorder %s22, 1
      %p178 = scmp.ne.s32.totalorder %s173, %s175
      %p179 = scmp.eq.s32.totalorder %s22, 0
      %p180 = por %p178, %p179
      %p181 = scmp.ne.s32.totalorder %s173, %s175
      %p182 = scmp.eq.s32.totalorder %s27, 1
      %p183 = por %p181, %p182
      %p184 = scmp.ne.s32.totalorder %s175, %s176
      %p185 = scmp.eq.s32.totalorder %s27, 0
      %p186 = por %p184, %p185
      %p187 = scmp.ne.s32.totalorder %s175, %s176
      %p188 = scmp.eq.s32.totalorder %s28, 1
      %p189 = por %p187, %p188
      %p191 = scmp.ne.s32.totalorder %s176, %s190
      %p192 = scmp.eq.s32.totalorder %s28, 0
      %p193 = por %p191, %p192
      %s194 = ssub.s32 %s29, %s41
      %s195 = ssub.s32 %s30, %s37
      %s196 = sor.u32 %s194, %s195
      %p197 = scmp.eq.s32.totalorder %s196, 0
      %s199 = sadd.s32 %s198, 1
      %s200 = scalar_select %p197, %s198, %s199
      %p203 = pneg %p197
      %p204 = scmp.eq.s32.totalorder %s22, 1
      %p205 = por %p203, %p204
      %p206 = scmp.ne.s32.totalorder %s198, %s201
      %p207 = scmp.eq.s32.totalorder %s22, 0
      %p208 = por %p206, %p207
      %p209 = scmp.ne.s32.totalorder %s198, %s201
      %p210 = scmp.eq.s32.totalorder %s27, 1
      %p211 = por %p209, %p210
      %p212 = scmp.ne.s32.totalorder %s201, %s202
      %p213 = scmp.eq.s32.totalorder %s27, 0
      %p214 = por %p212, %p213
      %p215 = scmp.ne.s32.totalorder %s201, %s202
      %p216 = scmp.eq.s32.totalorder %s28, 1
      %p217 = por %p215, %p216
      %p219 = scmp.ne.s32.totalorder %s202, %s218
      %p220 = scmp.eq.s32.totalorder %s28, 0
      %p221 = por %p219, %p220
      %p222 = scmp.le.s32.totalorder 1, %s22
      %p223 = scmp.lt.s32.totalorder %s22, 3
      %p224 = pnand %p222, %p223
      %p225 = pneg %p224
      // Predicated region
      $region9: #{tpu_custom_call.1} parent=5 // pred_check
        _
      $region10: #{tpu_custom_call.1} parent=5 // pred_check_branch
        %227 = sbr.rel (%p224) target = $region12
      $region11: #{tpu_custom_call.1} parent=5 // pred_region
        %s228 = ssub.s32 %s22, 1
        // Predicated region
        $region13: #{tpu_custom_call.1} parent=11 // pred_check
          %p229 = pneg %p81
        $region14: #{tpu_custom_call.1} parent=11 // pred_check_branch
          %231 = sbr.rel (%p229) target = $region16
        $region15: #{tpu_custom_call.1} parent=11 // pred_region
          %s233 = ssub.s32 7168, 7168
          %234 = vsyncadd [#allocation6], %s233
          %s235 = sshll.u32 [#allocation5], 4
          %s236 = int_to_ptr.vmem [resolvable:$true] %s235
          %241 = dma.hbm_to_vmem [thread:$0]  %s1, 7168, %s236, [#allocation6], 64, 64, 4
        $region16: #{tpu_custom_call.1} parent=11 // pred_fallthru
          _
        // Predicated region
        $region17: #{tpu_custom_call.1} parent=11 // pred_check
          %p242 = pneg %p102
        $region18: #{tpu_custom_call.1} parent=11 // pred_check_branch
          %244 = sbr.rel (%p242) target = $region20
        $region19: #{tpu_custom_call.1} parent=11 // pred_region
          %s246 = ssub.s32 16, 16
          %247 = vsyncadd [#allocation6], %s246
          %s249 = sshll.u32 [#allocation7], 4
          %s250 = int_to_ptr.vmem [resolvable:$true] %s249
          %252 = dma.hbm_to_vmem [thread:$0]  %s2, 16, %s250, [#allocation6]
        $region20: #{tpu_custom_call.1} parent=11 // pred_fallthru
          _
        // Predicated region
        $region21: #{tpu_custom_call.1} parent=11 // pred_check
          %p253 = pneg %p123
        $region22: #{tpu_custom_call.1} parent=11 // pred_check_branch
          %255 = sbr.rel (%p253) target = $region24
        $region23: #{tpu_custom_call.1} parent=11 // pred_region
          %s257 = ssub.s32 16, 16
          %258 = vsyncadd [#allocation9], %s257
          %s260 = sshll.u32 [#allocation8], 4
          %s261 = int_to_ptr.vmem [resolvable:$true] %s260
          %263 = dma.hbm_to_vmem [thread:$0]  %s3, 16, %s261, [#allocation9]
        $region24: #{tpu_custom_call.1} parent=11 // pred_fallthru
          _
        // Predicated region
        $region25: #{tpu_custom_call.1} parent=11 // pred_check
          %p264 = pneg %p144
        $region26: #{tpu_custom_call.1} parent=11 // pred_check_branch
          %266 = sbr.rel (%p264) target = $region28
        $region27: #{tpu_custom_call.1} parent=11 // pred_region
          %s268 = ssub.s32 16, 16
          %269 = vsyncadd [#allocation9], %s268
          %s271 = sshll.u32 [#allocation10], 4
          %s272 = int_to_ptr.vmem [resolvable:$true] %s271
          %274 = dma.hbm_to_vmem [thread:$0]  %s4, 16, %s272, [#allocation9]
        $region28: #{tpu_custom_call.1} parent=11 // pred_fallthru
          _
        // Predicated region
        $region29: #{tpu_custom_call.1} parent=11 // pred_check
          %p275 = pneg %p165
        $region30: #{tpu_custom_call.1} parent=11 // pred_check_branch
          %277 = sbr.rel (%p275) target = $region32
        $region31: #{tpu_custom_call.1} parent=11 // pred_region
          %s279 = ssub.s32 256, 256
          %280 = vsyncadd [#allocation12], %s279
          %s281 = sshll.u32 [#allocation11], 4
          %s282 = int_to_ptr.vmem [resolvable:$true] %s281
          %287 = dma.hbm_to_vmem [thread:$0]  %s5, 256, %s282, [#allocation12], 64, 64, 4
        $region32: #{tpu_custom_call.1} parent=11 // pred_fallthru
          _
        // Predicated region
        $region33: #{tpu_custom_call.1} parent=11 // pred_check
          %p288 = pneg %p186
        $region34: #{tpu_custom_call.1} parent=11 // pred_check_branch
          %290 = sbr.rel (%p288) target = $region36
        $region35: #{tpu_custom_call.1} parent=11 // pred_region
          %s292 = ssub.s32 16, 16
          %293 = vsyncadd [#allocation12], %s292
          %s295 = sshll.u32 [#allocation13], 4
          %s296 = int_to_ptr.vmem [resolvable:$true] %s295
          %298 = dma.hbm_to_vmem [thread:$0]  %s6, 16, %s296, [#allocation12]
        $region36: #{tpu_custom_call.1} parent=11 // pred_fallthru
          _
      $region12: #{tpu_custom_call.1} parent=5 // pred_fallthru
        _
      %p299 = scmp.lt.s32.totalorder %s22, 2
      // Predicated region
      $region37: #{tpu_custom_call.1} parent=5 // pred_check
        %p300 = pneg %p299
      $region38: #{tpu_custom_call.1} parent=5 // pred_check_branch
        %302 = sbr.rel (%p300) target = $region40
      $region39: #{tpu_custom_call.1} parent=5 // pred_region
        // Predicated region
        $region41: #{tpu_custom_call.1} parent=39 // pred_check
          %p303 = pneg %p54
        $region42: #{tpu_custom_call.1} parent=39 // pred_check_branch
          %305 = sbr.rel (%p303) target = $region44
        $region43: #{tpu_custom_call.1} parent=39 // pred_region
          %s306 = sand.u32 %s44, 1
          %s307 = scalar_lea.sflag [#allocation3], %s306
          %s308 = sand.u32 %s44, 1
          %s309 = smul.addr %s308, 40
          %s310 = scalar_lea.vmem [#allocation2], %s309
          %s312 = ssub.s32 640, 640
          %313 = vsyncadd %s307, %s312
          %s314 = smul.addr %s29, 5
          %s315 = smul.addr %s314, 128
          %s316 = scalar_lea.hbm %s0, %s315
          %s317 = sshll.u32 %s310, 4
          %s318 = int_to_ptr.vmem [resolvable:$true] %s317
          %323 = dma.hbm_to_vmem [thread:$0]  %s316, 640, %s318, %s307, 128, 128, 8
        $region44: #{tpu_custom_call.1} parent=39 // pred_fallthru
          _
      $region40: #{tpu_custom_call.1} parent=5 // pred_fallthru
        _
      %p324 = scmp.le.s32.totalorder 1, %s22
      %p325 = scmp.lt.s32.totalorder %s22, 3
      %p326 = pnand %p324, %p325
      %p327 = pneg %p326
      // Predicated region
      $region45: #{tpu_custom_call.1} parent=5 // pred_check
        _
      $region46: #{tpu_custom_call.1} parent=5 // pred_check_branch
        %329 = sbr.rel (%p326) target = $region48
      $region47: #{tpu_custom_call.1} parent=5 // pred_region
        %s330 = ssub.s32 %s22, 1
        %s331 = sand.u32 %s47, 1
        %s332 = scalar_lea.sflag [#allocation3], %s331
        %s333 = sand.u32 %s47, 1
        %s334 = smul.addr %s333, 40
        %s335 = scalar_lea.vmem [#allocation2], %s334
        // Predicated region
        $region49: #{tpu_custom_call.1} parent=47 // pred_check
          %p336 = pneg %p60
        $region50: #{tpu_custom_call.1} parent=47 // pred_check_branch
          %338 = sbr.rel (%p336) target = $region52
        $region51: #{tpu_custom_call.1} parent=47 // pred_region
          %339 = dma.done %s332, 640
        $region52: #{tpu_custom_call.1} parent=47 // pred_fallthru
          _
        // Predicated region
        $region53: #{tpu_custom_call.1} parent=47 // pred_check
          %p340 = pneg %p81
        $region54: #{tpu_custom_call.1} parent=47 // pred_check_branch
          %342 = sbr.rel (%p340) target = $region56
        $region55: #{tpu_custom_call.1} parent=47 // pred_region
          %343 = dma.done [#allocation6], 7168
        $region56: #{tpu_custom_call.1} parent=47 // pred_fallthru
          _
        // Predicated region
        $region57: #{tpu_custom_call.1} parent=47 // pred_check
          %p344 = pneg %p102
        $region58: #{tpu_custom_call.1} parent=47 // pred_check_branch
          %346 = sbr.rel (%p344) target = $region60
        $region59: #{tpu_custom_call.1} parent=47 // pred_region
          %347 = dma.done [#allocation6], 16
        $region60: #{tpu_custom_call.1} parent=47 // pred_fallthru
          _
        // Predicated region
        $region61: #{tpu_custom_call.1} parent=47 // pred_check
          %p348 = pneg %p123
        $region62: #{tpu_custom_call.1} parent=47 // pred_check_branch
          %350 = sbr.rel (%p348) target = $region64
        $region63: #{tpu_custom_call.1} parent=47 // pred_region
          %351 = dma.done [#allocation9], 16
        $region64: #{tpu_custom_call.1} parent=47 // pred_fallthru
          _
        // Predicated region
        $region65: #{tpu_custom_call.1} parent=47 // pred_check
          %p352 = pneg %p144
        $region66: #{tpu_custom_call.1} parent=47 // pred_check_branch
          %354 = sbr.rel (%p352) target = $region68
        $region67: #{tpu_custom_call.1} parent=47 // pred_region
          %355 = dma.done [#allocation9], 16
        $region68: #{tpu_custom_call.1} parent=47 // pred_fallthru
          _
        // Predicated region
        $region69: #{tpu_custom_call.1} parent=47 // pred_check
          %p356 = pneg %p165
        $region70: #{tpu_custom_call.1} parent=47 // pred_check_branch
          %358 = sbr.rel (%p356) target = $region72
        $region71: #{tpu_custom_call.1} parent=47 // pred_region
          %359 = dma.done [#allocation12], 256
        $region72: #{tpu_custom_call.1} parent=47 // pred_fallthru
          _
        // Predicated region
        $region73: #{tpu_custom_call.1} parent=47 // pred_check
          %p360 = pneg %p186
        $region74: #{tpu_custom_call.1} parent=47 // pred_check_branch
          %362 = sbr.rel (%p360) target = $region76
        $region75: #{tpu_custom_call.1} parent=47 // pred_region
          %363 = dma.done [#allocation12], 16
        $region76: #{tpu_custom_call.1} parent=47 // pred_fallthru
          _
        %s364 = sand.u32 %s47, 1
        %s365 = scalar_lea.sflag [#allocation3], %s364
        %s366 = sand.u32 %s47, 1
        %s367 = smul.addr %s366, 40
        %s368 = scalar_lea.vmem [#allocation2], %s367
        %p369 = pneg %p60
        %p370 = pneg %p57
        %p371 = pneg %p81
        %p372 = pneg %p78
        %p373 = pneg %p102
        %p374 = pneg %p99
        %p375 = pneg %p123
        %p376 = pneg %p120
        %p377 = pneg %p144
        %p378 = pneg %p141
        %p379 = pneg %p165
        %p380 = pneg %p162
        %p381 = pneg %p186
        %p382 = pneg %p183
        %p383 = pneg %p214
        %p384 = pneg %p211
        %s385 = sand.u32 %s201, 1
        %s386 = scalar_lea.sflag [#allocation4], %s385
        %s387 = sand.u32 %s201, 1
        %s388 = smul.addr %s387, 16
        %s389 = scalar_lea.vmem [#allocation14], %s388
        %s390 = smul.u32 2, %s32
        %s392 = smul.u32 %s32, 16
        %s393 = scalar_lea.vmem %s335, %s392 [#allocation2]
        %v394 = vld [vmem:[%s393] sm:$0xff]
        %v395 = vld [vmem:[%s393 + $0x8] sm:$0xff]
        %v396 = vld [vmem:[%s393 + $0x10] sm:$0xff]
        %v397 = vld [vmem:[%s393 + $0x18] sm:$0xff]
        %v398 = vld [vmem:[%s393 + $0x20] sm:$0xff]
        %vm402 = vcmask 1046528
        %v403 = vrot.slane %v394, 1
        %v404 = vrot.slane %v395, 1
        %v405 = vsel %vm402, %v403, %v404
        %v406 = vrot.slane %v396, 1
        %v407 = vsel %vm402, %v404, %v406
        %408 = vrot.lane.b32.xlu0 %v405, 2
        %v409 = vpop.permute.xlu0 %408
        %410 = vrot.lane.b32.xlu0 %v407, 2
        %v411 = vpop.permute.xlu0 %410
        %vm414 = vcmask 1045504
        %v415 = vrot.slane %v394, 2
        %v416 = vrot.slane %v395, 2
        %v417 = vsel %vm414, %v415, %v416
        %v418 = vrot.slane %v396, 2
        %v419 = vsel %vm414, %v416, %v418
        %420 = vrot.lane.b32.xlu0 %v417, 4
        %v421 = vpop.permute.xlu0 %420
        %422 = vrot.lane.b32.xlu0 %v419, 4
        %v423 = vpop.permute.xlu0 %422
        %vm426 = vcmask 1044480
        %v427 = vrot.slane %v394, 3
        %v428 = vrot.slane %v395, 3
        %v429 = vsel %vm426, %v427, %v428
        %v430 = vrot.slane %v396, 3
        %v431 = vsel %vm426, %v428, %v430
        %432 = vrot.lane.b32.xlu0 %v429, 6
        %v433 = vpop.permute.xlu0 %432
        %434 = vrot.lane.b32.xlu0 %v431, 6
        %v435 = vpop.permute.xlu0 %434
        %vm438 = vcmask 1043456
        %v439 = vrot.slane %v394, 4
        %v440 = vrot.slane %v395, 4
        %v441 = vsel %vm438, %v439, %v440
        %v442 = vrot.slane %v396, 4
        %v443 = vsel %vm438, %v440, %v442
        %444 = vrot.lane.b32.xlu0 %v441, 8
        %v445 = vpop.permute.xlu0 %444
        %446 = vrot.lane.b32.xlu0 %v443, 8
        %v447 = vpop.permute.xlu0 %446
        %vm450 = vcmask 1042432
        %v451 = vrot.slane %v394, 5
        %v452 = vrot.slane %v395, 5
        %v453 = vsel %vm450, %v451, %v452
        %v454 = vrot.slane %v396, 5
        %v455 = vsel %vm450, %v452, %v454
        %456 = vrot.lane.b32.xlu0 %v453, 10
        %v457 = vpop.permute.xlu0 %456
        %458 = vrot.lane.b32.xlu0 %v455, 10
        %v459 = vpop.permute.xlu0 %458
        %vm462 = vcmask 1041408
        %v463 = vrot.slane %v394, 6
        %v464 = vrot.slane %v395, 6
        %v465 = vsel %vm462, %v463, %v464
        %v466 = vrot.slane %v396, 6
        %v467 = vsel %vm462, %v464, %v466
        %468 = vrot.lane.b32.xlu0 %v465, 12
        %v469 = vpop.permute.xlu0 %468
        %470 = vrot.lane.b32.xlu0 %v467, 12
        %v471 = vpop.permute.xlu0 %470
        %vm474 = vcmask 1040384
        %v475 = vrot.slane %v394, 7
        %v476 = vrot.slane %v395, 7
        %v477 = vsel %vm474, %v475, %v476
        %v478 = vrot.slane %v396, 7
        %v479 = vsel %vm474, %v476, %v478
        %480 = vrot.lane.b32.xlu0 %v477, 14
        %v481 = vpop.permute.xlu0 %480
        %482 = vrot.lane.b32.xlu0 %v479, 14
        %v483 = vpop.permute.xlu0 %482
        %486 = vrot.lane.b32.xlu0 %v395, 16
        %v487 = vpop.permute.xlu0 %486
        %488 = vrot.lane.b32.xlu0 %v396, 16
        %v489 = vpop.permute.xlu0 %488
        %v493 = vrot.slane %v397, 1
        %v494 = vsel %vm402, %v406, %v493
        %495 = vrot.lane.b32.xlu0 %v407, 18
        %v496 = vpop.permute.xlu0 %495
        %497 = vrot.lane.b32.xlu0 %v494, 18
        %v498 = vpop.permute.xlu0 %497
        %v501 = vrot.slane %v397, 2
        %v502 = vsel %vm414, %v418, %v501
        %503 = vrot.lane.b32.xlu0 %v419, 20
        %v504 = vpop.permute.xlu0 %503
        %505 = vrot.lane.b32.xlu0 %v502, 20
        %v506 = vpop.permute.xlu0 %505
        %v509 = vrot.slane %v397, 3
        %v510 = vsel %vm426, %v430, %v509
        %511 = vrot.lane.b32.xlu0 %v431, 22
        %v512 = vpop.permute.xlu0 %511
        %513 = vrot.lane.b32.xlu0 %v510, 22
        %v514 = vpop.permute.xlu0 %513
        %v517 = vrot.slane %v397, 4
        %v518 = vsel %vm438, %v442, %v517
        %519 = vrot.lane.b32.xlu0 %v443, 24
        %v520 = vpop.permute.xlu0 %519
        %521 = vrot.lane.b32.xlu0 %v518, 24
        %v522 = vpop.permute.xlu0 %521
        %v525 = vrot.slane %v397, 5
        %v526 = vsel %vm450, %v454, %v525
        %527 = vrot.lane.b32.xlu0 %v455, 26
        %v528 = vpop.permute.xlu0 %527
        %529 = vrot.lane.b32.xlu0 %v526, 26
        %v530 = vpop.permute.xlu0 %529
        %v533 = vrot.slane %v397, 6
        %v534 = vsel %vm462, %v466, %v533
        %535 = vrot.lane.b32.xlu0 %v467, 28
        %v536 = vpop.permute.xlu0 %535
        %537 = vrot.lane.b32.xlu0 %v534, 28
        %v538 = vpop.permute.xlu0 %537
        %v541 = vrot.slane %v397, 7
        %v542 = vsel %vm474, %v478, %v541
        %543 = vrot.lane.b32.xlu0 %v479, 30
        %v544 = vpop.permute.xlu0 %543
        %545 = vrot.lane.b32.xlu0 %v542, 30
        %v546 = vpop.permute.xlu0 %545
        %vm549 = vcmask 15360
        %v550 = vsel %vm549, %v394, %v409
        %v551 = vsel %vm549, %v395, %v411
        %vm552 = vcmask 31744
        %v553 = vsel %vm552, %v550, %v421
        %v554 = vsel %vm552, %v551, %v423
        %vm555 = vcmask 48128
        %v556 = vsel %vm555, %v553, %v433
        %v557 = vsel %vm555, %v554, %v435
        %vm558 = vcmask 64512
        %v559 = vsel %vm558, %v556, %v445
        %v560 = vsel %vm558, %v557, %v447
        %vm561 = vcmask 80896
        %v562 = vsel %vm561, %v559, %v457
        %v563 = vsel %vm561, %v560, %v459
        %vm564 = vcmask 97280
        %v565 = vsel %vm564, %v562, %v469
        %v566 = vsel %vm564, %v563, %v471
        %vm567 = vcmask 113664
        %v568 = vsel %vm567, %v565, %v481
        %v569 = vsel %vm567, %v566, %v483
        %vm570 = vcmask 130048
        %v571 = vsel %vm570, %v568, %v487
        %v572 = vsel %vm570, %v569, %v489
        %vm573 = vcmask 146432
        %v574 = vsel %vm573, %v571, %v496
        %v575 = vsel %vm573, %v572, %v498
        %vm576 = vcmask 162816
        %v577 = vsel %vm576, %v574, %v504
        %v578 = vsel %vm576, %v575, %v506
        %vm579 = vcmask 179200
        %v580 = vsel %vm579, %v577, %v512
        %v581 = vsel %vm579, %v578, %v514
        %vm582 = vcmask 195584
        %v583 = vsel %vm582, %v580, %v520
        %v584 = vsel %vm582, %v581, %v522
        %vm585 = vcmask 211968
        %v586 = vsel %vm585, %v583, %v528
        %v587 = vsel %vm585, %v584, %v530
        %vm588 = vcmask 228352
        %v589 = vsel %vm588, %v586, %v536
        %v590 = vsel %vm588, %v587, %v538
        %vm591 = vcmask 244736
        %v592 = vsel %vm591, %v589, %v544
        %v593 = vsel %vm591, %v590, %v546
        %v595 = vrot.slane %v398, 1
        %v596 = vsel %vm402, %v493, %v595
        %597 = vrot.lane.b32.xlu0 %v494, 2
        %v598 = vpop.permute.xlu0 %597
        %599 = vrot.lane.b32.xlu0 %v596, 2
        %v600 = vpop.permute.xlu0 %599
        %v603 = vrot.slane %v398, 2
        %v604 = vsel %vm414, %v501, %v603
        %605 = vrot.lane.b32.xlu0 %v502, 4
        %v606 = vpop.permute.xlu0 %605
        %607 = vrot.lane.b32.xlu0 %v604, 4
        %v608 = vpop.permute.xlu0 %607
        %v611 = vrot.slane %v398, 3
        %v612 = vsel %vm426, %v509, %v611
        %613 = vrot.lane.b32.xlu0 %v510, 6
        %v614 = vpop.permute.xlu0 %613
        %615 = vrot.lane.b32.xlu0 %v612, 6
        %v616 = vpop.permute.xlu0 %615
        %v619 = vrot.slane %v398, 4
        %v620 = vsel %vm438, %v517, %v619
        %621 = vrot.lane.b32.xlu0 %v518, 8
        %v622 = vpop.permute.xlu0 %621
        %623 = vrot.lane.b32.xlu0 %v620, 8
        %v624 = vpop.permute.xlu0 %623
        %v627 = vrot.slane %v398, 5
        %v628 = vsel %vm450, %v525, %v627
        %629 = vrot.lane.b32.xlu0 %v526, 10
        %v630 = vpop.permute.xlu0 %629
        %631 = vrot.lane.b32.xlu0 %v628, 10
        %v632 = vpop.permute.xlu0 %631
        %v635 = vrot.slane %v398, 6
        %v636 = vsel %vm462, %v533, %v635
        %637 = vrot.lane.b32.xlu0 %v534, 12
        %v638 = vpop.permute.xlu0 %637
        %639 = vrot.lane.b32.xlu0 %v636, 12
        %v640 = vpop.permute.xlu0 %639
        %v643 = vrot.slane %v398, 7
        %v644 = vsel %vm474, %v541, %v643
        %645 = vrot.lane.b32.xlu0 %v542, 14
        %v646 = vpop.permute.xlu0 %645
        %647 = vrot.lane.b32.xlu0 %v644, 14
        %v648 = vpop.permute.xlu0 %647
        %651 = vrot.lane.b32.xlu0 %v397, 16
        %v652 = vpop.permute.xlu0 %651
        %653 = vrot.lane.b32.xlu0 %v398, 16
        %v654 = vpop.permute.xlu0 %653
        %v657 = vsel %vm549, %v396, %v598
        %v658 = vsel %vm549, %v397, %v600
        %v659 = vsel %vm552, %v657, %v606
        %v660 = vsel %vm552, %v658, %v608
        %v661 = vsel %vm555, %v659, %v614
        %v662 = vsel %vm555, %v660, %v616
        %v663 = vsel %vm558, %v661, %v622
        %v664 = vsel %vm558, %v662, %v624
        %v665 = vsel %vm561, %v663, %v630
        %v666 = vsel %vm561, %v664, %v632
        %v667 = vsel %vm564, %v665, %v638
        %v668 = vsel %vm564, %v666, %v640
        %v669 = vsel %vm567, %v667, %v646
        %v670 = vsel %vm567, %v668, %v648
        %v671 = vsel %vm570, %v669, %v652
        %v672 = vsel %vm570, %v670, %v654
        %675 = vrot.lane.b32.xlu0 %v671, 32
        %v676 = vpop.permute.xlu0 %675
        %677 = vrot.lane.b32.xlu0 %v672, 32
        %v678 = vpop.permute.xlu0 %677
        %vm681 = vcmask 261120
        %v682 = vsel %vm681, %v592, %v676
        %v683 = vsel %vm681, %v593, %v678
        %v684 = vpack.c.bf16 %v683, %v682
        %v685 = vld [vmem:[#allocation5] sm:$0xf]
        %v686 = vld [vmem:[#allocation5 + $0x4] sm:$0xf]
        %v687 = vld [vmem:[#allocation5 + $0x8] sm:$0xf]
        %v688 = vld [vmem:[#allocation5 + $0xc] sm:$0xf]
        %v689 = vld [vmem:[#allocation5 + $0x10] sm:$0xf]
        %v690 = vld [vmem:[#allocation5 + $0x14] sm:$0xf]
        %v691 = vld [vmem:[#allocation5 + $0x18] sm:$0x1]
        %v699 = vunpack.c.l.b16 %v685
        %v700 = vunpack.c.l.b16 %v686
        %v701 = vunpack.c.l.b16 %v687
        %v702 = vunpack.c.l.b16 %v688
        %v703 = vunpack.c.l.b16 %v689
        %v704 = vunpack.c.l.b16 %v690
        %v705 = vunpack.c.l.b16 %v691
        %v706 = vpack.c.b16 %v700, %v699
        %v707 = vpack.c.b16 %v702, %v701
        %v708 = vpack.c.b16 %v704, %v703
        %v709 = vpack.c.b16 %v705, %v705
        %vm713 = vcmask 408576
        %v715 = vsel %vm713, %v684, 0
        %v718 = vsel %vm474, %v709, 0
        %720 = vmatprep.subr.bf16.mxu0 0
        %721 = vmatpush1.bf16.msra.mxu0 %v706
        %722 = vmatprep.subr.bf16.mxu0 0
        %723 = vmatpush1.bf16.msra.mxu0 %v707
        %724 = vmatprep.subr.bf16.mxu0 0
        %725 = vmatpush1.bf16.msra.mxu0 %v708
        %726 = vmatprep.subr.bf16.mxu0 0
        %727 = vmatpush1.bf16.msra.mxu0 %v718
        %728 = vmatprep.subr.bf16.mxu0 0
        %729 = vmatpush1.bf16.msra.mxu0 0
        %730 = vmatprep.subr.bf16.mxu0 0
        %731 = vmatpush1.bf16.msra.mxu0 0
        %732 = vmatprep.subr.bf16.mxu0 0
        %733 = vmatpush1.bf16.msra.mxu0 0
        %734 = vmatprep.subr.bf16.mxu0 0
        %735 = vmatpush1.bf16.msra.mxu0 0
        %736 = vmatprep.subr.bf16.mxu0 0
        %737 = vmatpush1.bf16.msra.mxu0 0
        %738 = vmatprep.subr.bf16.mxu0 0
        %739 = vmatpush1.bf16.msra.mxu0 0
        %740 = vmatprep.subr.bf16.mxu0 0
        %741 = vmatpush1.bf16.msra.mxu0 0
        %742 = vmatprep.subr.bf16.mxu0 0
        %743 = vmatpush1.bf16.msra.mxu0 0
        %744 = vmatprep.subr.bf16.mxu0 0
        %745 = vmatpush1.bf16.msra.mxu0 0
        %746 = vmatprep.subr.bf16.mxu0 0
        %747 = vmatpush1.bf16.msra.mxu0 0
        %748 = vmatprep.subr.bf16.mxu0 0
        %749 = vmatpush1.bf16.msra.mxu0 0
        %750 = vmatprep.subr.bf16.mxu0 0
        %751 = vmatpush1.bf16.msra.mxu0 0
        %752 = vmatprep.mubr.bf16.mxu0 0
        %753 = vmatmul.mubr.bf16.gmra.mrb[0].mxu0 %v715
        %v754 = vpop.f32.mrb[0].mxu0
        %v755 = vadd.f32 0.0, %v754
        %v756 = vpop.f32.mrb[0].mxu0
        %v757 = vpop.f32.mrb[0].mxu0
        %v758 = vadd.f32 0.0, %v757
        %v759 = vpop.f32.mrb[0].mxu0
        %760 = vdwg.mxu0
        %761 = vrot.lane.b32.xlu0 %v394, 126
        %v762 = vpop.permute.xlu0 %761
        %763 = vrot.lane.b32.xlu0 %v395, 126
        %v764 = vpop.permute.xlu0 %763
        %769 = vrot.lane.b32.xlu0 %v417, 2
        %v770 = vpop.permute.xlu0 %769
        %771 = vrot.lane.b32.xlu0 %v419, 2
        %v772 = vpop.permute.xlu0 %771
        %775 = vrot.lane.b32.xlu0 %v429, 4
        %v776 = vpop.permute.xlu0 %775
        %777 = vrot.lane.b32.xlu0 %v431, 4
        %v778 = vpop.permute.xlu0 %777
        %781 = vrot.lane.b32.xlu0 %v441, 6
        %v782 = vpop.permute.xlu0 %781
        %783 = vrot.lane.b32.xlu0 %v443, 6
        %v784 = vpop.permute.xlu0 %783
        %787 = vrot.lane.b32.xlu0 %v453, 8
        %v788 = vpop.permute.xlu0 %787
        %789 = vrot.lane.b32.xlu0 %v455, 8
        %v790 = vpop.permute.xlu0 %789
        %793 = vrot.lane.b32.xlu0 %v465, 10
        %v794 = vpop.permute.xlu0 %793
        %795 = vrot.lane.b32.xlu0 %v467, 10
        %v796 = vpop.permute.xlu0 %795
        %799 = vrot.lane.b32.xlu0 %v477, 12
        %v800 = vpop.permute.xlu0 %799
        %801 = vrot.lane.b32.xlu0 %v479, 12
        %v802 = vpop.permute.xlu0 %801
        %805 = vrot.lane.b32.xlu0 %v395, 14
        %v806 = vpop.permute.xlu0 %805
        %807 = vrot.lane.b32.xlu0 %v396, 14
        %v808 = vpop.permute.xlu0 %807
        %811 = vrot.lane.b32.xlu0 %v407, 16
        %v812 = vpop.permute.xlu0 %811
        %813 = vrot.lane.b32.xlu0 %v494, 16
        %v814 = vpop.permute.xlu0 %813
        %817 = vrot.lane.b32.xlu0 %v419, 18
        %v818 = vpop.permute.xlu0 %817
        %819 = vrot.lane.b32.xlu0 %v502, 18
        %v820 = vpop.permute.xlu0 %819
        %823 = vrot.lane.b32.xlu0 %v431, 20
        %v824 = vpop.permute.xlu0 %823
        %825 = vrot.lane.b32.xlu0 %v510, 20
        %v826 = vpop.permute.xlu0 %825
        %829 = vrot.lane.b32.xlu0 %v443, 22
        %v830 = vpop.permute.xlu0 %829
        %831 = vrot.lane.b32.xlu0 %v518, 22
        %v832 = vpop.permute.xlu0 %831
        %835 = vrot.lane.b32.xlu0 %v455, 24
        %v836 = vpop.permute.xlu0 %835
        %837 = vrot.lane.b32.xlu0 %v526, 24
        %v838 = vpop.permute.xlu0 %837
        %841 = vrot.lane.b32.xlu0 %v467, 26
        %v842 = vpop.permute.xlu0 %841
        %843 = vrot.lane.b32.xlu0 %v534, 26
        %v844 = vpop.permute.xlu0 %843
        %847 = vrot.lane.b32.xlu0 %v479, 28
        %v848 = vpop.permute.xlu0 %847
        %849 = vrot.lane.b32.xlu0 %v542, 28
        %v850 = vpop.permute.xlu0 %849
        %v853 = vsel %vm549, %v762, %v405
        %v854 = vsel %vm549, %v764, %v407
        %v855 = vsel %vm552, %v853, %v770
        %v856 = vsel %vm552, %v854, %v772
        %v857 = vsel %vm555, %v855, %v776
        %v858 = vsel %vm555, %v856, %v778
        %v859 = vsel %vm558, %v857, %v782
        %v860 = vsel %vm558, %v858, %v784
        %v861 = vsel %vm561, %v859, %v788
        %v862 = vsel %vm561, %v860, %v790
        %v863 = vsel %vm564, %v861, %v794
        %v864 = vsel %vm564, %v862, %v796
        %v865 = vsel %vm567, %v863, %v800
        %v866 = vsel %vm567, %v864, %v802
        %v867 = vsel %vm570, %v865, %v806
        %v868 = vsel %vm570, %v866, %v808
        %v869 = vsel %vm573, %v867, %v812
        %v870 = vsel %vm573, %v868, %v814
        %v871 = vsel %vm576, %v869, %v818
        %v872 = vsel %vm576, %v870, %v820
        %v873 = vsel %vm579, %v871, %v824
        %v874 = vsel %vm579, %v872, %v826
        %v875 = vsel %vm582, %v873, %v830
        %v876 = vsel %vm582, %v874, %v832
        %v877 = vsel %vm585, %v875, %v836
        %v878 = vsel %vm585, %v876, %v838
        %v879 = vsel %vm588, %v877, %v842
        %v880 = vsel %vm588, %v878, %v844
        %v881 = vsel %vm591, %v879, %v848
        %v882 = vsel %vm591, %v880, %v850
        %883 = vrot.lane.b32.xlu0 %v396, 126
        %v884 = vpop.permute.xlu0 %883
        %885 = vrot.lane.b32.xlu0 %v397, 126
        %v886 = vpop.permute.xlu0 %885
        %891 = vrot.lane.b32.xlu0 %v502, 2
        %v892 = vpop.permute.xlu0 %891
        %893 = vrot.lane.b32.xlu0 %v604, 2
        %v894 = vpop.permute.xlu0 %893
        %897 = vrot.lane.b32.xlu0 %v510, 4
        %v898 = vpop.permute.xlu0 %897
        %899 = vrot.lane.b32.xlu0 %v612, 4
        %v900 = vpop.permute.xlu0 %899
        %903 = vrot.lane.b32.xlu0 %v518, 6
        %v904 = vpop.permute.xlu0 %903
        %905 = vrot.lane.b32.xlu0 %v620, 6
        %v906 = vpop.permute.xlu0 %905
        %909 = vrot.lane.b32.xlu0 %v526, 8
        %v910 = vpop.permute.xlu0 %909
        %911 = vrot.lane.b32.xlu0 %v628, 8
        %v912 = vpop.permute.xlu0 %911
        %915 = vrot.lane.b32.xlu0 %v534, 10
        %v916 = vpop.permute.xlu0 %915
        %917 = vrot.lane.b32.xlu0 %v636, 10
        %v918 = vpop.permute.xlu0 %917
        %921 = vrot.lane.b32.xlu0 %v542, 12
        %v922 = vpop.permute.xlu0 %921
        %923 = vrot.lane.b32.xlu0 %v644, 12
        %v924 = vpop.permute.xlu0 %923
        %927 = vrot.lane.b32.xlu0 %v397, 14
        %v928 = vpop.permute.xlu0 %927
        %929 = vrot.lane.b32.xlu0 %v398, 14
        %v930 = vpop.permute.xlu0 %929
        %v933 = vsel %vm549, %v884, %v494
        %v934 = vsel %vm549, %v886, %v596
        %v935 = vsel %vm552, %v933, %v892
        %v936 = vsel %vm552, %v934, %v894
        %v937 = vsel %vm555, %v935, %v898
        %v938 = vsel %vm555, %v936, %v900
        %v939 = vsel %vm558, %v937, %v904
        %v940 = vsel %vm558, %v938, %v906
        %v941 = vsel %vm561, %v939, %v910
        %v942 = vsel %vm561, %v940, %v912
        %v943 = vsel %vm564, %v941, %v916
        %v944 = vsel %vm564, %v942, %v918
        %v945 = vsel %vm567, %v943, %v922
        %v946 = vsel %vm567, %v944, %v924
        %v947 = vsel %vm570, %v945, %v928
        %v948 = vsel %vm570, %v946, %v930
        %951 = vrot.lane.b32.xlu0 %v947, 32
        %v952 = vpop.permute.xlu0 %951
        %953 = vrot.lane.b32.xlu0 %v948, 32
        %v954 = vpop.permute.xlu0 %953
        %v957 = vsel %vm681, %v881, %v952
        %v958 = vsel %vm681, %v882, %v954
        %v959 = vpack.c.bf16 %v958, %v957
        %s960 = scalar_lea.vmem [#allocation5], 28
        %v961 = vld [vmem:[%s960] sm:$0xf]
        %v962 = vld [vmem:[%s960 + $0x4] sm:$0xf]
        %v963 = vld [vmem:[%s960 + $0x8] sm:$0xf]
        %v964 = vld [vmem:[%s960 + $0xc] sm:$0xf]
        %v965 = vld [vmem:[%s960 + $0x10] sm:$0xf]
        %v966 = vld [vmem:[%s960 + $0x14] sm:$0xf]
        %v967 = vld [vmem:[%s960 + $0x18] sm:$0x1]
        %v975 = vunpack.c.l.b16 %v961
        %v976 = vunpack.c.l.b16 %v962
        %v977 = vunpack.c.l.b16 %v963
        %v978 = vunpack.c.l.b16 %v964
        %v979 = vunpack.c.l.b16 %v965
        %v980 = vunpack.c.l.b16 %v966
        %v981 = vunpack.c.l.b16 %v967
        %v982 = vpack.c.b16 %v976, %v975
        %v983 = vpack.c.b16 %v978, %v977
        %v984 = vpack.c.b16 %v980, %v979
        %v985 = vpack.c.b16 %v981, %v981
        %v990 = vsel %vm713, %v959, 0
        %v993 = vsel %vm474, %v985, 0
        %995 = vmatprep.subr.bf16.mxu0 0
        %996 = vmatpush1.bf16.msra.mxu0 %v982
        %997 = vmatprep.subr.bf16.mxu0 0
        %998 = vmatpush1.bf16.msra.mxu0 %v983
        %999 = vmatprep.subr.bf16.mxu0 0
        %1000 = vmatpush1.bf16.msra.mxu0 %v984
        %1001 = vmatprep.subr.bf16.mxu0 0
        %1002 = vmatpush1.bf16.msra.mxu0 %v993
        %1003 = vmatprep.subr.bf16.mxu0 0
        %1004 = vmatpush1.bf16.msra.mxu0 0
        %1005 = vmatprep.subr.bf16.mxu0 0
        %1006 = vmatpush1.bf16.msra.mxu0 0
        %1007 = vmatprep.subr.bf16.mxu0 0
        %1008 = vmatpush1.bf16.msra.mxu0 0
        %1009 = vmatprep.subr.bf16.mxu0 0
        %1010 = vmatpush1.bf16.msra.mxu0 0
        %1011 = vmatprep.subr.bf16.mxu0 0
        %1012 = vmatpush1.bf16.msra.mxu0 0
        %1013 = vmatprep.subr.bf16.mxu0 0
        %1014 = vmatpush1.bf16.msra.mxu0 0
        %1015 = vmatprep.subr.bf16.mxu0 0
        %1016 = vmatpush1.bf16.msra.mxu0 0
        %1017 = vmatprep.subr.bf16.mxu0 0
        %1018 = vmatpush1.bf16.msra.mxu0 0
        %1019 = vmatprep.subr.bf16.mxu0 0
        %1020 = vmatpush1.bf16.msra.mxu0 0
        %1021 = vmatprep.subr.bf16.mxu0 0
        %1022 = vmatpush1.bf16.msra.mxu0 0
        %1023 = vmatprep.subr.bf16.mxu0 0
        %1024 = vmatpush1.bf16.msra.mxu0 0
        %1025 = vmatprep.subr.bf16.mxu0 0
        %1026 = vmatpush1.bf16.msra.mxu0 0
        %1027 = vmatprep.mubr.bf16.mxu0 0
        %1028 = vmatmul.mubr.bf16.gmra.mrb[0].mxu0 %v990
        %v1029 = vpop.f32.mrb[0].mxu0
        %v1030 = vadd.f32 0.0, %v1029
        %v1031 = vpop.f32.mrb[0].mxu0
        %v1032 = vpop.f32.mrb[0].mxu0
        %v1033 = vadd.f32 0.0, %v1032
        %v1034 = vpop.f32.mrb[0].mxu0
        %1035 = vdwg.mxu0
        %1036 = vrot.lane.b32.xlu0 %v394, 124
        %v1037 = vpop.permute.xlu0 %1036
        %1038 = vrot.lane.b32.xlu0 %v395, 124
        %v1039 = vpop.permute.xlu0 %1038
        %1042 = vrot.lane.b32.xlu0 %v405, 126
        %v1043 = vpop.permute.xlu0 %1042
        %1044 = vrot.lane.b32.xlu0 %v407, 126
        %v1045 = vpop.permute.xlu0 %1044
        %1050 = vrot.lane.b32.xlu0 %v429, 2
        %v1051 = vpop.permute.xlu0 %1050
        %1052 = vrot.lane.b32.xlu0 %v431, 2
        %v1053 = vpop.permute.xlu0 %1052
        %1056 = vrot.lane.b32.xlu0 %v441, 4
        %v1057 = vpop.permute.xlu0 %1056
        %1058 = vrot.lane.b32.xlu0 %v443, 4
        %v1059 = vpop.permute.xlu0 %1058
        %1062 = vrot.lane.b32.xlu0 %v453, 6
        %v1063 = vpop.permute.xlu0 %1062
        %1064 = vrot.lane.b32.xlu0 %v455, 6
        %v1065 = vpop.permute.xlu0 %1064
        %1068 = vrot.lane.b32.xlu0 %v465, 8
        %v1069 = vpop.permute.xlu0 %1068
        %1070 = vrot.lane.b32.xlu0 %v467, 8
        %v1071 = vpop.permute.xlu0 %1070
        %1074 = vrot.lane.b32.xlu0 %v477, 10
        %v1075 = vpop.permute.xlu0 %1074
        %1076 = vrot.lane.b32.xlu0 %v479, 10
        %v1077 = vpop.permute.xlu0 %1076
        %1080 = vrot.lane.b32.xlu0 %v395, 12
        %v1081 = vpop.permute.xlu0 %1080
        %1082 = vrot.lane.b32.xlu0 %v396, 12
        %v1083 = vpop.permute.xlu0 %1082
        %1086 = vrot.lane.b32.xlu0 %v407, 14
        %v1087 = vpop.permute.xlu0 %1086
        %1088 = vrot.lane.b32.xlu0 %v494, 14
        %v1089 = vpop.permute.xlu0 %1088
        %1092 = vrot.lane.b32.xlu0 %v419, 16
        %v1093 = vpop.permute.xlu0 %1092
        %1094 = vrot.lane.b32.xlu0 %v502, 16
        %v1095 = vpop.permute.xlu0 %1094
        %1098 = vrot.lane.b32.xlu0 %v431, 18
        %v1099 = vpop.permute.xlu0 %1098
        %1100 = vrot.lane.b32.xlu0 %v510, 18
        %v1101 = vpop.permute.xlu0 %1100
        %1104 = vrot.lane.b32.xlu0 %v443, 20
        %v1105 = vpop.permute.xlu0 %1104
        %1106 = vrot.lane.b32.xlu0 %v518, 20
        %v1107 = vpop.permute.xlu0 %1106
        %1110 = vrot.lane.b32.xlu0 %v455, 22
        %v1111 = vpop.permute.xlu0 %1110
        %1112 = vrot.lane.b32.xlu0 %v526, 22
        %v1113 = vpop.permute.xlu0 %1112
        %1116 = vrot.lane.b32.xlu0 %v467, 24
        %v1117 = vpop.permute.xlu0 %1116
        %1118 = vrot.lane.b32.xlu0 %v534, 24
        %v1119 = vpop.permute.xlu0 %1118
        %1122 = vrot.lane.b32.xlu0 %v479, 26
        %v1123 = vpop.permute.xlu0 %1122
        %1124 = vrot.lane.b32.xlu0 %v542, 26
        %v1125 = vpop.permute.xlu0 %1124
        %v1128 = vsel %vm549, %v1037, %v1043
        %v1129 = vsel %vm549, %v1039, %v1045
        %v1130 = vsel %vm552, %v1128, %v417
        %v1131 = vsel %vm552, %v1129, %v419
        %v1132 = vsel %vm555, %v1130, %v1051
        %v1133 = vsel %vm555, %v1131, %v1053
        %v1134 = vsel %vm558, %v1132, %v1057
        %v1135 = vsel %vm558, %v1133, %v1059
        %v1136 = vsel %vm561, %v1134, %v1063
        %v1137 = vsel %vm561, %v1135, %v1065
        %v1138 = vsel %vm564, %v1136, %v1069
        %v1139 = vsel %vm564, %v1137, %v1071
        %v1140 = vsel %vm567, %v1138, %v1075
        %v1141 = vsel %vm567, %v1139, %v1077
        %v1142 = vsel %vm570, %v1140, %v1081
        %v1143 = vsel %vm570, %v1141, %v1083
        %v1144 = vsel %vm573, %v1142, %v1087
        %v1145 = vsel %vm573, %v1143, %v1089
        %v1146 = vsel %vm576, %v1144, %v1093
        %v1147 = vsel %vm576, %v1145, %v1095
        %v1148 = vsel %vm579, %v1146, %v1099
        %v1149 = vsel %vm579, %v1147, %v1101
        %v1150 = vsel %vm582, %v1148, %v1105
        %v1151 = vsel %vm582, %v1149, %v1107
        %v1152 = vsel %vm585, %v1150, %v1111
        %v1153 = vsel %vm585, %v1151, %v1113
        %v1154 = vsel %vm588, %v1152, %v1117
        %v1155 = vsel %vm588, %v1153, %v1119
        %v1156 = vsel %vm591, %v1154, %v1123
        %v1157 = vsel %vm591, %v1155, %v1125
        %1158 = vrot.lane.b32.xlu0 %v396, 124
        %v1159 = vpop.permute.xlu0 %1158
        %1160 = vrot.lane.b32.xlu0 %v397, 124
        %v1161 = vpop.permute.xlu0 %1160
        %1164 = vrot.lane.b32.xlu0 %v494, 126
        %v1165 = vpop.permute.xlu0 %1164
        %1166 = vrot.lane.b32.xlu0 %v596, 126
        %v1167 = vpop.permute.xlu0 %1166
        %1172 = vrot.lane.b32.xlu0 %v510, 2
        %v1173 = vpop.permute.xlu0 %1172
        %1174 = vrot.lane.b32.xlu0 %v612, 2
        %v1175 = vpop.permute.xlu0 %1174
        %1178 = vrot.lane.b32.xlu0 %v518, 4
        %v1179 = vpop.permute.xlu0 %1178
        %1180 = vrot.lane.b32.xlu0 %v620, 4
        %v1181 = vpop.permute.xlu0 %1180
        %1184 = vrot.lane.b32.xlu0 %v526, 6
        %v1185 = vpop.permute.xlu0 %1184
        %1186 = vrot.lane.b32.xlu0 %v628, 6
        %v1187 = vpop.permute.xlu0 %1186
        %1190 = vrot.lane.b32.xlu0 %v534, 8
        %v1191 = vpop.permute.xlu0 %1190
        %1192 = vrot.lane.b32.xlu0 %v636, 8
        %v1193 = vpop.permute.xlu0 %1192
        %1196 = vrot.lane.b32.xlu0 %v542, 10
        %v1197 = vpop.permute.xlu0 %1196
        %1198 = vrot.lane.b32.xlu0 %v644, 10
        %v1199 = vpop.permute.xlu0 %1198
        %1202 = vrot.lane.b32.xlu0 %v397, 12
        %v1203 = vpop.permute.xlu0 %1202
        %1204 = vrot.lane.b32.xlu0 %v398, 12
        %v1205 = vpop.permute.xlu0 %1204
        %v1208 = vsel %vm549, %v1159, %v1165
        %v1209 = vsel %vm549, %v1161, %v1167
        %v1210 = vsel %vm552, %v1208, %v502
        %v1211 = vsel %vm552, %v1209, %v604
        %v1212 = vsel %vm555, %v1210, %v1173
        %v1213 = vsel %vm555, %v1211, %v1175
        %v1214 = vsel %vm558, %v1212, %v1179
        %v1215 = vsel %vm558, %v1213, %v1181
        %v1216 = vsel %vm561, %v1214, %v1185
        %v1217 = vsel %vm561, %v1215, %v1187
        %v1218 = vsel %vm564, %v1216, %v1191
        %v1219 = vsel %vm564, %v1217, %v1193
        %v1220 = vsel %vm567, %v1218, %v1197
        %v1221 = vsel %vm567, %v1219, %v1199
        %v1222 = vsel %vm570, %v1220, %v1203
        %v1223 = vsel %vm570, %v1221, %v1205
        %1226 = vrot.lane.b32.xlu0 %v1222, 32
        %v1227 = vpop.permute.xlu0 %1226
        %1228 = vrot.lane.b32.xlu0 %v1223, 32
        %v1229 = vpop.permute.xlu0 %1228
        %v1232 = vsel %vm681, %v1156, %v1227
        %v1233 = vsel %vm681, %v1157, %v1229
        %v1234 = vpack.c.bf16 %v1233, %v1232
        %s1235 = scalar_lea.vmem [#allocation5], 56
        %v1236 = vld [vmem:[%s1235] sm:$0xf]
        %v1237 = vld [vmem:[%s1235 + $0x4] sm:$0xf]
        %v1238 = vld [vmem:[%s1235 + $0x8] sm:$0xf]
        %v1239 = vld [vmem:[%s1235 + $0xc] sm:$0xf]
        %v1240 = vld [vmem:[%s1235 + $0x10] sm:$0xf]
        %v1241 = vld [vmem:[%s1235 + $0x14] sm:$0xf]
        %v1242 = vld [vmem:[%s1235 + $0x18] sm:$0x1]
        %v1250 = vunpack.c.l.b16 %v1236
        %v1251 = vunpack.c.l.b16 %v1237
        %v1252 = vunpack.c.l.b16 %v1238
        %v1253 = vunpack.c.l.b16 %v1239
        %v1254 = vunpack.c.l.b16 %v1240
        %v1255 = vunpack.c.l.b16 %v1241
        %v1256 = vunpack.c.l.b16 %v1242
        %v1257 = vpack.c.b16 %v1251, %v1250
        %v1258 = vpack.c.b16 %v1253, %v1252
        %v1259 = vpack.c.b16 %v1255, %v1254
        %v1260 = vpack.c.b16 %v1256, %v1256
        %v1265 = vsel %vm713, %v1234, 0
        %v1268 = vsel %vm474, %v1260, 0
        %1270 = vmatprep.subr.bf16.mxu0 0
        %1271 = vmatpush1.bf16.msra.mxu0 %v1257
        %1272 = vmatprep.subr.bf16.mxu0 0
        %1273 = vmatpush1.bf16.msra.mxu0 %v1258
        %1274 = vmatprep.subr.bf16.mxu0 0
        %1275 = vmatpush1.bf16.msra.mxu0 %v1259
        %1276 = vmatprep.subr.bf16.mxu0 0
        %1277 = vmatpush1.bf16.msra.mxu0 %v1268
        %1278 = vmatprep.subr.bf16.mxu0 0
        %1279 = vmatpush1.bf16.msra.mxu0 0
        %1280 = vmatprep.subr.bf16.mxu0 0
        %1281 = vmatpush1.bf16.msra.mxu0 0
        %1282 = vmatprep.subr.bf16.mxu0 0
        %1283 = vmatpush1.bf16.msra.mxu0 0
        %1284 = vmatprep.subr.bf16.mxu0 0
        %1285 = vmatpush1.bf16.msra.mxu0 0
        %1286 = vmatprep.subr.bf16.mxu0 0
        %1287 = vmatpush1.bf16.msra.mxu0 0
        %1288 = vmatprep.subr.bf16.mxu0 0
        %1289 = vmatpush1.bf16.msra.mxu0 0
        %1290 = vmatprep.subr.bf16.mxu0 0
        %1291 = vmatpush1.bf16.msra.mxu0 0
        %1292 = vmatprep.subr.bf16.mxu0 0
        %1293 = vmatpush1.bf16.msra.mxu0 0
        %1294 = vmatprep.subr.bf16.mxu0 0
        %1295 = vmatpush1.bf16.msra.mxu0 0
        %1296 = vmatprep.subr.bf16.mxu0 0
        %1297 = vmatpush1.bf16.msra.mxu0 0
        %1298 = vmatprep.subr.bf16.mxu0 0
        %1299 = vmatpush1.bf16.msra.mxu0 0
        %1300 = vmatprep.subr.bf16.mxu0 0
        %1301 = vmatpush1.bf16.msra.mxu0 0
        %1302 = vmatprep.mubr.bf16.mxu0 0
        %1303 = vmatmul.mubr.bf16.gmra.mrb[0].mxu0 %v1265
        %v1304 = vpop.f32.mrb[0].mxu0
        %v1305 = vadd.f32 0.0, %v1304
        %v1306 = vpop.f32.mrb[0].mxu0
        %v1307 = vpop.f32.mrb[0].mxu0
        %v1308 = vadd.f32 0.0, %v1307
        %v1309 = vpop.f32.mrb[0].mxu0
        %1310 = vdwg.mxu0
        %1311 = vrot.lane.b32.xlu0 %v394, 122
        %v1312 = vpop.permute.xlu0 %1311
        %1313 = vrot.lane.b32.xlu0 %v395, 122
        %v1314 = vpop.permute.xlu0 %1313
        %1317 = vrot.lane.b32.xlu0 %v405, 124
        %v1318 = vpop.permute.xlu0 %1317
        %1319 = vrot.lane.b32.xlu0 %v407, 124
        %v1320 = vpop.permute.xlu0 %1319
        %1323 = vrot.lane.b32.xlu0 %v417, 126
        %v1324 = vpop.permute.xlu0 %1323
        %1325 = vrot.lane.b32.xlu0 %v419, 126
        %v1326 = vpop.permute.xlu0 %1325
        %1331 = vrot.lane.b32.xlu0 %v441, 2
        %v1332 = vpop.permute.xlu0 %1331
        %1333 = vrot.lane.b32.xlu0 %v443, 2
        %v1334 = vpop.permute.xlu0 %1333
        %1337 = vrot.lane.b32.xlu0 %v453, 4
        %v1338 = vpop.permute.xlu0 %1337
        %1339 = vrot.lane.b32.xlu0 %v455, 4
        %v1340 = vpop.permute.xlu0 %1339
        %1343 = vrot.lane.b32.xlu0 %v465, 6
        %v1344 = vpop.permute.xlu0 %1343
        %1345 = vrot.lane.b32.xlu0 %v467, 6
        %v1346 = vpop.permute.xlu0 %1345
        %1349 = vrot.lane.b32.xlu0 %v477, 8
        %v1350 = vpop.permute.xlu0 %1349
        %1351 = vrot.lane.b32.xlu0 %v479, 8
        %v1352 = vpop.permute.xlu0 %1351
        %1355 = vrot.lane.b32.xlu0 %v395, 10
        %v1356 = vpop.permute.xlu0 %1355
        %1357 = vrot.lane.b32.xlu0 %v396, 10
        %v1358 = vpop.permute.xlu0 %1357
        %1361 = vrot.lane.b32.xlu0 %v407, 12
        %v1362 = vpop.permute.xlu0 %1361
        %1363 = vrot.lane.b32.xlu0 %v494, 12
        %v1364 = vpop.permute.xlu0 %1363
        %1367 = vrot.lane.b32.xlu0 %v419, 14
        %v1368 = vpop.permute.xlu0 %1367
        %1369 = vrot.lane.b32.xlu0 %v502, 14
        %v1370 = vpop.permute.xlu0 %1369
        %1373 = vrot.lane.b32.xlu0 %v431, 16
        %v1374 = vpop.permute.xlu0 %1373
        %1375 = vrot.lane.b32.xlu0 %v510, 16
        %v1376 = vpop.permute.xlu0 %1375
        %1379 = vrot.lane.b32.xlu0 %v443, 18
        %v1380 = vpop.permute.xlu0 %1379
        %1381 = vrot.lane.b32.xlu0 %v518, 18
        %v1382 = vpop.permute.xlu0 %1381
        %1385 = vrot.lane.b32.xlu0 %v455, 20
        %v1386 = vpop.permute.xlu0 %1385
        %1387 = vrot.lane.b32.xlu0 %v526, 20
        %v1388 = vpop.permute.xlu0 %1387
        %1391 = vrot.lane.b32.xlu0 %v467, 22
        %v1392 = vpop.permute.xlu0 %1391
        %1393 = vrot.lane.b32.xlu0 %v534, 22
        %v1394 = vpop.permute.xlu0 %1393
        %1397 = vrot.lane.b32.xlu0 %v479, 24
        %v1398 = vpop.permute.xlu0 %1397
        %1399 = vrot.lane.b32.xlu0 %v542, 24
        %v1400 = vpop.permute.xlu0 %1399
        %v1403 = vsel %vm549, %v1312, %v1318
        %v1404 = vsel %vm549, %v1314, %v1320
        %v1405 = vsel %vm552, %v1403, %v1324
        %v1406 = vsel %vm552, %v1404, %v1326
        %v1407 = vsel %vm555, %v1405, %v429
        %v1408 = vsel %vm555, %v1406, %v431
        %v1409 = vsel %vm558, %v1407, %v1332
        %v1410 = vsel %vm558, %v1408, %v1334
        %v1411 = vsel %vm561, %v1409, %v1338
        %v1412 = vsel %vm561, %v1410, %v1340
        %v1413 = vsel %vm564, %v1411, %v1344
        %v1414 = vsel %vm564, %v1412, %v1346
        %v1415 = vsel %vm567, %v1413, %v1350
        %v1416 = vsel %vm567, %v1414, %v1352
        %v1417 = vsel %vm570, %v1415, %v1356
        %v1418 = vsel %vm570, %v1416, %v1358
        %v1419 = vsel %vm573, %v1417, %v1362
        %v1420 = vsel %vm573, %v1418, %v1364
        %v1421 = vsel %vm576, %v1419, %v1368
        %v1422 = vsel %vm576, %v1420, %v1370
        %v1423 = vsel %vm579, %v1421, %v1374
        %v1424 = vsel %vm579, %v1422, %v1376
        %v1425 = vsel %vm582, %v1423, %v1380
        %v1426 = vsel %vm582, %v1424, %v1382
        %v1427 = vsel %vm585, %v1425, %v1386
        %v1428 = vsel %vm585, %v1426, %v1388
        %v1429 = vsel %vm588, %v1427, %v1392
        %v1430 = vsel %vm588, %v1428, %v1394
        %v1431 = vsel %vm591, %v1429, %v1398
        %v1432 = vsel %vm591, %v1430, %v1400
        %1433 = vrot.lane.b32.xlu0 %v396, 122
        %v1434 = vpop.permute.xlu0 %1433
        %1435 = vrot.lane.b32.xlu0 %v397, 122
        %v1436 = vpop.permute.xlu0 %1435
        %1439 = vrot.lane.b32.xlu0 %v494, 124
        %v1440 = vpop.permute.xlu0 %1439
        %1441 = vrot.lane.b32.xlu0 %v596, 124
        %v1442 = vpop.permute.xlu0 %1441
        %1445 = vrot.lane.b32.xlu0 %v502, 126
        %v1446 = vpop.permute.xlu0 %1445
        %1447 = vrot.lane.b32.xlu0 %v604, 126
        %v1448 = vpop.permute.xlu0 %1447
        %1453 = vrot.lane.b32.xlu0 %v518, 2
        %v1454 = vpop.permute.xlu0 %1453
        %1455 = vrot.lane.b32.xlu0 %v620, 2
        %v1456 = vpop.permute.xlu0 %1455
        %1459 = vrot.lane.b32.xlu0 %v526, 4
        %v1460 = vpop.permute.xlu0 %1459
        %1461 = vrot.lane.b32.xlu0 %v628, 4
        %v1462 = vpop.permute.xlu0 %1461
        %1465 = vrot.lane.b32.xlu0 %v534, 6
        %v1466 = vpop.permute.xlu0 %1465
        %1467 = vrot.lane.b32.xlu0 %v636, 6
        %v1468 = vpop.permute.xlu0 %1467
        %1471 = vrot.lane.b32.xlu0 %v542, 8
        %v1472 = vpop.permute.xlu0 %1471
        %1473 = vrot.lane.b32.xlu0 %v644, 8
        %v1474 = vpop.permute.xlu0 %1473
        %1477 = vrot.lane.b32.xlu0 %v397, 10
        %v1478 = vpop.permute.xlu0 %1477
        %1479 = vrot.lane.b32.xlu0 %v398, 10
        %v1480 = vpop.permute.xlu0 %1479
        %v1483 = vsel %vm549, %v1434, %v1440
        %v1484 = vsel %vm549, %v1436, %v1442
        %v1485 = vsel %vm552, %v1483, %v1446
        %v1486 = vsel %vm552, %v1484, %v1448
        %v1487 = vsel %vm555, %v1485, %v510
        %v1488 = vsel %vm555, %v1486, %v612
        %v1489 = vsel %vm558, %v1487, %v1454
        %v1490 = vsel %vm558, %v1488, %v1456
        %v1491 = vsel %vm561, %v1489, %v1460
        %v1492 = vsel %vm561, %v1490, %v1462
        %v1493 = vsel %vm564, %v1491, %v1466
        %v1494 = vsel %vm564, %v1492, %v1468
        %v1495 = vsel %vm567, %v1493, %v1472
        %v1496 = vsel %vm567, %v1494, %v1474
        %v1497 = vsel %vm570, %v1495, %v1478
        %v1498 = vsel %vm570, %v1496, %v1480
        %1501 = vrot.lane.b32.xlu0 %v1497, 32
        %v1502 = vpop.permute.xlu0 %1501
        %1503 = vrot.lane.b32.xlu0 %v1498, 32
        %v1504 = vpop.permute.xlu0 %1503
        %v1507 = vsel %vm681, %v1431, %v1502
        %v1508 = vsel %vm681, %v1432, %v1504
        %v1509 = vpack.c.bf16 %v1508, %v1507
        %s1510 = scalar_lea.vmem [#allocation5], 84
        %v1511 = vld [vmem:[%s1510] sm:$0xf]
        %v1512 = vld [vmem:[%s1510 + $0x4] sm:$0xf]
        %v1513 = vld [vmem:[%s1510 + $0x8] sm:$0xf]
        %v1514 = vld [vmem:[%s1510 + $0xc] sm:$0xf]
        %v1515 = vld [vmem:[%s1510 + $0x10] sm:$0xf]
        %v1516 = vld [vmem:[%s1510 + $0x14] sm:$0xf]
        %v1517 = vld [vmem:[%s1510 + $0x18] sm:$0x1]
        %v1525 = vunpack.c.l.b16 %v1511
        %v1526 = vunpack.c.l.b16 %v1512
        %v1527 = vunpack.c.l.b16 %v1513
        %v1528 = vunpack.c.l.b16 %v1514
        %v1529 = vunpack.c.l.b16 %v1515
        %v1530 = vunpack.c.l.b16 %v1516
        %v1531 = vunpack.c.l.b16 %v1517
        %v1532 = vpack.c.b16 %v1526, %v1525
        %v1533 = vpack.c.b16 %v1528, %v1527
        %v1534 = vpack.c.b16 %v1530, %v1529
        %v1535 = vpack.c.b16 %v1531, %v1531
        %v1540 = vsel %vm713, %v1509, 0
        %v1543 = vsel %vm474, %v1535, 0
        %1545 = vmatprep.subr.bf16.mxu0 0
        %1546 = vmatpush1.bf16.msra.mxu0 %v1532
        %1547 = vmatprep.subr.bf16.mxu0 0
        %1548 = vmatpush1.bf16.msra.mxu0 %v1533
        %1549 = vmatprep.subr.bf16.mxu0 0
        %1550 = vmatpush1.bf16.msra.mxu0 %v1534
        %1551 = vmatprep.subr.bf16.mxu0 0
        %1552 = vmatpush1.bf16.msra.mxu0 %v1543
        %1553 = vmatprep.subr.bf16.mxu0 0
        %1554 = vmatpush1.bf16.msra.mxu0 0
        %1555 = vmatprep.subr.bf16.mxu0 0
        %1556 = vmatpush1.bf16.msra.mxu0 0
        %1557 = vmatprep.subr.bf16.mxu0 0
        %1558 = vmatpush1.bf16.msra.mxu0 0
        %1559 = vmatprep.subr.bf16.mxu0 0
        %1560 = vmatpush1.bf16.msra.mxu0 0
        %1561 = vmatprep.subr.bf16.mxu0 0
        %1562 = vmatpush1.bf16.msra.mxu0 0
        %1563 = vmatprep.subr.bf16.mxu0 0
        %1564 = vmatpush1.bf16.msra.mxu0 0
        %1565 = vmatprep.subr.bf16.mxu0 0
        %1566 = vmatpush1.bf16.msra.mxu0 0
        %1567 = vmatprep.subr.bf16.mxu0 0
        %1568 = vmatpush1.bf16.msra.mxu0 0
        %1569 = vmatprep.subr.bf16.mxu0 0
        %1570 = vmatpush1.bf16.msra.mxu0 0
        %1571 = vmatprep.subr.bf16.mxu0 0
        %1572 = vmatpush1.bf16.msra.mxu0 0
        %1573 = vmatprep.subr.bf16.mxu0 0
        %1574 = vmatpush1.bf16.msra.mxu0 0
        %1575 = vmatprep.subr.bf16.mxu0 0
        %1576 = vmatpush1.bf16.msra.mxu0 0
        %1577 = vmatprep.mubr.bf16.mxu0 0
        %1578 = vmatmul.mubr.bf16.gmra.mrb[0].mxu0 %v1540
        %v1579 = vpop.f32.mrb[0].mxu0
        %v1580 = vadd.f32 0.0, %v1579
        %v1581 = vpop.f32.mrb[0].mxu0
        %v1582 = vpop.f32.mrb[0].mxu0
        %v1583 = vadd.f32 0.0, %v1582
        %v1584 = vpop.f32.mrb[0].mxu0
        %1585 = vdwg.mxu0
        %1586 = vrot.lane.b32.xlu0 %v394, 120
        %v1587 = vpop.permute.xlu0 %1586
        %1588 = vrot.lane.b32.xlu0 %v395, 120
        %v1589 = vpop.permute.xlu0 %1588
        %1592 = vrot.lane.b32.xlu0 %v405, 122
        %v1593 = vpop.permute.xlu0 %1592
        %1594 = vrot.lane.b32.xlu0 %v407, 122
        %v1595 = vpop.permute.xlu0 %1594
        %1598 = vrot.lane.b32.xlu0 %v417, 124
        %v1599 = vpop.permute.xlu0 %1598
        %1600 = vrot.lane.b32.xlu0 %v419, 124
        %v1601 = vpop.permute.xlu0 %1600
        %1604 = vrot.lane.b32.xlu0 %v429, 126
        %v1605 = vpop.permute.xlu0 %1604
        %1606 = vrot.lane.b32.xlu0 %v431, 126
        %v1607 = vpop.permute.xlu0 %1606
        %1612 = vrot.lane.b32.xlu0 %v453, 2
        %v1613 = vpop.permute.xlu0 %1612
        %1614 = vrot.lane.b32.xlu0 %v455, 2
        %v1615 = vpop.permute.xlu0 %1614
        %1618 = vrot.lane.b32.xlu0 %v465, 4
        %v1619 = vpop.permute.xlu0 %1618
        %1620 = vrot.lane.b32.xlu0 %v467, 4
        %v1621 = vpop.permute.xlu0 %1620
        %1624 = vrot.lane.b32.xlu0 %v477, 6
        %v1625 = vpop.permute.xlu0 %1624
        %1626 = vrot.lane.b32.xlu0 %v479, 6
        %v1627 = vpop.permute.xlu0 %1626
        %1630 = vrot.lane.b32.xlu0 %v395, 8
        %v1631 = vpop.permute.xlu0 %1630
        %1632 = vrot.lane.b32.xlu0 %v396, 8
        %v1633 = vpop.permute.xlu0 %1632
        %1636 = vrot.lane.b32.xlu0 %v407, 10
        %v1637 = vpop.permute.xlu0 %1636
        %1638 = vrot.lane.b32.xlu0 %v494, 10
        %v1639 = vpop.permute.xlu0 %1638
        %1642 = vrot.lane.b32.xlu0 %v419, 12
        %v1643 = vpop.permute.xlu0 %1642
        %1644 = vrot.lane.b32.xlu0 %v502, 12
        %v1645 = vpop.permute.xlu0 %1644
        %1648 = vrot.lane.b32.xlu0 %v431, 14
        %v1649 = vpop.permute.xlu0 %1648
        %1650 = vrot.lane.b32.xlu0 %v510, 14
        %v1651 = vpop.permute.xlu0 %1650
        %1654 = vrot.lane.b32.xlu0 %v443, 16
        %v1655 = vpop.permute.xlu0 %1654
        %1656 = vrot.lane.b32.xlu0 %v518, 16
        %v1657 = vpop.permute.xlu0 %1656
        %1660 = vrot.lane.b32.xlu0 %v455, 18
        %v1661 = vpop.permute.xlu0 %1660
        %1662 = vrot.lane.b32.xlu0 %v526, 18
        %v1663 = vpop.permute.xlu0 %1662
        %1666 = vrot.lane.b32.xlu0 %v467, 20
        %v1667 = vpop.permute.xlu0 %1666
        %1668 = vrot.lane.b32.xlu0 %v534, 20
        %v1669 = vpop.permute.xlu0 %1668
        %1672 = vrot.lane.b32.xlu0 %v479, 22
        %v1673 = vpop.permute.xlu0 %1672
        %1674 = vrot.lane.b32.xlu0 %v542, 22
        %v1675 = vpop.permute.xlu0 %1674
        %v1678 = vsel %vm549, %v1587, %v1593
        %v1679 = vsel %vm549, %v1589, %v1595
        %v1680 = vsel %vm552, %v1678, %v1599
        %v1681 = vsel %vm552, %v1679, %v1601
        %v1682 = vsel %vm555, %v1680, %v1605
        %v1683 = vsel %vm555, %v1681, %v1607
        %v1684 = vsel %vm558, %v1682, %v441
        %v1685 = vsel %vm558, %v1683, %v443
        %v1686 = vsel %vm561, %v1684, %v1613
        %v1687 = vsel %vm561, %v1685, %v1615
        %v1688 = vsel %vm564, %v1686, %v1619
        %v1689 = vsel %vm564, %v1687, %v1621
        %v1690 = vsel %vm567, %v1688, %v1625
        %v1691 = vsel %vm567, %v1689, %v1627
        %v1692 = vsel %vm570, %v1690, %v1631
        %v1693 = vsel %vm570, %v1691, %v1633
        %v1694 = vsel %vm573, %v1692, %v1637
        %v1695 = vsel %vm573, %v1693, %v1639
        %v1696 = vsel %vm576, %v1694, %v1643
        %v1697 = vsel %vm576, %v1695, %v1645
        %v1698 = vsel %vm579, %v1696, %v1649
        %v1699 = vsel %vm579, %v1697, %v1651
        %v1700 = vsel %vm582, %v1698, %v1655
        %v1701 = vsel %vm582, %v1699, %v1657
        %v1702 = vsel %vm585, %v1700, %v1661
        %v1703 = vsel %vm585, %v1701, %v1663
        %v1704 = vsel %vm588, %v1702, %v1667
        %v1705 = vsel %vm588, %v1703, %v1669
        %v1706 = vsel %vm591, %v1704, %v1673
        %v1707 = vsel %vm591, %v1705, %v1675
        %1708 = vrot.lane.b32.xlu0 %v396, 120
        %v1709 = vpop.permute.xlu0 %1708
        %1710 = vrot.lane.b32.xlu0 %v397, 120
        %v1711 = vpop.permute.xlu0 %1710
        %1714 = vrot.lane.b32.xlu0 %v494, 122
        %v1715 = vpop.permute.xlu0 %1714
        %1716 = vrot.lane.b32.xlu0 %v596, 122
        %v1717 = vpop.permute.xlu0 %1716
        %1720 = vrot.lane.b32.xlu0 %v502, 124
        %v1721 = vpop.permute.xlu0 %1720
        %1722 = vrot.lane.b32.xlu0 %v604, 124
        %v1723 = vpop.permute.xlu0 %1722
        %1726 = vrot.lane.b32.xlu0 %v510, 126
        %v1727 = vpop.permute.xlu0 %1726
        %1728 = vrot.lane.b32.xlu0 %v612, 126
        %v1729 = vpop.permute.xlu0 %1728
        %1734 = vrot.lane.b32.xlu0 %v526, 2
        %v1735 = vpop.permute.xlu0 %1734
        %1736 = vrot.lane.b32.xlu0 %v628, 2
        %v1737 = vpop.permute.xlu0 %1736
        %1740 = vrot.lane.b32.xlu0 %v534, 4
        %v1741 = vpop.permute.xlu0 %1740
        %1742 = vrot.lane.b32.xlu0 %v636, 4
        %v1743 = vpop.permute.xlu0 %1742
        %1746 = vrot.lane.b32.xlu0 %v542, 6
        %v1747 = vpop.permute.xlu0 %1746
        %1748 = vrot.lane.b32.xlu0 %v644, 6
        %v1749 = vpop.permute.xlu0 %1748
        %1752 = vrot.lane.b32.xlu0 %v397, 8
        %v1753 = vpop.permute.xlu0 %1752
        %1754 = vrot.lane.b32.xlu0 %v398, 8
        %v1755 = vpop.permute.xlu0 %1754
        %v1758 = vsel %vm549, %v1709, %v1715
        %v1759 = vsel %vm549, %v1711, %v1717
        %v1760 = vsel %vm552, %v1758, %v1721
        %v1761 = vsel %vm552, %v1759, %v1723
        %v1762 = vsel %vm555, %v1760, %v1727
        %v1763 = vsel %vm555, %v1761, %v1729
        %v1764 = vsel %vm558, %v1762, %v518
        %v1765 = vsel %vm558, %v1763, %v620
        %v1766 = vsel %vm561, %v1764, %v1735
        %v1767 = vsel %vm561, %v1765, %v1737
        %v1768 = vsel %vm564, %v1766, %v1741
        %v1769 = vsel %vm564, %v1767, %v1743
        %v1770 = vsel %vm567, %v1768, %v1747
        %v1771 = vsel %vm567, %v1769, %v1749
        %v1772 = vsel %vm570, %v1770, %v1753
        %v1773 = vsel %vm570, %v1771, %v1755
        %1776 = vrot.lane.b32.xlu0 %v1772, 32
        %v1777 = vpop.permute.xlu0 %1776
        %1778 = vrot.lane.b32.xlu0 %v1773, 32
        %v1779 = vpop.permute.xlu0 %1778
        %v1782 = vsel %vm681, %v1706, %v1777
        %v1783 = vsel %vm681, %v1707, %v1779
        %v1784 = vpack.c.bf16 %v1783, %v1782
        %s1785 = scalar_lea.vmem [#allocation5], 112
        %v1786 = vld [vmem:[%s1785] sm:$0xf]
        %v1787 = vld [vmem:[%s1785 + $0x4] sm:$0xf]
        %v1788 = vld [vmem:[%s1785 + $0x8] sm:$0xf]
        %v1789 = vld [vmem:[%s1785 + $0xc] sm:$0xf]
        %v1790 = vld [vmem:[%s1785 + $0x10] sm:$0xf]
        %v1791 = vld [vmem:[%s1785 + $0x14] sm:$0xf]
        %v1792 = vld [vmem:[%s1785 + $0x18] sm:$0x1]
        %v1800 = vunpack.c.l.b16 %v1786
        %v1801 = vunpack.c.l.b16 %v1787
        %v1802 = vunpack.c.l.b16 %v1788
        %v1803 = vunpack.c.l.b16 %v1789
        %v1804 = vunpack.c.l.b16 %v1790
        %v1805 = vunpack.c.l.b16 %v1791
        %v1806 = vunpack.c.l.b16 %v1792
        %v1807 = vpack.c.b16 %v1801, %v1800
        %v1808 = vpack.c.b16 %v1803, %v1802
        %v1809 = vpack.c.b16 %v1805, %v1804
        %v1810 = vpack.c.b16 %v1806, %v1806
        %v1815 = vsel %vm713, %v1784, 0
        %v1818 = vsel %vm474, %v1810, 0
        %1820 = vmatprep.subr.bf16.mxu0 0
        %1821 = vmatpush1.bf16.msra.mxu0 %v1807
        %1822 = vmatprep.subr.bf16.mxu0 0
        %1823 = vmatpush1.bf16.msra.mxu0 %v1808
        %1824 = vmatprep.subr.bf16.mxu0 0
        %1825 = vmatpush1.bf16.msra.mxu0 %v1809
        %1826 = vmatprep.subr.bf16.mxu0 0
        %1827 = vmatpush1.bf16.msra.mxu0 %v1818
        %1828 = vmatprep.subr.bf16.mxu0 0
        %1829 = vmatpush1.bf16.msra.mxu0 0
        %1830 = vmatprep.subr.bf16.mxu0 0
        %1831 = vmatpush1.bf16.msra.mxu0 0
        %1832 = vmatprep.subr.bf16.mxu0 0
        %1833 = vmatpush1.bf16.msra.mxu0 0
        %1834 = vmatprep.subr.bf16.mxu0 0
        %1835 = vmatpush1.bf16.msra.mxu0 0
        %1836 = vmatprep.subr.bf16.mxu0 0
        %1837 = vmatpush1.bf16.msra.mxu0 0
        %1838 = vmatprep.subr.bf16.mxu0 0
        %1839 = vmatpush1.bf16.msra.mxu0 0
        %1840 = vmatprep.subr.bf16.mxu0 0
        %1841 = vmatpush1.bf16.msra.mxu0 0
        %1842 = vmatprep.subr.bf16.mxu0 0
        %1843 = vmatpush1.bf16.msra.mxu0 0
        %1844 = vmatprep.subr.bf16.mxu0 0
        %1845 = vmatpush1.bf16.msra.mxu0 0
        %1846 = vmatprep.subr.bf16.mxu0 0
        %1847 = vmatpush1.bf16.msra.mxu0 0
        %1848 = vmatprep.subr.bf16.mxu0 0
        %1849 = vmatpush1.bf16.msra.mxu0 0
        %1850 = vmatprep.subr.bf16.mxu0 0
        %1851 = vmatpush1.bf16.msra.mxu0 0
        %1852 = vmatprep.mubr.bf16.mxu0 0
        %1853 = vmatmul.mubr.bf16.gmra.mrb[0].mxu0 %v1815
        %v1854 = vpop.f32.mrb[0].mxu0
        %v1855 = vadd.f32 0.0, %v1854
        %v1856 = vpop.f32.mrb[0].mxu0
        %v1857 = vpop.f32.mrb[0].mxu0
        %v1858 = vadd.f32 0.0, %v1857
        %v1859 = vpop.f32.mrb[0].mxu0
        %1860 = vdwg.mxu0
        %1861 = vrot.lane.b32.xlu0 %v394, 118
        %v1862 = vpop.permute.xlu0 %1861
        %1863 = vrot.lane.b32.xlu0 %v395, 118
        %v1864 = vpop.permute.xlu0 %1863
        %1867 = vrot.lane.b32.xlu0 %v405, 120
        %v1868 = vpop.permute.xlu0 %1867
        %1869 = vrot.lane.b32.xlu0 %v407, 120
        %v1870 = vpop.permute.xlu0 %1869
        %1873 = vrot.lane.b32.xlu0 %v417, 122
        %v1874 = vpop.permute.xlu0 %1873
        %1875 = vrot.lane.b32.xlu0 %v419, 122
        %v1876 = vpop.permute.xlu0 %1875
        %1879 = vrot.lane.b32.xlu0 %v429, 124
        %v1880 = vpop.permute.xlu0 %1879
        %1881 = vrot.lane.b32.xlu0 %v431, 124
        %v1882 = vpop.permute.xlu0 %1881
        %1885 = vrot.lane.b32.xlu0 %v441, 126
        %v1886 = vpop.permute.xlu0 %1885
        %1887 = vrot.lane.b32.xlu0 %v443, 126
        %v1888 = vpop.permute.xlu0 %1887
        %1893 = vrot.lane.b32.xlu0 %v465, 2
        %v1894 = vpop.permute.xlu0 %1893
        %1895 = vrot.lane.b32.xlu0 %v467, 2
        %v1896 = vpop.permute.xlu0 %1895
        %1899 = vrot.lane.b32.xlu0 %v477, 4
        %v1900 = vpop.permute.xlu0 %1899
        %1901 = vrot.lane.b32.xlu0 %v479, 4
        %v1902 = vpop.permute.xlu0 %1901
        %1905 = vrot.lane.b32.xlu0 %v395, 6
        %v1906 = vpop.permute.xlu0 %1905
        %1907 = vrot.lane.b32.xlu0 %v396, 6
        %v1908 = vpop.permute.xlu0 %1907
        %1911 = vrot.lane.b32.xlu0 %v407, 8
        %v1912 = vpop.permute.xlu0 %1911
        %1913 = vrot.lane.b32.xlu0 %v494, 8
        %v1914 = vpop.permute.xlu0 %1913
        %1917 = vrot.lane.b32.xlu0 %v419, 10
        %v1918 = vpop.permute.xlu0 %1917
        %1919 = vrot.lane.b32.xlu0 %v502, 10
        %v1920 = vpop.permute.xlu0 %1919
        %1923 = vrot.lane.b32.xlu0 %v431, 12
        %v1924 = vpop.permute.xlu0 %1923
        %1925 = vrot.lane.b32.xlu0 %v510, 12
        %v1926 = vpop.permute.xlu0 %1925
        %1929 = vrot.lane.b32.xlu0 %v443, 14
        %v1930 = vpop.permute.xlu0 %1929
        %1931 = vrot.lane.b32.xlu0 %v518, 14
        %v1932 = vpop.permute.xlu0 %1931
        %1935 = vrot.lane.b32.xlu0 %v455, 16
        %v1936 = vpop.permute.xlu0 %1935
        %1937 = vrot.lane.b32.xlu0 %v526, 16
        %v1938 = vpop.permute.xlu0 %1937
        %1941 = vrot.lane.b32.xlu0 %v467, 18
        %v1942 = vpop.permute.xlu0 %1941
        %1943 = vrot.lane.b32.xlu0 %v534, 18
        %v1944 = vpop.permute.xlu0 %1943
        %1947 = vrot.lane.b32.xlu0 %v479, 20
        %v1948 = vpop.permute.xlu0 %1947
        %1949 = vrot.lane.b32.xlu0 %v542, 20
        %v1950 = vpop.permute.xlu0 %1949
        %v1953 = vsel %vm549, %v1862, %v1868
        %v1954 = vsel %vm549, %v1864, %v1870
        %v1955 = vsel %vm552, %v1953, %v1874
        %v1956 = vsel %vm552, %v1954, %v1876
        %v1957 = vsel %vm555, %v1955, %v1880
        %v1958 = vsel %vm555, %v1956, %v1882
        %v1959 = vsel %vm558, %v1957, %v1886
        %v1960 = vsel %vm558, %v1958, %v1888
        %v1961 = vsel %vm561, %v1959, %v453
        %v1962 = vsel %vm561, %v1960, %v455
        %v1963 = vsel %vm564, %v1961, %v1894
        %v1964 = vsel %vm564, %v1962, %v1896
        %v1965 = vsel %vm567, %v1963, %v1900
        %v1966 = vsel %vm567, %v1964, %v1902
        %v1967 = vsel %vm570, %v1965, %v1906
        %v1968 = vsel %vm570, %v1966, %v1908
        %v1969 = vsel %vm573, %v1967, %v1912
        %v1970 = vsel %vm573, %v1968, %v1914
        %v1971 = vsel %vm576, %v1969, %v1918
        %v1972 = vsel %vm576, %v1970, %v1920
        %v1973 = vsel %vm579, %v1971, %v1924
        %v1974 = vsel %vm579, %v1972, %v1926
        %v1975 = vsel %vm582, %v1973, %v1930
        %v1976 = vsel %vm582, %v1974, %v1932
        %v1977 = vsel %vm585, %v1975, %v1936
        %v1978 = vsel %vm585, %v1976, %v1938
        %v1979 = vsel %vm588, %v1977, %v1942
        %v1980 = vsel %vm588, %v1978, %v1944
        %v1981 = vsel %vm591, %v1979, %v1948
        %v1982 = vsel %vm591, %v1980, %v1950
        %1983 = vrot.lane.b32.xlu0 %v396, 118
        %v1984 = vpop.permute.xlu0 %1983
        %1985 = vrot.lane.b32.xlu0 %v397, 118
        %v1986 = vpop.permute.xlu0 %1985
        %1989 = vrot.lane.b32.xlu0 %v494, 120
        %v1990 = vpop.permute.xlu0 %1989
        %1991 = vrot.lane.b32.xlu0 %v596, 120
        %v1992 = vpop.permute.xlu0 %1991
        %1995 = vrot.lane.b32.xlu0 %v502, 122
        %v1996 = vpop.permute.xlu0 %1995
        %1997 = vrot.lane.b32.xlu0 %v604, 122
        %v1998 = vpop.permute.xlu0 %1997
        %2001 = vrot.lane.b32.xlu0 %v510, 124
        %v2002 = vpop.permute.xlu0 %2001
        %2003 = vrot.lane.b32.xlu0 %v612, 124
        %v2004 = vpop.permute.xlu0 %2003
        %2007 = vrot.lane.b32.xlu0 %v518, 126
        %v2008 = vpop.permute.xlu0 %2007
        %2009 = vrot.lane.b32.xlu0 %v620, 126
        %v2010 = vpop.permute.xlu0 %2009
        %2015 = vrot.lane.b32.xlu0 %v534, 2
        %v2016 = vpop.permute.xlu0 %2015
        %2017 = vrot.lane.b32.xlu0 %v636, 2
        %v2018 = vpop.permute.xlu0 %2017
        %2021 = vrot.lane.b32.xlu0 %v542, 4
        %v2022 = vpop.permute.xlu0 %2021
        %2023 = vrot.lane.b32.xlu0 %v644, 4
        %v2024 = vpop.permute.xlu0 %2023
        %2027 = vrot.lane.b32.xlu0 %v397, 6
        %v2028 = vpop.permute.xlu0 %2027
        %2029 = vrot.lane.b32.xlu0 %v398, 6
        %v2030 = vpop.permute.xlu0 %2029
        %v2033 = vsel %vm549, %v1984, %v1990
        %v2034 = vsel %vm549, %v1986, %v1992
        %v2035 = vsel %vm552, %v2033, %v1996
        %v2036 = vsel %vm552, %v2034, %v1998
        %v2037 = vsel %vm555, %v2035, %v2002
        %v2038 = vsel %vm555, %v2036, %v2004
        %v2039 = vsel %vm558, %v2037, %v2008
        %v2040 = vsel %vm558, %v2038, %v2010
        %v2041 = vsel %vm561, %v2039, %v526
        %v2042 = vsel %vm561, %v2040, %v628
        %v2043 = vsel %vm564, %v2041, %v2016
        %v2044 = vsel %vm564, %v2042, %v2018
        %v2045 = vsel %vm567, %v2043, %v2022
        %v2046 = vsel %vm567, %v2044, %v2024
        %v2047 = vsel %vm570, %v2045, %v2028
        %v2048 = vsel %vm570, %v2046, %v2030
        %2051 = vrot.lane.b32.xlu0 %v2047, 32
        %v2052 = vpop.permute.xlu0 %2051
        %2053 = vrot.lane.b32.xlu0 %v2048, 32
        %v2054 = vpop.permute.xlu0 %2053
        %v2057 = vsel %vm681, %v1981, %v2052
        %v2058 = vsel %vm681, %v1982, %v2054
        %v2059 = vpack.c.bf16 %v2058, %v2057
        %s2060 = scalar_lea.vmem [#allocation5], 140
        %v2061 = vld [vmem:[%s2060] sm:$0xf]
        %v2062 = vld [vmem:[%s2060 + $0x4] sm:$0xf]
        %v2063 = vld [vmem:[%s2060 + $0x8] sm:$0xf]
        %v2064 = vld [vmem:[%s2060 + $0xc] sm:$0xf]
        %v2065 = vld [vmem:[%s2060 + $0x10] sm:$0xf]
        %v2066 = vld [vmem:[%s2060 + $0x14] sm:$0xf]
        %v2067 = vld [vmem:[%s2060 + $0x18] sm:$0x1]
        %v2075 = vunpack.c.l.b16 %v2061
        %v2076 = vunpack.c.l.b16 %v2062
        %v2077 = vunpack.c.l.b16 %v2063
        %v2078 = vunpack.c.l.b16 %v2064
        %v2079 = vunpack.c.l.b16 %v2065
        %v2080 = vunpack.c.l.b16 %v2066
        %v2081 = vunpack.c.l.b16 %v2067
        %v2082 = vpack.c.b16 %v2076, %v2075
        %v2083 = vpack.c.b16 %v2078, %v2077
        %v2084 = vpack.c.b16 %v2080, %v2079
        %v2085 = vpack.c.b16 %v2081, %v2081
        %v2090 = vsel %vm713, %v2059, 0
        %v2093 = vsel %vm474, %v2085, 0
        %2095 = vmatprep.subr.bf16.mxu0 0
        %2096 = vmatpush1.bf16.msra.mxu0 %v2082
        %2097 = vmatprep.subr.bf16.mxu0 0
        %2098 = vmatpush1.bf16.msra.mxu0 %v2083
        %2099 = vmatprep.subr.bf16.mxu0 0
        %2100 = vmatpush1.bf16.msra.mxu0 %v2084
        %2101 = vmatprep.subr.bf16.mxu0 0
        %2102 = vmatpush1.bf16.msra.mxu0 %v2093
        %2103 = vmatprep.subr.bf16.mxu0 0
        %2104 = vmatpush1.bf16.msra.mxu0 0
        %2105 = vmatprep.subr.bf16.mxu0 0
        %2106 = vmatpush1.bf16.msra.mxu0 0
        %2107 = vmatprep.subr.bf16.mxu0 0
        %2108 = vmatpush1.bf16.msra.mxu0 0
        %2109 = vmatprep.subr.bf16.mxu0 0
        %2110 = vmatpush1.bf16.msra.mxu0 0
        %2111 = vmatprep.subr.bf16.mxu0 0
        %2112 = vmatpush1.bf16.msra.mxu0 0
        %2113 = vmatprep.subr.bf16.mxu0 0
        %2114 = vmatpush1.bf16.msra.mxu0 0
        %2115 = vmatprep.subr.bf16.mxu0 0
        %2116 = vmatpush1.bf16.msra.mxu0 0
        %2117 = vmatprep.subr.bf16.mxu0 0
        %2118 = vmatpush1.bf16.msra.mxu0 0
        %2119 = vmatprep.subr.bf16.mxu0 0
        %2120 = vmatpush1.bf16.msra.mxu0 0
        %2121 = vmatprep.subr.bf16.mxu0 0
        %2122 = vmatpush1.bf16.msra.mxu0 0
        %2123 = vmatprep.subr.bf16.mxu0 0
        %2124 = vmatpush1.bf16.msra.mxu0 0
        %2125 = vmatprep.subr.bf16.mxu0 0
        %2126 = vmatpush1.bf16.msra.mxu0 0
        %2127 = vmatprep.mubr.bf16.mxu0 0
        %2128 = vmatmul.mubr.bf16.gmra.mrb[0].mxu0 %v2090
        %v2129 = vpop.f32.mrb[0].mxu0
        %v2130 = vadd.f32 0.0, %v2129
        %v2131 = vpop.f32.mrb[0].mxu0
        %v2132 = vpop.f32.mrb[0].mxu0
        %v2133 = vadd.f32 0.0, %v2132
        %v2134 = vpop.f32.mrb[0].mxu0
        %2135 = vdwg.mxu0
        %2136 = vrot.lane.b32.xlu0 %v394, 116
        %v2137 = vpop.permute.xlu0 %2136
        %2138 = vrot.lane.b32.xlu0 %v395, 116
        %v2139 = vpop.permute.xlu0 %2138
        %2142 = vrot.lane.b32.xlu0 %v405, 118
        %v2143 = vpop.permute.xlu0 %2142
        %2144 = vrot.lane.b32.xlu0 %v407, 118
        %v2145 = vpop.permute.xlu0 %2144
        %2148 = vrot.lane.b32.xlu0 %v417, 120
        %v2149 = vpop.permute.xlu0 %2148
        %2150 = vrot.lane.b32.xlu0 %v419, 120
        %v2151 = vpop.permute.xlu0 %2150
        %2154 = vrot.lane.b32.xlu0 %v429, 122
        %v2155 = vpop.permute.xlu0 %2154
        %2156 = vrot.lane.b32.xlu0 %v431, 122
        %v2157 = vpop.permute.xlu0 %2156
        %2160 = vrot.lane.b32.xlu0 %v441, 124
        %v2161 = vpop.permute.xlu0 %2160
        %2162 = vrot.lane.b32.xlu0 %v443, 124
        %v2163 = vpop.permute.xlu0 %2162
        %2166 = vrot.lane.b32.xlu0 %v453, 126
        %v2167 = vpop.permute.xlu0 %2166
        %2168 = vrot.lane.b32.xlu0 %v455, 126
        %v2169 = vpop.permute.xlu0 %2168
        %2174 = vrot.lane.b32.xlu0 %v477, 2
        %v2175 = vpop.permute.xlu0 %2174
        %2176 = vrot.lane.b32.xlu0 %v479, 2
        %v2177 = vpop.permute.xlu0 %2176
        %2180 = vrot.lane.b32.xlu0 %v395, 4
        %v2181 = vpop.permute.xlu0 %2180
        %2182 = vrot.lane.b32.xlu0 %v396, 4
        %v2183 = vpop.permute.xlu0 %2182
        %2186 = vrot.lane.b32.xlu0 %v407, 6
        %v2187 = vpop.permute.xlu0 %2186
        %2188 = vrot.lane.b32.xlu0 %v494, 6
        %v2189 = vpop.permute.xlu0 %2188
        %2192 = vrot.lane.b32.xlu0 %v419, 8
        %v2193 = vpop.permute.xlu0 %2192
        %2194 = vrot.lane.b32.xlu0 %v502, 8
        %v2195 = vpop.permute.xlu0 %2194
        %2198 = vrot.lane.b32.xlu0 %v431, 10
        %v2199 = vpop.permute.xlu0 %2198
        %2200 = vrot.lane.b32.xlu0 %v510, 10
        %v2201 = vpop.permute.xlu0 %2200
        %2204 = vrot.lane.b32.xlu0 %v443, 12
        %v2205 = vpop.permute.xlu0 %2204
        %2206 = vrot.lane.b32.xlu0 %v518, 12
        %v2207 = vpop.permute.xlu0 %2206
        %2210 = vrot.lane.b32.xlu0 %v455, 14
        %v2211 = vpop.permute.xlu0 %2210
        %2212 = vrot.lane.b32.xlu0 %v526, 14
        %v2213 = vpop.permute.xlu0 %2212
        %2216 = vrot.lane.b32.xlu0 %v467, 16
        %v2217 = vpop.permute.xlu0 %2216
        %2218 = vrot.lane.b32.xlu0 %v534, 16
        %v2219 = vpop.permute.xlu0 %2218
        %2222 = vrot.lane.b32.xlu0 %v479, 18
        %v2223 = vpop.permute.xlu0 %2222
        %2224 = vrot.lane.b32.xlu0 %v542, 18
        %v2225 = vpop.permute.xlu0 %2224
        %v2228 = vsel %vm549, %v2137, %v2143
        %v2229 = vsel %vm549, %v2139, %v2145
        %v2230 = vsel %vm552, %v2228, %v2149
        %v2231 = vsel %vm552, %v2229, %v2151
        %v2232 = vsel %vm555, %v2230, %v2155
        %v2233 = vsel %vm555, %v2231, %v2157
        %v2234 = vsel %vm558, %v2232, %v2161
        %v2235 = vsel %vm558, %v2233, %v2163
        %v2236 = vsel %vm561, %v2234, %v2167
        %v2237 = vsel %vm561, %v2235, %v2169
        %v2238 = vsel %vm564, %v2236, %v465
        %v2239 = vsel %vm564, %v2237, %v467
        %v2240 = vsel %vm567, %v2238, %v2175
        %v2241 = vsel %vm567, %v2239, %v2177
        %v2242 = vsel %vm570, %v2240, %v2181
        %v2243 = vsel %vm570, %v2241, %v2183
        %v2244 = vsel %vm573, %v2242, %v2187
        %v2245 = vsel %vm573, %v2243, %v2189
        %v2246 = vsel %vm576, %v2244, %v2193
        %v2247 = vsel %vm576, %v2245, %v2195
        %v2248 = vsel %vm579, %v2246, %v2199
        %v2249 = vsel %vm579, %v2247, %v2201
        %v2250 = vsel %vm582, %v2248, %v2205
        %v2251 = vsel %vm582, %v2249, %v2207
        %v2252 = vsel %vm585, %v2250, %v2211
        %v2253 = vsel %vm585, %v2251, %v2213
        %v2254 = vsel %vm588, %v2252, %v2217
        %v2255 = vsel %vm588, %v2253, %v2219
        %v2256 = vsel %vm591, %v2254, %v2223
        %v2257 = vsel %vm591, %v2255, %v2225
        %2258 = vrot.lane.b32.xlu0 %v396, 116
        %v2259 = vpop.permute.xlu0 %2258
        %2260 = vrot.lane.b32.xlu0 %v397, 116
        %v2261 = vpop.permute.xlu0 %2260
        %2264 = vrot.lane.b32.xlu0 %v494, 118
        %v2265 = vpop.permute.xlu0 %2264
        %2266 = vrot.lane.b32.xlu0 %v596, 118
        %v2267 = vpop.permute.xlu0 %2266
        %2270 = vrot.lane.b32.xlu0 %v502, 120
        %v2271 = vpop.permute.xlu0 %2270
        %2272 = vrot.lane.b32.xlu0 %v604, 120
        %v2273 = vpop.permute.xlu0 %2272
        %2276 = vrot.lane.b32.xlu0 %v510, 122
        %v2277 = vpop.permute.xlu0 %2276
        %2278 = vrot.lane.b32.xlu0 %v612, 122
        %v2279 = vpop.permute.xlu0 %2278
        %2282 = vrot.lane.b32.xlu0 %v518, 124
        %v2283 = vpop.permute.xlu0 %2282
        %2284 = vrot.lane.b32.xlu0 %v620, 124
        %v2285 = vpop.permute.xlu0 %2284
        %2288 = vrot.lane.b32.xlu0 %v526, 126
        %v2289 = vpop.permute.xlu0 %2288
        %2290 = vrot.lane.b32.xlu0 %v628, 126
        %v2291 = vpop.permute.xlu0 %2290
        %2296 = vrot.lane.b32.xlu0 %v542, 2
        %v2297 = vpop.permute.xlu0 %2296
        %2298 = vrot.lane.b32.xlu0 %v644, 2
        %v2299 = vpop.permute.xlu0 %2298
        %2302 = vrot.lane.b32.xlu0 %v397, 4
        %v2303 = vpop.permute.xlu0 %2302
        %2304 = vrot.lane.b32.xlu0 %v398, 4
        %v2305 = vpop.permute.xlu0 %2304
        %v2308 = vsel %vm549, %v2259, %v2265
        %v2309 = vsel %vm549, %v2261, %v2267
        %v2310 = vsel %vm552, %v2308, %v2271
        %v2311 = vsel %vm552, %v2309, %v2273
        %v2312 = vsel %vm555, %v2310, %v2277
        %v2313 = vsel %vm555, %v2311, %v2279
        %v2314 = vsel %vm558, %v2312, %v2283
        %v2315 = vsel %vm558, %v2313, %v2285
        %v2316 = vsel %vm561, %v2314, %v2289
        %v2317 = vsel %vm561, %v2315, %v2291
        %v2318 = vsel %vm564, %v2316, %v534
        %v2319 = vsel %vm564, %v2317, %v636
        %v2320 = vsel %vm567, %v2318, %v2297
        %v2321 = vsel %vm567, %v2319, %v2299
        %v2322 = vsel %vm570, %v2320, %v2303
        %v2323 = vsel %vm570, %v2321, %v2305
        %2326 = vrot.lane.b32.xlu0 %v2322, 32
        %v2327 = vpop.permute.xlu0 %2326
        %2328 = vrot.lane.b32.xlu0 %v2323, 32
        %v2329 = vpop.permute.xlu0 %2328
        %v2332 = vsel %vm681, %v2256, %v2327
        %v2333 = vsel %vm681, %v2257, %v2329
        %v2334 = vpack.c.bf16 %v2333, %v2332
        %s2335 = scalar_lea.vmem [#allocation5], 168
        %v2336 = vld [vmem:[%s2335] sm:$0xf]
        %v2337 = vld [vmem:[%s2335 + $0x4] sm:$0xf]
        %v2338 = vld [vmem:[%s2335 + $0x8] sm:$0xf]
        %v2339 = vld [vmem:[%s2335 + $0xc] sm:$0xf]
        %v2340 = vld [vmem:[%s2335 + $0x10] sm:$0xf]
        %v2341 = vld [vmem:[%s2335 + $0x14] sm:$0xf]
        %v2342 = vld [vmem:[%s2335 + $0x18] sm:$0x1]
        %v2350 = vunpack.c.l.b16 %v2336
        %v2351 = vunpack.c.l.b16 %v2337
        %v2352 = vunpack.c.l.b16 %v2338
        %v2353 = vunpack.c.l.b16 %v2339
        %v2354 = vunpack.c.l.b16 %v2340
        %v2355 = vunpack.c.l.b16 %v2341
        %v2356 = vunpack.c.l.b16 %v2342
        %v2357 = vpack.c.b16 %v2351, %v2350
        %v2358 = vpack.c.b16 %v2353, %v2352
        %v2359 = vpack.c.b16 %v2355, %v2354
        %v2360 = vpack.c.b16 %v2356, %v2356
        %v2365 = vsel %vm713, %v2334, 0
        %v2368 = vsel %vm474, %v2360, 0
        %2370 = vmatprep.subr.bf16.mxu0 0
        %2371 = vmatpush1.bf16.msra.mxu0 %v2357
        %2372 = vmatprep.subr.bf16.mxu0 0
        %2373 = vmatpush1.bf16.msra.mxu0 %v2358
        %2374 = vmatprep.subr.bf16.mxu0 0
        %2375 = vmatpush1.bf16.msra.mxu0 %v2359
        %2376 = vmatprep.subr.bf16.mxu0 0
        %2377 = vmatpush1.bf16.msra.mxu0 %v2368
        %2378 = vmatprep.subr.bf16.mxu0 0
        %2379 = vmatpush1.bf16.msra.mxu0 0
        %2380 = vmatprep.subr.bf16.mxu0 0
        %2381 = vmatpush1.bf16.msra.mxu0 0
        %2382 = vmatprep.subr.bf16.mxu0 0
        %2383 = vmatpush1.bf16.msra.mxu0 0
        %2384 = vmatprep.subr.bf16.mxu0 0
        %2385 = vmatpush1.bf16.msra.mxu0 0
        %2386 = vmatprep.subr.bf16.mxu0 0
        %2387 = vmatpush1.bf16.msra.mxu0 0
        %2388 = vmatprep.subr.bf16.mxu0 0
        %2389 = vmatpush1.bf16.msra.mxu0 0
        %2390 = vmatprep.subr.bf16.mxu0 0
        %2391 = vmatpush1.bf16.msra.mxu0 0
        %2392 = vmatprep.subr.bf16.mxu0 0
        %2393 = vmatpush1.bf16.msra.mxu0 0
        %2394 = vmatprep.subr.bf16.mxu0 0
        %2395 = vmatpush1.bf16.msra.mxu0 0
        %2396 = vmatprep.subr.bf16.mxu0 0
        %2397 = vmatpush1.bf16.msra.mxu0 0
        %2398 = vmatprep.subr.bf16.mxu0 0
        %2399 = vmatpush1.bf16.msra.mxu0 0
        %2400 = vmatprep.subr.bf16.mxu0 0
        %2401 = vmatpush1.bf16.msra.mxu0 0
        %2402 = vmatprep.mubr.bf16.mxu0 0
        %2403 = vmatmul.mubr.bf16.gmra.mrb[0].mxu0 %v2365
        %v2404 = vpop.f32.mrb[0].mxu0
        %v2405 = vadd.f32 0.0, %v2404
        %v2406 = vpop.f32.mrb[0].mxu0
        %v2407 = vpop.f32.mrb[0].mxu0
        %v2408 = vadd.f32 0.0, %v2407
        %v2409 = vpop.f32.mrb[0].mxu0
        %2410 = vdwg.mxu0
        %2411 = vrot.lane.b32.xlu0 %v394, 114
        %v2412 = vpop.permute.xlu0 %2411
        %2413 = vrot.lane.b32.xlu0 %v395, 114
        %v2414 = vpop.permute.xlu0 %2413
        %2417 = vrot.lane.b32.xlu0 %v405, 116
        %v2418 = vpop.permute.xlu0 %2417
        %2419 = vrot.lane.b32.xlu0 %v407, 116
        %v2420 = vpop.permute.xlu0 %2419
        %2423 = vrot.lane.b32.xlu0 %v417, 118
        %v2424 = vpop.permute.xlu0 %2423
        %2425 = vrot.lane.b32.xlu0 %v419, 118
        %v2426 = vpop.permute.xlu0 %2425
        %2429 = vrot.lane.b32.xlu0 %v429, 120
        %v2430 = vpop.permute.xlu0 %2429
        %2431 = vrot.lane.b32.xlu0 %v431, 120
        %v2432 = vpop.permute.xlu0 %2431
        %2435 = vrot.lane.b32.xlu0 %v441, 122
        %v2436 = vpop.permute.xlu0 %2435
        %2437 = vrot.lane.b32.xlu0 %v443, 122
        %v2438 = vpop.permute.xlu0 %2437
        %2441 = vrot.lane.b32.xlu0 %v453, 124
        %v2442 = vpop.permute.xlu0 %2441
        %2443 = vrot.lane.b32.xlu0 %v455, 124
        %v2444 = vpop.permute.xlu0 %2443
        %2447 = vrot.lane.b32.xlu0 %v465, 126
        %v2448 = vpop.permute.xlu0 %2447
        %2449 = vrot.lane.b32.xlu0 %v467, 126
        %v2450 = vpop.permute.xlu0 %2449
        %2455 = vrot.lane.b32.xlu0 %v395, 2
        %v2456 = vpop.permute.xlu0 %2455
        %2457 = vrot.lane.b32.xlu0 %v396, 2
        %v2458 = vpop.permute.xlu0 %2457
        %2461 = vrot.lane.b32.xlu0 %v407, 4
        %v2462 = vpop.permute.xlu0 %2461
        %2463 = vrot.lane.b32.xlu0 %v494, 4
        %v2464 = vpop.permute.xlu0 %2463
        %2467 = vrot.lane.b32.xlu0 %v419, 6
        %v2468 = vpop.permute.xlu0 %2467
        %2469 = vrot.lane.b32.xlu0 %v502, 6
        %v2470 = vpop.permute.xlu0 %2469
        %2473 = vrot.lane.b32.xlu0 %v431, 8
        %v2474 = vpop.permute.xlu0 %2473
        %2475 = vrot.lane.b32.xlu0 %v510, 8
        %v2476 = vpop.permute.xlu0 %2475
        %2479 = vrot.lane.b32.xlu0 %v443, 10
        %v2480 = vpop.permute.xlu0 %2479
        %2481 = vrot.lane.b32.xlu0 %v518, 10
        %v2482 = vpop.permute.xlu0 %2481
        %2485 = vrot.lane.b32.xlu0 %v455, 12
        %v2486 = vpop.permute.xlu0 %2485
        %2487 = vrot.lane.b32.xlu0 %v526, 12
        %v2488 = vpop.permute.xlu0 %2487
        %2491 = vrot.lane.b32.xlu0 %v467, 14
        %v2492 = vpop.permute.xlu0 %2491
        %2493 = vrot.lane.b32.xlu0 %v534, 14
        %v2494 = vpop.permute.xlu0 %2493
        %2497 = vrot.lane.b32.xlu0 %v479, 16
        %v2498 = vpop.permute.xlu0 %2497
        %2499 = vrot.lane.b32.xlu0 %v542, 16
        %v2500 = vpop.permute.xlu0 %2499
        %v2503 = vsel %vm549, %v2412, %v2418
        %v2504 = vsel %vm549, %v2414, %v2420
        %v2505 = vsel %vm552, %v2503, %v2424
        %v2506 = vsel %vm552, %v2504, %v2426
        %v2507 = vsel %vm555, %v2505, %v2430
        %v2508 = vsel %vm555, %v2506, %v2432
        %v2509 = vsel %vm558, %v2507, %v2436
        %v2510 = vsel %vm558, %v2508, %v2438
        %v2511 = vsel %vm561, %v2509, %v2442
        %v2512 = vsel %vm561, %v2510, %v2444
        %v2513 = vsel %vm564, %v2511, %v2448
        %v2514 = vsel %vm564, %v2512, %v2450
        %v2515 = vsel %vm567, %v2513, %v477
        %v2516 = vsel %vm567, %v2514, %v479
        %v2517 = vsel %vm570, %v2515, %v2456
        %v2518 = vsel %vm570, %v2516, %v2458
        %v2519 = vsel %vm573, %v2517, %v2462
        %v2520 = vsel %vm573, %v2518, %v2464
        %v2521 = vsel %vm576, %v2519, %v2468
        %v2522 = vsel %vm576, %v2520, %v2470
        %v2523 = vsel %vm579, %v2521, %v2474
        %v2524 = vsel %vm579, %v2522, %v2476
        %v2525 = vsel %vm582, %v2523, %v2480
        %v2526 = vsel %vm582, %v2524, %v2482
        %v2527 = vsel %vm585, %v2525, %v2486
        %v2528 = vsel %vm585, %v2526, %v2488
        %v2529 = vsel %vm588, %v2527, %v2492
        %v2530 = vsel %vm588, %v2528, %v2494
        %v2531 = vsel %vm591, %v2529, %v2498
        %v2532 = vsel %vm591, %v2530, %v2500
        %2533 = vrot.lane.b32.xlu0 %v396, 114
        %v2534 = vpop.permute.xlu0 %2533
        %2535 = vrot.lane.b32.xlu0 %v397, 114
        %v2536 = vpop.permute.xlu0 %2535
        %2539 = vrot.lane.b32.xlu0 %v494, 116
        %v2540 = vpop.permute.xlu0 %2539
        %2541 = vrot.lane.b32.xlu0 %v596, 116
        %v2542 = vpop.permute.xlu0 %2541
        %2545 = vrot.lane.b32.xlu0 %v502, 118
        %v2546 = vpop.permute.xlu0 %2545
        %2547 = vrot.lane.b32.xlu0 %v604, 118
        %v2548 = vpop.permute.xlu0 %2547
        %2551 = vrot.lane.b32.xlu0 %v510, 120
        %v2552 = vpop.permute.xlu0 %2551
        %2553 = vrot.lane.b32.xlu0 %v612, 120
        %v2554 = vpop.permute.xlu0 %2553
        %2557 = vrot.lane.b32.xlu0 %v518, 122
        %v2558 = vpop.permute.xlu0 %2557
        %2559 = vrot.lane.b32.xlu0 %v620, 122
        %v2560 = vpop.permute.xlu0 %2559
        %2563 = vrot.lane.b32.xlu0 %v526, 124
        %v2564 = vpop.permute.xlu0 %2563
        %2565 = vrot.lane.b32.xlu0 %v628, 124
        %v2566 = vpop.permute.xlu0 %2565
        %2569 = vrot.lane.b32.xlu0 %v534, 126
        %v2570 = vpop.permute.xlu0 %2569
        %2571 = vrot.lane.b32.xlu0 %v636, 126
        %v2572 = vpop.permute.xlu0 %2571
        %2577 = vrot.lane.b32.xlu0 %v397, 2
        %v2578 = vpop.permute.xlu0 %2577
        %2579 = vrot.lane.b32.xlu0 %v398, 2
        %v2580 = vpop.permute.xlu0 %2579
        %v2583 = vsel %vm549, %v2534, %v2540
        %v2584 = vsel %vm549, %v2536, %v2542
        %v2585 = vsel %vm552, %v2583, %v2546
        %v2586 = vsel %vm552, %v2584, %v2548
        %v2587 = vsel %vm555, %v2585, %v2552
        %v2588 = vsel %vm555, %v2586, %v2554
        %v2589 = vsel %vm558, %v2587, %v2558
        %v2590 = vsel %vm558, %v2588, %v2560
        %v2591 = vsel %vm561, %v2589, %v2564
        %v2592 = vsel %vm561, %v2590, %v2566
        %v2593 = vsel %vm564, %v2591, %v2570
        %v2594 = vsel %vm564, %v2592, %v2572
        %v2595 = vsel %vm567, %v2593, %v542
        %v2596 = vsel %vm567, %v2594, %v644
        %v2597 = vsel %vm570, %v2595, %v2578
        %v2598 = vsel %vm570, %v2596, %v2580
        %2601 = vrot.lane.b32.xlu0 %v2597, 32
        %v2602 = vpop.permute.xlu0 %2601
        %2603 = vrot.lane.b32.xlu0 %v2598, 32
        %v2604 = vpop.permute.xlu0 %2603
        %v2607 = vsel %vm681, %v2531, %v2602
        %v2608 = vsel %vm681, %v2532, %v2604
        %v2609 = vpack.c.bf16 %v2608, %v2607
        %s2610 = scalar_lea.vmem [#allocation5], 196
        %v2611 = vld [vmem:[%s2610] sm:$0xf]
        %v2612 = vld [vmem:[%s2610 + $0x4] sm:$0xf]
        %v2613 = vld [vmem:[%s2610 + $0x8] sm:$0xf]
        %v2614 = vld [vmem:[%s2610 + $0xc] sm:$0xf]
        %v2615 = vld [vmem:[%s2610 + $0x10] sm:$0xf]
        %v2616 = vld [vmem:[%s2610 + $0x14] sm:$0xf]
        %v2617 = vld [vmem:[%s2610 + $0x18] sm:$0x1]
        %v2625 = vunpack.c.l.b16 %v2611
        %v2626 = vunpack.c.l.b16 %v2612
        %v2627 = vunpack.c.l.b16 %v2613
        %v2628 = vunpack.c.l.b16 %v2614
        %v2629 = vunpack.c.l.b16 %v2615
        %v2630 = vunpack.c.l.b16 %v2616
        %v2631 = vunpack.c.l.b16 %v2617
        %v2632 = vpack.c.b16 %v2626, %v2625
        %v2633 = vpack.c.b16 %v2628, %v2627
        %v2634 = vpack.c.b16 %v2630, %v2629
        %v2635 = vpack.c.b16 %v2631, %v2631
        %v2640 = vsel %vm713, %v2609, 0
        %v2643 = vsel %vm474, %v2635, 0
        %2645 = vmatprep.subr.bf16.mxu0 0
        %2646 = vmatpush1.bf16.msra.mxu0 %v2632
        %2647 = vmatprep.subr.bf16.mxu0 0
        %2648 = vmatpush1.bf16.msra.mxu0 %v2633
        %2649 = vmatprep.subr.bf16.mxu0 0
        %2650 = vmatpush1.bf16.msra.mxu0 %v2634
        %2651 = vmatprep.subr.bf16.mxu0 0
        %2652 = vmatpush1.bf16.msra.mxu0 %v2643
        %2653 = vmatprep.subr.bf16.mxu0 0
        %2654 = vmatpush1.bf16.msra.mxu0 0
        %2655 = vmatprep.subr.bf16.mxu0 0
        %2656 = vmatpush1.bf16.msra.mxu0 0
        %2657 = vmatprep.subr.bf16.mxu0 0
        %2658 = vmatpush1.bf16.msra.mxu0 0
        %2659 = vmatprep.subr.bf16.mxu0 0
        %2660 = vmatpush1.bf16.msra.mxu0 0
        %2661 = vmatprep.subr.bf16.mxu0 0
        %2662 = vmatpush1.bf16.msra.mxu0 0
        %2663 = vmatprep.subr.bf16.mxu0 0
        %2664 = vmatpush1.bf16.msra.mxu0 0
        %2665 = vmatprep.subr.bf16.mxu0 0
        %2666 = vmatpush1.bf16.msra.mxu0 0
        %2667 = vmatprep.subr.bf16.mxu0 0
        %2668 = vmatpush1.bf16.msra.mxu0 0
        %2669 = vmatprep.subr.bf16.mxu0 0
        %2670 = vmatpush1.bf16.msra.mxu0 0
        %2671 = vmatprep.subr.bf16.mxu0 0
        %2672 = vmatpush1.bf16.msra.mxu0 0
        %2673 = vmatprep.subr.bf16.mxu0 0
        %2674 = vmatpush1.bf16.msra.mxu0 0
        %2675 = vmatprep.subr.bf16.mxu0 0
        %2676 = vmatpush1.bf16.msra.mxu0 0
        %2677 = vmatprep.mubr.bf16.mxu0 0
        %2678 = vmatmul.mubr.bf16.gmra.mrb[0].mxu0 %v2640
        %v2679 = vpop.f32.mrb[0].mxu0
        %v2680 = vadd.f32 0.0, %v2679
        %v2681 = vpop.f32.mrb[0].mxu0
        %v2682 = vpop.f32.mrb[0].mxu0
        %v2683 = vadd.f32 0.0, %v2682
        %v2684 = vpop.f32.mrb[0].mxu0
        %2685 = vdwg.mxu0
        %2686 = vrot.lane.b32.xlu0 %v394, 112
        %v2687 = vpop.permute.xlu0 %2686
        %2688 = vrot.lane.b32.xlu0 %v395, 112
        %v2689 = vpop.permute.xlu0 %2688
        %2692 = vrot.lane.b32.xlu0 %v405, 114
        %v2693 = vpop.permute.xlu0 %2692
        %2694 = vrot.lane.b32.xlu0 %v407, 114
        %v2695 = vpop.permute.xlu0 %2694
        %2698 = vrot.lane.b32.xlu0 %v417, 116
        %v2699 = vpop.permute.xlu0 %2698
        %2700 = vrot.lane.b32.xlu0 %v419, 116
        %v2701 = vpop.permute.xlu0 %2700
        %2704 = vrot.lane.b32.xlu0 %v429, 118
        %v2705 = vpop.permute.xlu0 %2704
        %2706 = vrot.lane.b32.xlu0 %v431, 118
        %v2707 = vpop.permute.xlu0 %2706
        %2710 = vrot.lane.b32.xlu0 %v441, 120
        %v2711 = vpop.permute.xlu0 %2710
        %2712 = vrot.lane.b32.xlu0 %v443, 120
        %v2713 = vpop.permute.xlu0 %2712
        %2716 = vrot.lane.b32.xlu0 %v453, 122
        %v2717 = vpop.permute.xlu0 %2716
        %2718 = vrot.lane.b32.xlu0 %v455, 122
        %v2719 = vpop.permute.xlu0 %2718
        %2722 = vrot.lane.b32.xlu0 %v465, 124
        %v2723 = vpop.permute.xlu0 %2722
        %2724 = vrot.lane.b32.xlu0 %v467, 124
        %v2725 = vpop.permute.xlu0 %2724
        %2728 = vrot.lane.b32.xlu0 %v477, 126
        %v2729 = vpop.permute.xlu0 %2728
        %2730 = vrot.lane.b32.xlu0 %v479, 126
        %v2731 = vpop.permute.xlu0 %2730
        %v2734 = vsel %vm549, %v2687, %v2693
        %v2735 = vsel %vm549, %v2689, %v2695
        %v2736 = vsel %vm552, %v2734, %v2699
        %v2737 = vsel %vm552, %v2735, %v2701
        %v2738 = vsel %vm555, %v2736, %v2705
        %v2739 = vsel %vm555, %v2737, %v2707
        %v2740 = vsel %vm558, %v2738, %v2711
        %v2741 = vsel %vm558, %v2739, %v2713
        %v2742 = vsel %vm561, %v2740, %v2717
        %v2743 = vsel %vm561, %v2741, %v2719
        %v2744 = vsel %vm564, %v2742, %v2723
        %v2745 = vsel %vm564, %v2743, %v2725
        %v2746 = vsel %vm567, %v2744, %v2729
        %v2747 = vsel %vm567, %v2745, %v2731
        %v2748 = vsel %vm570, %v2746, %v395
        %v2749 = vsel %vm570, %v2747, %v396
        %v2750 = vsel %vm573, %v2748, %v411
        %v2751 = vsel %vm573, %v2749, %v598
        %v2752 = vsel %vm576, %v2750, %v423
        %v2753 = vsel %vm576, %v2751, %v606
        %v2754 = vsel %vm579, %v2752, %v435
        %v2755 = vsel %vm579, %v2753, %v614
        %v2756 = vsel %vm582, %v2754, %v447
        %v2757 = vsel %vm582, %v2755, %v622
        %v2758 = vsel %vm585, %v2756, %v459
        %v2759 = vsel %vm585, %v2757, %v630
        %v2760 = vsel %vm588, %v2758, %v471
        %v2761 = vsel %vm588, %v2759, %v638
        %v2762 = vsel %vm591, %v2760, %v483
        %v2763 = vsel %vm591, %v2761, %v646
        %2764 = vrot.lane.b32.xlu0 %v396, 112
        %v2765 = vpop.permute.xlu0 %2764
        %2766 = vrot.lane.b32.xlu0 %v397, 112
        %v2767 = vpop.permute.xlu0 %2766
        %2770 = vrot.lane.b32.xlu0 %v494, 114
        %v2771 = vpop.permute.xlu0 %2770
        %2772 = vrot.lane.b32.xlu0 %v596, 114
        %v2773 = vpop.permute.xlu0 %2772
        %2776 = vrot.lane.b32.xlu0 %v502, 116
        %v2777 = vpop.permute.xlu0 %2776
        %2778 = vrot.lane.b32.xlu0 %v604, 116
        %v2779 = vpop.permute.xlu0 %2778
        %2782 = vrot.lane.b32.xlu0 %v510, 118
        %v2783 = vpop.permute.xlu0 %2782
        %2784 = vrot.lane.b32.xlu0 %v612, 118
        %v2785 = vpop.permute.xlu0 %2784
        %2788 = vrot.lane.b32.xlu0 %v518, 120
        %v2789 = vpop.permute.xlu0 %2788
        %2790 = vrot.lane.b32.xlu0 %v620, 120
        %v2791 = vpop.permute.xlu0 %2790
        %2794 = vrot.lane.b32.xlu0 %v526, 122
        %v2795 = vpop.permute.xlu0 %2794
        %2796 = vrot.lane.b32.xlu0 %v628, 122
        %v2797 = vpop.permute.xlu0 %2796
        %2800 = vrot.lane.b32.xlu0 %v534, 124
        %v2801 = vpop.permute.xlu0 %2800
        %2802 = vrot.lane.b32.xlu0 %v636, 124
        %v2803 = vpop.permute.xlu0 %2802
        %2806 = vrot.lane.b32.xlu0 %v542, 126
        %v2807 = vpop.permute.xlu0 %2806
        %2808 = vrot.lane.b32.xlu0 %v644, 126
        %v2809 = vpop.permute.xlu0 %2808
        %v2812 = vsel %vm549, %v2765, %v2771
        %v2813 = vsel %vm549, %v2767, %v2773
        %v2814 = vsel %vm552, %v2812, %v2777
        %v2815 = vsel %vm552, %v2813, %v2779
        %v2816 = vsel %vm555, %v2814, %v2783
        %v2817 = vsel %vm555, %v2815, %v2785
        %v2818 = vsel %vm558, %v2816, %v2789
        %v2819 = vsel %vm558, %v2817, %v2791
        %v2820 = vsel %vm561, %v2818, %v2795
        %v2821 = vsel %vm561, %v2819, %v2797
        %v2822 = vsel %vm564, %v2820, %v2801
        %v2823 = vsel %vm564, %v2821, %v2803
        %v2824 = vsel %vm567, %v2822, %v2807
        %v2825 = vsel %vm567, %v2823, %v2809
        %v2826 = vsel %vm570, %v2824, %v397
        %v2827 = vsel %vm570, %v2825, %v398
        %2830 = vrot.lane.b32.xlu0 %v2826, 32
        %v2831 = vpop.permute.xlu0 %2830
        %2832 = vrot.lane.b32.xlu0 %v2827, 32
        %v2833 = vpop.permute.xlu0 %2832
        %v2836 = vsel %vm681, %v2762, %v2831
        %v2837 = vsel %vm681, %v2763, %v2833
        %v2838 = vpack.c.bf16 %v2837, %v2836
        %s2839 = scalar_lea.vmem [#allocation5], 224
        %v2840 = vld [vmem:[%s2839] sm:$0xf]
        %v2841 = vld [vmem:[%s2839 + $0x4] sm:$0xf]
        %v2842 = vld [vmem:[%s2839 + $0x8] sm:$0xf]
        %v2843 = vld [vmem:[%s2839 + $0xc] sm:$0xf]
        %v2844 = vld [vmem:[%s2839 + $0x10] sm:$0xf]
        %v2845 = vld [vmem:[%s2839 + $0x14] sm:$0xf]
        %v2846 = vld [vmem:[%s2839 + $0x18] sm:$0x1]
        %v2854 = vunpack.c.l.b16 %v2840
        %v2855 = vunpack.c.l.b16 %v2841
        %v2856 = vunpack.c.l.b16 %v2842
        %v2857 = vunpack.c.l.b16 %v2843
        %v2858 = vunpack.c.l.b16 %v2844
        %v2859 = vunpack.c.l.b16 %v2845
        %v2860 = vunpack.c.l.b16 %v2846
        %v2861 = vpack.c.b16 %v2855, %v2854
        %v2862 = vpack.c.b16 %v2857, %v2856
        %v2863 = vpack.c.b16 %v2859, %v2858
        %v2864 = vpack.c.b16 %v2860, %v2860
        %v2869 = vsel %vm713, %v2838, 0
        %v2872 = vsel %vm474, %v2864, 0
        %2874 = vmatprep.subr.bf16.mxu0 0
        %2875 = vmatpush1.bf16.msra.mxu0 %v2861
        %2876 = vmatprep.subr.bf16.mxu0 0
        %2877 = vmatpush1.bf16.msra.mxu0 %v2862
        %2878 = vmatprep.subr.bf16.mxu0 0
        %2879 = vmatpush1.bf16.msra.mxu0 %v2863
        %2880 = vmatprep.subr.bf16.mxu0 0
        %2881 = vmatpush1.bf16.msra.mxu0 %v2872
        %2882 = vmatprep.subr.bf16.mxu0 0
        %2883 = vmatpush1.bf16.msra.mxu0 0
        %2884 = vmatprep.subr.bf16.mxu0 0
        %2885 = vmatpush1.bf16.msra.mxu0 0
        %2886 = vmatprep.subr.bf16.mxu0 0
        %2887 = vmatpush1.bf16.msra.mxu0 0
        %2888 = vmatprep.subr.bf16.mxu0 0
        %2889 = vmatpush1.bf16.msra.mxu0 0
        %2890 = vmatprep.subr.bf16.mxu0 0
        %2891 = vmatpush1.bf16.msra.mxu0 0
        %2892 = vmatprep.subr.bf16.mxu0 0
        %2893 = vmatpush1.bf16.msra.mxu0 0
        %2894 = vmatprep.subr.bf16.mxu0 0
        %2895 = vmatpush1.bf16.msra.mxu0 0
        %2896 = vmatprep.subr.bf16.mxu0 0
        %2897 = vmatpush1.bf16.msra.mxu0 0
        %2898 = vmatprep.subr.bf16.mxu0 0
        %2899 = vmatpush1.bf16.msra.mxu0 0
        %2900 = vmatprep.subr.bf16.mxu0 0
        %2901 = vmatpush1.bf16.msra.mxu0 0
        %2902 = vmatprep.subr.bf16.mxu0 0
        %2903 = vmatpush1.bf16.msra.mxu0 0
        %2904 = vmatprep.subr.bf16.mxu0 0
        %2905 = vmatpush1.bf16.msra.mxu0 0
        %2906 = vmatprep.mubr.bf16.mxu0 0
        %2907 = vmatmul.mubr.bf16.gmra.mrb[0].mxu0 %v2869
        %v2908 = vpop.f32.mrb[0].mxu0
        %v2909 = vadd.f32 0.0, %v2908
        %v2910 = vpop.f32.mrb[0].mxu0
        %v2911 = vpop.f32.mrb[0].mxu0
        %v2912 = vadd.f32 0.0, %v2911
        %v2913 = vpop.f32.mrb[0].mxu0
        %2914 = vdwg.mxu0
        %2915 = vrot.lane.b32.xlu0 %v394, 110
        %v2916 = vpop.permute.xlu0 %2915
        %2917 = vrot.lane.b32.xlu0 %v395, 110
        %v2918 = vpop.permute.xlu0 %2917
        %2921 = vrot.lane.b32.xlu0 %v405, 112
        %v2922 = vpop.permute.xlu0 %2921
        %2923 = vrot.lane.b32.xlu0 %v407, 112
        %v2924 = vpop.permute.xlu0 %2923
        %2927 = vrot.lane.b32.xlu0 %v417, 114
        %v2928 = vpop.permute.xlu0 %2927
        %2929 = vrot.lane.b32.xlu0 %v419, 114
        %v2930 = vpop.permute.xlu0 %2929
        %2933 = vrot.lane.b32.xlu0 %v429, 116
        %v2934 = vpop.permute.xlu0 %2933
        %2935 = vrot.lane.b32.xlu0 %v431, 116
        %v2936 = vpop.permute.xlu0 %2935
        %2939 = vrot.lane.b32.xlu0 %v441, 118
        %v2940 = vpop.permute.xlu0 %2939
        %2941 = vrot.lane.b32.xlu0 %v443, 118
        %v2942 = vpop.permute.xlu0 %2941
        %2945 = vrot.lane.b32.xlu0 %v453, 120
        %v2946 = vpop.permute.xlu0 %2945
        %2947 = vrot.lane.b32.xlu0 %v455, 120
        %v2948 = vpop.permute.xlu0 %2947
        %2951 = vrot.lane.b32.xlu0 %v465, 122
        %v2952 = vpop.permute.xlu0 %2951
        %2953 = vrot.lane.b32.xlu0 %v467, 122
        %v2954 = vpop.permute.xlu0 %2953
        %2957 = vrot.lane.b32.xlu0 %v477, 124
        %v2958 = vpop.permute.xlu0 %2957
        %2959 = vrot.lane.b32.xlu0 %v479, 124
        %v2960 = vpop.permute.xlu0 %2959
        %v2963 = vsel %vm549, %v2916, %v2922
        %v2964 = vsel %vm549, %v2918, %v2924
        %v2965 = vsel %vm552, %v2963, %v2928
        %v2966 = vsel %vm552, %v2964, %v2930
        %v2967 = vsel %vm555, %v2965, %v2934
        %v2968 = vsel %vm555, %v2966, %v2936
        %v2969 = vsel %vm558, %v2967, %v2940
        %v2970 = vsel %vm558, %v2968, %v2942
        %v2971 = vsel %vm561, %v2969, %v2946
        %v2972 = vsel %vm561, %v2970, %v2948
        %v2973 = vsel %vm564, %v2971, %v2952
        %v2974 = vsel %vm564, %v2972, %v2954
        %v2975 = vsel %vm567, %v2973, %v2958
        %v2976 = vsel %vm567, %v2974, %v2960
        %v2977 = vsel %vm570, %v2975, %v764
        %v2978 = vsel %vm570, %v2976, %v884
        %v2979 = vsel %vm573, %v2977, %v407
        %v2980 = vsel %vm573, %v2978, %v494
        %v2981 = vsel %vm576, %v2979, %v772
        %v2982 = vsel %vm576, %v2980, %v892
        %v2983 = vsel %vm579, %v2981, %v778
        %v2984 = vsel %vm579, %v2982, %v898
        %v2985 = vsel %vm582, %v2983, %v784
        %v2986 = vsel %vm582, %v2984, %v904
        %v2987 = vsel %vm585, %v2985, %v790
        %v2988 = vsel %vm585, %v2986, %v910
        %v2989 = vsel %vm588, %v2987, %v796
        %v2990 = vsel %vm588, %v2988, %v916
        %v2991 = vsel %vm591, %v2989, %v802
        %v2992 = vsel %vm591, %v2990, %v922
        %2993 = vrot.lane.b32.xlu0 %v396, 110
        %v2994 = vpop.permute.xlu0 %2993
        %2995 = vrot.lane.b32.xlu0 %v397, 110
        %v2996 = vpop.permute.xlu0 %2995
        %2999 = vrot.lane.b32.xlu0 %v494, 112
        %v3000 = vpop.permute.xlu0 %2999
        %3001 = vrot.lane.b32.xlu0 %v596, 112
        %v3002 = vpop.permute.xlu0 %3001
        %3005 = vrot.lane.b32.xlu0 %v502, 114
        %v3006 = vpop.permute.xlu0 %3005
        %3007 = vrot.lane.b32.xlu0 %v604, 114
        %v3008 = vpop.permute.xlu0 %3007
        %3011 = vrot.lane.b32.xlu0 %v510, 116
        %v3012 = vpop.permute.xlu0 %3011
        %3013 = vrot.lane.b32.xlu0 %v612, 116
        %v3014 = vpop.permute.xlu0 %3013
        %3017 = vrot.lane.b32.xlu0 %v518, 118
        %v3018 = vpop.permute.xlu0 %3017
        %3019 = vrot.lane.b32.xlu0 %v620, 118
        %v3020 = vpop.permute.xlu0 %3019
        %3023 = vrot.lane.b32.xlu0 %v526, 120
        %v3024 = vpop.permute.xlu0 %3023
        %3025 = vrot.lane.b32.xlu0 %v628, 120
        %v3026 = vpop.permute.xlu0 %3025
        %3029 = vrot.lane.b32.xlu0 %v534, 122
        %v3030 = vpop.permute.xlu0 %3029
        %3031 = vrot.lane.b32.xlu0 %v636, 122
        %v3032 = vpop.permute.xlu0 %3031
        %3035 = vrot.lane.b32.xlu0 %v542, 124
        %v3036 = vpop.permute.xlu0 %3035
        %3037 = vrot.lane.b32.xlu0 %v644, 124
        %v3038 = vpop.permute.xlu0 %3037
        %3041 = vrot.lane.b32.xlu0 %v398, 126
        %v3042 = vpop.permute.xlu0 %3041
        %v3044 = vsel %vm549, %v2994, %v3000
        %v3045 = vsel %vm549, %v2996, %v3002
        %v3046 = vsel %vm552, %v3044, %v3006
        %v3047 = vsel %vm552, %v3045, %v3008
        %v3048 = vsel %vm555, %v3046, %v3012
        %v3049 = vsel %vm555, %v3047, %v3014
        %v3050 = vsel %vm558, %v3048, %v3018
        %v3051 = vsel %vm558, %v3049, %v3020
        %v3052 = vsel %vm561, %v3050, %v3024
        %v3053 = vsel %vm561, %v3051, %v3026
        %v3054 = vsel %vm564, %v3052, %v3030
        %v3055 = vsel %vm564, %v3053, %v3032
        %v3056 = vsel %vm567, %v3054, %v3036
        %v3057 = vsel %vm567, %v3055, %v3038
        %v3058 = vsel %vm570, %v3056, %v886
        %v3059 = vsel %vm570, %v3057, %v3042
        %3062 = vrot.lane.b32.xlu0 %v3058, 32
        %v3063 = vpop.permute.xlu0 %3062
        %3064 = vrot.lane.b32.xlu0 %v3059, 32
        %v3065 = vpop.permute.xlu0 %3064
        %v3068 = vsel %vm681, %v2991, %v3063
        %v3069 = vsel %vm681, %v2992, %v3065
        %v3070 = vpack.c.bf16 %v3069, %v3068
        %s3071 = scalar_lea.vmem [#allocation5], 252
        %v3072 = vld [vmem:[%s3071] sm:$0xf]
        %v3073 = vld [vmem:[%s3071 + $0x4] sm:$0xf]
        %v3074 = vld [vmem:[%s3071 + $0x8] sm:$0xf]
        %v3075 = vld [vmem:[%s3071 + $0xc] sm:$0xf]
        %v3076 = vld [vmem:[%s3071 + $0x10] sm:$0xf]
        %v3077 = vld [vmem:[%s3071 + $0x14] sm:$0xf]
        %v3078 = vld [vmem:[%s3071 + $0x18] sm:$0x1]
        %v3086 = vunpack.c.l.b16 %v3072
        %v3087 = vunpack.c.l.b16 %v3073
        %v3088 = vunpack.c.l.b16 %v3074
        %v3089 = vunpack.c.l.b16 %v3075
        %v3090 = vunpack.c.l.b16 %v3076
        %v3091 = vunpack.c.l.b16 %v3077
        %v3092 = vunpack.c.l.b16 %v3078
        %v3093 = vpack.c.b16 %v3087, %v3086
        %v3094 = vpack.c.b16 %v3089, %v3088
        %v3095 = vpack.c.b16 %v3091, %v3090
        %v3096 = vpack.c.b16 %v3092, %v3092
        %v3101 = vsel %vm713, %v3070, 0
        %v3104 = vsel %vm474, %v3096, 0
        %3106 = vmatprep.subr.bf16.mxu0 0
        %3107 = vmatpush1.bf16.msra.mxu0 %v3093
        %3108 = vmatprep.subr.bf16.mxu0 0
        %3109 = vmatpush1.bf16.msra.mxu0 %v3094
        %3110 = vmatprep.subr.bf16.mxu0 0
        %3111 = vmatpush1.bf16.msra.mxu0 %v3095
        %3112 = vmatprep.subr.bf16.mxu0 0
        %3113 = vmatpush1.bf16.msra.mxu0 %v3104
        %3114 = vmatprep.subr.bf16.mxu0 0
        %3115 = vmatpush1.bf16.msra.mxu0 0
        %3116 = vmatprep.subr.bf16.mxu0 0
        %3117 = vmatpush1.bf16.msra.mxu0 0
        %3118 = vmatprep.subr.bf16.mxu0 0
        %3119 = vmatpush1.bf16.msra.mxu0 0
        %3120 = vmatprep.subr.bf16.mxu0 0
        %3121 = vmatpush1.bf16.msra.mxu0 0
        %3122 = vmatprep.subr.bf16.mxu0 0
        %3123 = vmatpush1.bf16.msra.mxu0 0
        %3124 = vmatprep.subr.bf16.mxu0 0
        %3125 = vmatpush1.bf16.msra.mxu0 0
        %3126 = vmatprep.subr.bf16.mxu0 0
        %3127 = vmatpush1.bf16.msra.mxu0 0
        %3128 = vmatprep.subr.bf16.mxu0 0
        %3129 = vmatpush1.bf16.msra.mxu0 0
        %3130 = vmatprep.subr.bf16.mxu0 0
        %3131 = vmatpush1.bf16.msra.mxu0 0
        %3132 = vmatprep.subr.bf16.mxu0 0
        %3133 = vmatpush1.bf16.msra.mxu0 0
        %3134 = vmatprep.subr.bf16.mxu0 0
        %3135 = vmatpush1.bf16.msra.mxu0 0
        %3136 = vmatprep.subr.bf16.mxu0 0
        %3137 = vmatpush1.bf16.msra.mxu0 0
        %3138 = vmatprep.mubr.bf16.mxu0 0
        %3139 = vmatmul.mubr.bf16.gmra.mrb[0].mxu0 %v3101
        %v3140 = vpop.f32.mrb[0].mxu0
        %v3141 = vadd.f32 0.0, %v3140
        %v3142 = vpop.f32.mrb[0].mxu0
        %v3143 = vpop.f32.mrb[0].mxu0
        %v3144 = vadd.f32 0.0, %v3143
        %v3145 = vpop.f32.mrb[0].mxu0
        %3146 = vdwg.mxu0
        %3147 = vrot.lane.b32.xlu0 %v394, 108
        %v3148 = vpop.permute.xlu0 %3147
        %3149 = vrot.lane.b32.xlu0 %v395, 108
        %v3150 = vpop.permute.xlu0 %3149
        %3153 = vrot.lane.b32.xlu0 %v405, 110
        %v3154 = vpop.permute.xlu0 %3153
        %3155 = vrot.lane.b32.xlu0 %v407, 110
        %v3156 = vpop.permute.xlu0 %3155
        %3159 = vrot.lane.b32.xlu0 %v417, 112
        %v3160 = vpop.permute.xlu0 %3159
        %3161 = vrot.lane.b32.xlu0 %v419, 112
        %v3162 = vpop.permute.xlu0 %3161
        %3165 = vrot.lane.b32.xlu0 %v429, 114
        %v3166 = vpop.permute.xlu0 %3165
        %3167 = vrot.lane.b32.xlu0 %v431, 114
        %v3168 = vpop.permute.xlu0 %3167
        %3171 = vrot.lane.b32.xlu0 %v441, 116
        %v3172 = vpop.permute.xlu0 %3171
        %3173 = vrot.lane.b32.xlu0 %v443, 116
        %v3174 = vpop.permute.xlu0 %3173
        %3177 = vrot.lane.b32.xlu0 %v453, 118
        %v3178 = vpop.permute.xlu0 %3177
        %3179 = vrot.lane.b32.xlu0 %v455, 118
        %v3180 = vpop.permute.xlu0 %3179
        %3183 = vrot.lane.b32.xlu0 %v465, 120
        %v3184 = vpop.permute.xlu0 %3183
        %3185 = vrot.lane.b32.xlu0 %v467, 120
        %v3186 = vpop.permute.xlu0 %3185
        %3189 = vrot.lane.b32.xlu0 %v477, 122
        %v3190 = vpop.permute.xlu0 %3189
        %3191 = vrot.lane.b32.xlu0 %v479, 122
        %v3192 = vpop.permute.xlu0 %3191
        %v3195 = vsel %vm549, %v3148, %v3154
        %v3196 = vsel %vm549, %v3150, %v3156
        %v3197 = vsel %vm552, %v3195, %v3160
        %v3198 = vsel %vm552, %v3196, %v3162
        %v3199 = vsel %vm555, %v3197, %v3166
        %v3200 = vsel %vm555, %v3198, %v3168
        %v3201 = vsel %vm558, %v3199, %v3172
        %v3202 = vsel %vm558, %v3200, %v3174
        %v3203 = vsel %vm561, %v3201, %v3178
        %v3204 = vsel %vm561, %v3202, %v3180
        %v3205 = vsel %vm564, %v3203, %v3184
        %v3206 = vsel %vm564, %v3204, %v3186
        %v3207 = vsel %vm567, %v3205, %v3190
        %v3208 = vsel %vm567, %v3206, %v3192
        %v3209 = vsel %vm570, %v3207, %v1039
        %v3210 = vsel %vm570, %v3208, %v1159
        %v3211 = vsel %vm573, %v3209, %v1045
        %v3212 = vsel %vm573, %v3210, %v1165
        %v3213 = vsel %vm576, %v3211, %v419
        %v3214 = vsel %vm576, %v3212, %v502
        %v3215 = vsel %vm579, %v3213, %v1053
        %v3216 = vsel %vm579, %v3214, %v1173
        %v3217 = vsel %vm582, %v3215, %v1059
        %v3218 = vsel %vm582, %v3216, %v1179
        %v3219 = vsel %vm585, %v3217, %v1065
        %v3220 = vsel %vm585, %v3218, %v1185
        %v3221 = vsel %vm588, %v3219, %v1071
        %v3222 = vsel %vm588, %v3220, %v1191
        %v3223 = vsel %vm591, %v3221, %v1077
        %v3224 = vsel %vm591, %v3222, %v1197
        %3225 = vrot.lane.b32.xlu0 %v396, 108
        %v3226 = vpop.permute.xlu0 %3225
        %3227 = vrot.lane.b32.xlu0 %v397, 108
        %v3228 = vpop.permute.xlu0 %3227
        %3231 = vrot.lane.b32.xlu0 %v494, 110
        %v3232 = vpop.permute.xlu0 %3231
        %3233 = vrot.lane.b32.xlu0 %v596, 110
        %v3234 = vpop.permute.xlu0 %3233
        %3237 = vrot.lane.b32.xlu0 %v502, 112
        %v3238 = vpop.permute.xlu0 %3237
        %3239 = vrot.lane.b32.xlu0 %v604, 112
        %v3240 = vpop.permute.xlu0 %3239
        %3243 = vrot.lane.b32.xlu0 %v510, 114
        %v3244 = vpop.permute.xlu0 %3243
        %3245 = vrot.lane.b32.xlu0 %v612, 114
        %v3246 = vpop.permute.xlu0 %3245
        %3249 = vrot.lane.b32.xlu0 %v518, 116
        %v3250 = vpop.permute.xlu0 %3249
        %3251 = vrot.lane.b32.xlu0 %v620, 116
        %v3252 = vpop.permute.xlu0 %3251
        %3255 = vrot.lane.b32.xlu0 %v526, 118
        %v3256 = vpop.permute.xlu0 %3255
        %3257 = vrot.lane.b32.xlu0 %v628, 118
        %v3258 = vpop.permute.xlu0 %3257
        %3261 = vrot.lane.b32.xlu0 %v534, 120
        %v3262 = vpop.permute.xlu0 %3261
        %3263 = vrot.lane.b32.xlu0 %v636, 120
        %v3264 = vpop.permute.xlu0 %3263
        %3267 = vrot.lane.b32.xlu0 %v542, 122
        %v3268 = vpop.permute.xlu0 %3267
        %3269 = vrot.lane.b32.xlu0 %v644, 122
        %v3270 = vpop.permute.xlu0 %3269
        %3273 = vrot.lane.b32.xlu0 %v398, 124
        %v3274 = vpop.permute.xlu0 %3273
        %v3276 = vsel %vm549, %v3226, %v3232
        %v3277 = vsel %vm549, %v3228, %v3234
        %v3278 = vsel %vm552, %v3276, %v3238
        %v3279 = vsel %vm552, %v3277, %v3240
        %v3280 = vsel %vm555, %v3278, %v3244
        %v3281 = vsel %vm555, %v3279, %v3246
        %v3282 = vsel %vm558, %v3280, %v3250
        %v3283 = vsel %vm558, %v3281, %v3252
        %v3284 = vsel %vm561, %v3282, %v3256
        %v3285 = vsel %vm561, %v3283, %v3258
        %v3286 = vsel %vm564, %v3284, %v3262
        %v3287 = vsel %vm564, %v3285, %v3264
        %v3288 = vsel %vm567, %v3286, %v3268
        %v3289 = vsel %vm567, %v3287, %v3270
        %v3290 = vsel %vm570, %v3288, %v1161
        %v3291 = vsel %vm570, %v3289, %v3274
        %3294 = vrot.lane.b32.xlu0 %v3290, 32
        %v3295 = vpop.permute.xlu0 %3294
        %3296 = vrot.lane.b32.xlu0 %v3291, 32
        %v3297 = vpop.permute.xlu0 %3296
        %v3300 = vsel %vm681, %v3223, %v3295
        %v3301 = vsel %vm681, %v3224, %v3297
        %v3302 = vpack.c.bf16 %v3301, %v3300
        %s3303 = scalar_lea.vmem [#allocation5], 280
        %v3304 = vld [vmem:[%s3303] sm:$0xf]
        %v3305 = vld [vmem:[%s3303 + $0x4] sm:$0xf]
        %v3306 = vld [vmem:[%s3303 + $0x8] sm:$0xf]
        %v3307 = vld [vmem:[%s3303 + $0xc] sm:$0xf]
        %v3308 = vld [vmem:[%s3303 + $0x10] sm:$0xf]
        %v3309 = vld [vmem:[%s3303 + $0x14] sm:$0xf]
        %v3310 = vld [vmem:[%s3303 + $0x18] sm:$0x1]
        %v3318 = vunpack.c.l.b16 %v3304
        %v3319 = vunpack.c.l.b16 %v3305
        %v3320 = vunpack.c.l.b16 %v3306
        %v3321 = vunpack.c.l.b16 %v3307
        %v3322 = vunpack.c.l.b16 %v3308
        %v3323 = vunpack.c.l.b16 %v3309
        %v3324 = vunpack.c.l.b16 %v3310
        %v3325 = vpack.c.b16 %v3319, %v3318
        %v3326 = vpack.c.b16 %v3321, %v3320
        %v3327 = vpack.c.b16 %v3323, %v3322
        %v3328 = vpack.c.b16 %v3324, %v3324
        %v3333 = vsel %vm713, %v3302, 0
        %v3336 = vsel %vm474, %v3328, 0
        %3338 = vmatprep.subr.bf16.mxu0 0
        %3339 = vmatpush1.bf16.msra.mxu0 %v3325
        %3340 = vmatprep.subr.bf16.mxu0 0
        %3341 = vmatpush1.bf16.msra.mxu0 %v3326
        %3342 = vmatprep.subr.bf16.mxu0 0
        %3343 = vmatpush1.bf16.msra.mxu0 %v3327
        %3344 = vmatprep.subr.bf16.mxu0 0
        %3345 = vmatpush1.bf16.msra.mxu0 %v3336
        %3346 = vmatprep.subr.bf16.mxu0 0
        %3347 = vmatpush1.bf16.msra.mxu0 0
        %3348 = vmatprep.subr.bf16.mxu0 0
        %3349 = vmatpush1.bf16.msra.mxu0 0
        %3350 = vmatprep.subr.bf16.mxu0 0
        %3351 = vmatpush1.bf16.msra.mxu0 0
        %3352 = vmatprep.subr.bf16.mxu0 0
        %3353 = vmatpush1.bf16.msra.mxu0 0
        %3354 = vmatprep.subr.bf16.mxu0 0
        %3355 = vmatpush1.bf16.msra.mxu0 0
        %3356 = vmatprep.subr.bf16.mxu0 0
        %3357 = vmatpush1.bf16.msra.mxu0 0
        %3358 = vmatprep.subr.bf16.mxu0 0
        %3359 = vmatpush1.bf16.msra.mxu0 0
        %3360 = vmatprep.subr.bf16.mxu0 0
        %3361 = vmatpush1.bf16.msra.mxu0 0
        %3362 = vmatprep.subr.bf16.mxu0 0
        %3363 = vmatpush1.bf16.msra.mxu0 0
        %3364 = vmatprep.subr.bf16.mxu0 0
        %3365 = vmatpush1.bf16.msra.mxu0 0
        %3366 = vmatprep.subr.bf16.mxu0 0
        %3367 = vmatpush1.bf16.msra.mxu0 0
        %3368 = vmatprep.subr.bf16.mxu0 0
        %3369 = vmatpush1.bf16.msra.mxu0 0
        %3370 = vmatprep.mubr.bf16.mxu0 0
        %3371 = vmatmul.mubr.bf16.gmra.mrb[0].mxu0 %v3333
        %v3372 = vpop.f32.mrb[0].mxu0
        %v3373 = vadd.f32 0.0, %v3372
        %v3374 = vpop.f32.mrb[0].mxu0
        %v3375 = vpop.f32.mrb[0].mxu0
        %v3376 = vadd.f32 0.0, %v3375
        %v3377 = vpop.f32.mrb[0].mxu0
        %3378 = vdwg.mxu0
        %3379 = vrot.lane.b32.xlu0 %v394, 106
        %v3380 = vpop.permute.xlu0 %3379
        %3381 = vrot.lane.b32.xlu0 %v395, 106
        %v3382 = vpop.permute.xlu0 %3381
        %3385 = vrot.lane.b32.xlu0 %v405, 108
        %v3386 = vpop.permute.xlu0 %3385
        %3387 = vrot.lane.b32.xlu0 %v407, 108
        %v3388 = vpop.permute.xlu0 %3387
        %3391 = vrot.lane.b32.xlu0 %v417, 110
        %v3392 = vpop.permute.xlu0 %3391
        %3393 = vrot.lane.b32.xlu0 %v419, 110
        %v3394 = vpop.permute.xlu0 %3393
        %3397 = vrot.lane.b32.xlu0 %v429, 112
        %v3398 = vpop.permute.xlu0 %3397
        %3399 = vrot.lane.b32.xlu0 %v431, 112
        %v3400 = vpop.permute.xlu0 %3399
        %3403 = vrot.lane.b32.xlu0 %v441, 114
        %v3404 = vpop.permute.xlu0 %3403
        %3405 = vrot.lane.b32.xlu0 %v443, 114
        %v3406 = vpop.permute.xlu0 %3405
        %3409 = vrot.lane.b32.xlu0 %v453, 116
        %v3410 = vpop.permute.xlu0 %3409
        %3411 = vrot.lane.b32.xlu0 %v455, 116
        %v3412 = vpop.permute.xlu0 %3411
        %3415 = vrot.lane.b32.xlu0 %v465, 118
        %v3416 = vpop.permute.xlu0 %3415
        %3417 = vrot.lane.b32.xlu0 %v467, 118
        %v3418 = vpop.permute.xlu0 %3417
        %3421 = vrot.lane.b32.xlu0 %v477, 120
        %v3422 = vpop.permute.xlu0 %3421
        %3423 = vrot.lane.b32.xlu0 %v479, 120
        %v3424 = vpop.permute.xlu0 %3423
        %v3427 = vsel %vm549, %v3380, %v3386
        %v3428 = vsel %vm549, %v3382, %v3388
        %v3429 = vsel %vm552, %v3427, %v3392
        %v3430 = vsel %vm552, %v3428, %v3394
        %v3431 = vsel %vm555, %v3429, %v3398
        %v3432 = vsel %vm555, %v3430, %v3400
        %v3433 = vsel %vm558, %v3431, %v3404
        %v3434 = vsel %vm558, %v3432, %v3406
        %v3435 = vsel %vm561, %v3433, %v3410
        %v3436 = vsel %vm561, %v3434, %v3412
        %v3437 = vsel %vm564, %v3435, %v3416
        %v3438 = vsel %vm564, %v3436, %v3418
        %v3439 = vsel %vm567, %v3437, %v3422
        %v3440 = vsel %vm567, %v3438, %v3424
        %v3441 = vsel %vm570, %v3439, %v1314
        %v3442 = vsel %vm570, %v3440, %v1434
        %v3443 = vsel %vm573, %v3441, %v1320
        %v3444 = vsel %vm573, %v3442, %v1440
        %v3445 = vsel %vm576, %v3443, %v1326
        %v3446 = vsel %vm576, %v3444, %v1446
        %v3447 = vsel %vm579, %v3445, %v431
        %v3448 = vsel %vm579, %v3446, %v510
        %v3449 = vsel %vm582, %v3447, %v1334
        %v3450 = vsel %vm582, %v3448, %v1454
        %v3451 = vsel %vm585, %v3449, %v1340
        %v3452 = vsel %vm585, %v3450, %v1460
        %v3453 = vsel %vm588, %v3451, %v1346
        %v3454 = vsel %vm588, %v3452, %v1466
        %v3455 = vsel %vm591, %v3453, %v1352
        %v3456 = vsel %vm591, %v3454, %v1472
        %3457 = vrot.lane.b32.xlu0 %v396, 106
        %v3458 = vpop.permute.xlu0 %3457
        %3459 = vrot.lane.b32.xlu0 %v397, 106
        %v3460 = vpop.permute.xlu0 %3459
        %3463 = vrot.lane.b32.xlu0 %v494, 108
        %v3464 = vpop.permute.xlu0 %3463
        %3465 = vrot.lane.b32.xlu0 %v596, 108
        %v3466 = vpop.permute.xlu0 %3465
        %3469 = vrot.lane.b32.xlu0 %v502, 110
        %v3470 = vpop.permute.xlu0 %3469
        %3471 = vrot.lane.b32.xlu0 %v604, 110
        %v3472 = vpop.permute.xlu0 %3471
        %3475 = vrot.lane.b32.xlu0 %v510, 112
        %v3476 = vpop.permute.xlu0 %3475
        %3477 = vrot.lane.b32.xlu0 %v612, 112
        %v3478 = vpop.permute.xlu0 %3477
        %3481 = vrot.lane.b32.xlu0 %v518, 114
        %v3482 = vpop.permute.xlu0 %3481
        %3483 = vrot.lane.b32.xlu0 %v620, 114
        %v3484 = vpop.permute.xlu0 %3483
        %3487 = vrot.lane.b32.xlu0 %v526, 116
        %v3488 = vpop.permute.xlu0 %3487
        %3489 = vrot.lane.b32.xlu0 %v628, 116
        %v3490 = vpop.permute.xlu0 %3489
        %3493 = vrot.lane.b32.xlu0 %v534, 118
        %v3494 = vpop.permute.xlu0 %3493
        %3495 = vrot.lane.b32.xlu0 %v636, 118
        %v3496 = vpop.permute.xlu0 %3495
        %3499 = vrot.lane.b32.xlu0 %v542, 120
        %v3500 = vpop.permute.xlu0 %3499
        %3501 = vrot.lane.b32.xlu0 %v644, 120
        %v3502 = vpop.permute.xlu0 %3501
        %3505 = vrot.lane.b32.xlu0 %v398, 122
        %v3506 = vpop.permute.xlu0 %3505
        %v3508 = vsel %vm549, %v3458, %v3464
        %v3509 = vsel %vm549, %v3460, %v3466
        %v3510 = vsel %vm552, %v3508, %v3470
        %v3511 = vsel %vm552, %v3509, %v3472
        %v3512 = vsel %vm555, %v3510, %v3476
        %v3513 = vsel %vm555, %v3511, %v3478
        %v3514 = vsel %vm558, %v3512, %v3482
        %v3515 = vsel %vm558, %v3513, %v3484
        %v3516 = vsel %vm561, %v3514, %v3488
        %v3517 = vsel %vm561, %v3515, %v3490
        %v3518 = vsel %vm564, %v3516, %v3494
        %v3519 = vsel %vm564, %v3517, %v3496
        %v3520 = vsel %vm567, %v3518, %v3500
        %v3521 = vsel %vm567, %v3519, %v3502
        %v3522 = vsel %vm570, %v3520, %v1436
        %v3523 = vsel %vm570, %v3521, %v3506
        %3526 = vrot.lane.b32.xlu0 %v3522, 32
        %v3527 = vpop.permute.xlu0 %3526
        %3528 = vrot.lane.b32.xlu0 %v3523, 32
        %v3529 = vpop.permute.xlu0 %3528
        %v3532 = vsel %vm681, %v3455, %v3527
        %v3533 = vsel %vm681, %v3456, %v3529
        %v3534 = vpack.c.bf16 %v3533, %v3532
        %s3535 = scalar_lea.vmem [#allocation5], 308
        %v3536 = vld [vmem:[%s3535] sm:$0xf]
        %v3537 = vld [vmem:[%s3535 + $0x4] sm:$0xf]
        %v3538 = vld [vmem:[%s3535 + $0x8] sm:$0xf]
        %v3539 = vld [vmem:[%s3535 + $0xc] sm:$0xf]
        %v3540 = vld [vmem:[%s3535 + $0x10] sm:$0xf]
        %v3541 = vld [vmem:[%s3535 + $0x14] sm:$0xf]
        %v3542 = vld [vmem:[%s3535 + $0x18] sm:$0x1]
        %v3550 = vunpack.c.l.b16 %v3536
        %v3551 = vunpack.c.l.b16 %v3537
        %v3552 = vunpack.c.l.b16 %v3538
        %v3553 = vunpack.c.l.b16 %v3539
        %v3554 = vunpack.c.l.b16 %v3540
        %v3555 = vunpack.c.l.b16 %v3541
        %v3556 = vunpack.c.l.b16 %v3542
        %v3557 = vpack.c.b16 %v3551, %v3550
        %v3558 = vpack.c.b16 %v3553, %v3552
        %v3559 = vpack.c.b16 %v3555, %v3554
        %v3560 = vpack.c.b16 %v3556, %v3556
        %v3565 = vsel %vm713, %v3534, 0
        %v3568 = vsel %vm474, %v3560, 0
        %3570 = vmatprep.subr.bf16.mxu0 0
        %3571 = vmatpush1.bf16.msra.mxu0 %v3557
        %3572 = vmatprep.subr.bf16.mxu0 0
        %3573 = vmatpush1.bf16.msra.mxu0 %v3558
        %3574 = vmatprep.subr.bf16.mxu0 0
        %3575 = vmatpush1.bf16.msra.mxu0 %v3559
        %3576 = vmatprep.subr.bf16.mxu0 0
        %3577 = vmatpush1.bf16.msra.mxu0 %v3568
        %3578 = vmatprep.subr.bf16.mxu0 0
        %3579 = vmatpush1.bf16.msra.mxu0 0
        %3580 = vmatprep.subr.bf16.mxu0 0
        %3581 = vmatpush1.bf16.msra.mxu0 0
        %3582 = vmatprep.subr.bf16.mxu0 0
        %3583 = vmatpush1.bf16.msra.mxu0 0
        %3584 = vmatprep.subr.bf16.mxu0 0
        %3585 = vmatpush1.bf16.msra.mxu0 0
        %3586 = vmatprep.subr.bf16.mxu0 0
        %3587 = vmatpush1.bf16.msra.mxu0 0
        %3588 = vmatprep.subr.bf16.mxu0 0
        %3589 = vmatpush1.bf16.msra.mxu0 0
        %3590 = vmatprep.subr.bf16.mxu0 0
        %3591 = vmatpush1.bf16.msra.mxu0 0
        %3592 = vmatprep.subr.bf16.mxu0 0
        %3593 = vmatpush1.bf16.msra.mxu0 0
        %3594 = vmatprep.subr.bf16.mxu0 0
        %3595 = vmatpush1.bf16.msra.mxu0 0
        %3596 = vmatprep.subr.bf16.mxu0 0
        %3597 = vmatpush1.bf16.msra.mxu0 0
        %3598 = vmatprep.subr.bf16.mxu0 0
        %3599 = vmatpush1.bf16.msra.mxu0 0
        %3600 = vmatprep.subr.bf16.mxu0 0
        %3601 = vmatpush1.bf16.msra.mxu0 0
        %3602 = vmatprep.mubr.bf16.mxu0 0
        %3603 = vmatmul.mubr.bf16.gmra.mrb[0].mxu0 %v3565
        %v3604 = vpop.f32.mrb[0].mxu0
        %v3605 = vadd.f32 0.0, %v3604
        %v3606 = vpop.f32.mrb[0].mxu0
        %v3607 = vpop.f32.mrb[0].mxu0
        %v3608 = vadd.f32 0.0, %v3607
        %v3609 = vpop.f32.mrb[0].mxu0
        %3610 = vdwg.mxu0
        %3611 = vrot.lane.b32.xlu0 %v394, 104
        %v3612 = vpop.permute.xlu0 %3611
        %3613 = vrot.lane.b32.xlu0 %v395, 104
        %v3614 = vpop.permute.xlu0 %3613
        %3617 = vrot.lane.b32.xlu0 %v405, 106
        %v3618 = vpop.permute.xlu0 %3617
        %3619 = vrot.lane.b32.xlu0 %v407, 106
        %v3620 = vpop.permute.xlu0 %3619
        %3623 = vrot.lane.b32.xlu0 %v417, 108
        %v3624 = vpop.permute.xlu0 %3623
        %3625 = vrot.lane.b32.xlu0 %v419, 108
        %v3626 = vpop.permute.xlu0 %3625
        %3629 = vrot.lane.b32.xlu0 %v429, 110
        %v3630 = vpop.permute.xlu0 %3629
        %3631 = vrot.lane.b32.xlu0 %v431, 110
        %v3632 = vpop.permute.xlu0 %3631
        %3635 = vrot.lane.b32.xlu0 %v441, 112
        %v3636 = vpop.permute.xlu0 %3635
        %3637 = vrot.lane.b32.xlu0 %v443, 112
        %v3638 = vpop.permute.xlu0 %3637
        %3641 = vrot.lane.b32.xlu0 %v453, 114
        %v3642 = vpop.permute.xlu0 %3641
        %3643 = vrot.lane.b32.xlu0 %v455, 114
        %v3644 = vpop.permute.xlu0 %3643
        %3647 = vrot.lane.b32.xlu0 %v465, 116
        %v3648 = vpop.permute.xlu0 %3647
        %3649 = vrot.lane.b32.xlu0 %v467, 116
        %v3650 = vpop.permute.xlu0 %3649
        %3653 = vrot.lane.b32.xlu0 %v477, 118
        %v3654 = vpop.permute.xlu0 %3653
        %3655 = vrot.lane.b32.xlu0 %v479, 118
        %v3656 = vpop.permute.xlu0 %3655
        %v3659 = vsel %vm549, %v3612, %v3618
        %v3660 = vsel %vm549, %v3614, %v3620
        %v3661 = vsel %vm552, %v3659, %v3624
        %v3662 = vsel %vm552, %v3660, %v3626
        %v3663 = vsel %vm555, %v3661, %v3630
        %v3664 = vsel %vm555, %v3662, %v3632
        %v3665 = vsel %vm558, %v3663, %v3636
        %v3666 = vsel %vm558, %v3664, %v3638
        %v3667 = vsel %vm561, %v3665, %v3642
        %v3668 = vsel %vm561, %v3666, %v3644
        %v3669 = vsel %vm564, %v3667, %v3648
        %v3670 = vsel %vm564, %v3668, %v3650
        %v3671 = vsel %vm567, %v3669, %v3654
        %v3672 = vsel %vm567, %v3670, %v3656
        %v3673 = vsel %vm570, %v3671, %v1589
        %v3674 = vsel %vm570, %v3672, %v1709
        %v3675 = vsel %vm573, %v3673, %v1595
        %v3676 = vsel %vm573, %v3674, %v1715
        %v3677 = vsel %vm576, %v3675, %v1601
        %v3678 = vsel %vm576, %v3676, %v1721
        %v3679 = vsel %vm579, %v3677, %v1607
        %v3680 = vsel %vm579, %v3678, %v1727
        %v3681 = vsel %vm582, %v3679, %v443
        %v3682 = vsel %vm582, %v3680, %v518
        %v3683 = vsel %vm585, %v3681, %v1615
        %v3684 = vsel %vm585, %v3682, %v1735
        %v3685 = vsel %vm588, %v3683, %v1621
        %v3686 = vsel %vm588, %v3684, %v1741
        %v3687 = vsel %vm591, %v3685, %v1627
        %v3688 = vsel %vm591, %v3686, %v1747
        %3689 = vrot.lane.b32.xlu0 %v396, 104
        %v3690 = vpop.permute.xlu0 %3689
        %3691 = vrot.lane.b32.xlu0 %v397, 104
        %v3692 = vpop.permute.xlu0 %3691
        %3695 = vrot.lane.b32.xlu0 %v494, 106
        %v3696 = vpop.permute.xlu0 %3695
        %3697 = vrot.lane.b32.xlu0 %v596, 106
        %v3698 = vpop.permute.xlu0 %3697
        %3701 = vrot.lane.b32.xlu0 %v502, 108
        %v3702 = vpop.permute.xlu0 %3701
        %3703 = vrot.lane.b32.xlu0 %v604, 108
        %v3704 = vpop.permute.xlu0 %3703
        %3707 = vrot.lane.b32.xlu0 %v510, 110
        %v3708 = vpop.permute.xlu0 %3707
        %3709 = vrot.lane.b32.xlu0 %v612, 110
        %v3710 = vpop.permute.xlu0 %3709
        %3713 = vrot.lane.b32.xlu0 %v518, 112
        %v3714 = vpop.permute.xlu0 %3713
        %3715 = vrot.lane.b32.xlu0 %v620, 112
        %v3716 = vpop.permute.xlu0 %3715
        %3719 = vrot.lane.b32.xlu0 %v526, 114
        %v3720 = vpop.permute.xlu0 %3719
        %3721 = vrot.lane.b32.xlu0 %v628, 114
        %v3722 = vpop.permute.xlu0 %3721
        %3725 = vrot.lane.b32.xlu0 %v534, 116
        %v3726 = vpop.permute.xlu0 %3725
        %3727 = vrot.lane.b32.xlu0 %v636, 116
        %v3728 = vpop.permute.xlu0 %3727
        %3731 = vrot.lane.b32.xlu0 %v542, 118
        %v3732 = vpop.permute.xlu0 %3731
        %3733 = vrot.lane.b32.xlu0 %v644, 118
        %v3734 = vpop.permute.xlu0 %3733
        %3737 = vrot.lane.b32.xlu0 %v398, 120
        %v3738 = vpop.permute.xlu0 %3737
        %v3740 = vsel %vm549, %v3690, %v3696
        %v3741 = vsel %vm549, %v3692, %v3698
        %v3742 = vsel %vm552, %v3740, %v3702
        %v3743 = vsel %vm552, %v3741, %v3704
        %v3744 = vsel %vm555, %v3742, %v3708
        %v3745 = vsel %vm555, %v3743, %v3710
        %v3746 = vsel %vm558, %v3744, %v3714
        %v3747 = vsel %vm558, %v3745, %v3716
        %v3748 = vsel %vm561, %v3746, %v3720
        %v3749 = vsel %vm561, %v3747, %v3722
        %v3750 = vsel %vm564, %v3748, %v3726
        %v3751 = vsel %vm564, %v3749, %v3728
        %v3752 = vsel %vm567, %v3750, %v3732
        %v3753 = vsel %vm567, %v3751, %v3734
        %v3754 = vsel %vm570, %v3752, %v1711
        %v3755 = vsel %vm570, %v3753, %v3738
        %3758 = vrot.lane.b32.xlu0 %v3754, 32
        %v3759 = vpop.permute.xlu0 %3758
        %3760 = vrot.lane.b32.xlu0 %v3755, 32
        %v3761 = vpop.permute.xlu0 %3760
        %v3764 = vsel %vm681, %v3687, %v3759
        %v3765 = vsel %vm681, %v3688, %v3761
        %v3766 = vpack.c.bf16 %v3765, %v3764
        %s3767 = scalar_lea.vmem [#allocation5], 336
        %v3768 = vld [vmem:[%s3767] sm:$0xf]
        %v3769 = vld [vmem:[%s3767 + $0x4] sm:$0xf]
        %v3770 = vld [vmem:[%s3767 + $0x8] sm:$0xf]
        %v3771 = vld [vmem:[%s3767 + $0xc] sm:$0xf]
        %v3772 = vld [vmem:[%s3767 + $0x10] sm:$0xf]
        %v3773 = vld [vmem:[%s3767 + $0x14] sm:$0xf]
        %v3774 = vld [vmem:[%s3767 + $0x18] sm:$0x1]
        %v3782 = vunpack.c.l.b16 %v3768
        %v3783 = vunpack.c.l.b16 %v3769
        %v3784 = vunpack.c.l.b16 %v3770
        %v3785 = vunpack.c.l.b16 %v3771
        %v3786 = vunpack.c.l.b16 %v3772
        %v3787 = vunpack.c.l.b16 %v3773
        %v3788 = vunpack.c.l.b16 %v3774
        %v3789 = vpack.c.b16 %v3783, %v3782
        %v3790 = vpack.c.b16 %v3785, %v3784
        %v3791 = vpack.c.b16 %v3787, %v3786
        %v3792 = vpack.c.b16 %v3788, %v3788
        %v3797 = vsel %vm713, %v3766, 0
        %v3800 = vsel %vm474, %v3792, 0
        %3802 = vmatprep.subr.bf16.mxu0 0
        %3803 = vmatpush1.bf16.msra.mxu0 %v3789
        %3804 = vmatprep.subr.bf16.mxu0 0
        %3805 = vmatpush1.bf16.msra.mxu0 %v3790
        %3806 = vmatprep.subr.bf16.mxu0 0
        %3807 = vmatpush1.bf16.msra.mxu0 %v3791
        %3808 = vmatprep.subr.bf16.mxu0 0
        %3809 = vmatpush1.bf16.msra.mxu0 %v3800
        %3810 = vmatprep.subr.bf16.mxu0 0
        %3811 = vmatpush1.bf16.msra.mxu0 0
        %3812 = vmatprep.subr.bf16.mxu0 0
        %3813 = vmatpush1.bf16.msra.mxu0 0
        %3814 = vmatprep.subr.bf16.mxu0 0
        %3815 = vmatpush1.bf16.msra.mxu0 0
        %3816 = vmatprep.subr.bf16.mxu0 0
        %3817 = vmatpush1.bf16.msra.mxu0 0
        %3818 = vmatprep.subr.bf16.mxu0 0
        %3819 = vmatpush1.bf16.msra.mxu0 0
        %3820 = vmatprep.subr.bf16.mxu0 0
        %3821 = vmatpush1.bf16.msra.mxu0 0
        %3822 = vmatprep.subr.bf16.mxu0 0
        %3823 = vmatpush1.bf16.msra.mxu0 0
        %3824 = vmatprep.subr.bf16.mxu0 0
        %3825 = vmatpush1.bf16.msra.mxu0 0
        %3826 = vmatprep.subr.bf16.mxu0 0
        %3827 = vmatpush1.bf16.msra.mxu0 0
        %3828 = vmatprep.subr.bf16.mxu0 0
        %3829 = vmatpush1.bf16.msra.mxu0 0
        %3830 = vmatprep.subr.bf16.mxu0 0
        %3831 = vmatpush1.bf16.msra.mxu0 0
        %3832 = vmatprep.subr.bf16.mxu0 0
        %3833 = vmatpush1.bf16.msra.mxu0 0
        %3834 = vmatprep.mubr.bf16.mxu0 0
        %3835 = vmatmul.mubr.bf16.gmra.mrb[0].mxu0 %v3797
        %v3836 = vpop.f32.mrb[0].mxu0
        %v3837 = vadd.f32 0.0, %v3836
        %v3838 = vpop.f32.mrb[0].mxu0
        %v3839 = vpop.f32.mrb[0].mxu0
        %v3840 = vadd.f32 0.0, %v3839
        %v3841 = vpop.f32.mrb[0].mxu0
        %3842 = vdwg.mxu0
        %3843 = vrot.lane.b32.xlu0 %v394, 102
        %v3844 = vpop.permute.xlu0 %3843
        %3845 = vrot.lane.b32.xlu0 %v395, 102
        %v3846 = vpop.permute.xlu0 %3845
        %3849 = vrot.lane.b32.xlu0 %v405, 104
        %v3850 = vpop.permute.xlu0 %3849
        %3851 = vrot.lane.b32.xlu0 %v407, 104
        %v3852 = vpop.permute.xlu0 %3851
        %3855 = vrot.lane.b32.xlu0 %v417, 106
        %v3856 = vpop.permute.xlu0 %3855
        %3857 = vrot.lane.b32.xlu0 %v419, 106
        %v3858 = vpop.permute.xlu0 %3857
        %3861 = vrot.lane.b32.xlu0 %v429, 108
        %v3862 = vpop.permute.xlu0 %3861
        %3863 = vrot.lane.b32.xlu0 %v431, 108
        %v3864 = vpop.permute.xlu0 %3863
        %3867 = vrot.lane.b32.xlu0 %v441, 110
        %v3868 = vpop.permute.xlu0 %3867
        %3869 = vrot.lane.b32.xlu0 %v443, 110
        %v3870 = vpop.permute.xlu0 %3869
        %3873 = vrot.lane.b32.xlu0 %v453, 112
        %v3874 = vpop.permute.xlu0 %3873
        %3875 = vrot.lane.b32.xlu0 %v455, 112
        %v3876 = vpop.permute.xlu0 %3875
        %3879 = vrot.lane.b32.xlu0 %v465, 114
        %v3880 = vpop.permute.xlu0 %3879
        %3881 = vrot.lane.b32.xlu0 %v467, 114
        %v3882 = vpop.permute.xlu0 %3881
        %3885 = vrot.lane.b32.xlu0 %v477, 116
        %v3886 = vpop.permute.xlu0 %3885
        %3887 = vrot.lane.b32.xlu0 %v479, 116
        %v3888 = vpop.permute.xlu0 %3887
        %v3891 = vsel %vm549, %v3844, %v3850
        %v3892 = vsel %vm549, %v3846, %v3852
        %v3893 = vsel %vm552, %v3891, %v3856
        %v3894 = vsel %vm552, %v3892, %v3858
        %v3895 = vsel %vm555, %v3893, %v3862
        %v3896 = vsel %vm555, %v3894, %v3864
        %v3897 = vsel %vm558, %v3895, %v3868
        %v3898 = vsel %vm558, %v3896, %v3870
        %v3899 = vsel %vm561, %v3897, %v3874
        %v3900 = vsel %vm561, %v3898, %v3876
        %v3901 = vsel %vm564, %v3899, %v3880
        %v3902 = vsel %vm564, %v3900, %v3882
        %v3903 = vsel %vm567, %v3901, %v3886
        %v3904 = vsel %vm567, %v3902, %v3888
        %v3905 = vsel %vm570, %v3903, %v1864
        %v3906 = vsel %vm570, %v3904, %v1984
        %v3907 = vsel %vm573, %v3905, %v1870
        %v3908 = vsel %vm573, %v3906, %v1990
        %v3909 = vsel %vm576, %v3907, %v1876
        %v3910 = vsel %vm576, %v3908, %v1996
        %v3911 = vsel %vm579, %v3909, %v1882
        %v3912 = vsel %vm579, %v3910, %v2002
        %v3913 = vsel %vm582, %v3911, %v1888
        %v3914 = vsel %vm582, %v3912, %v2008
        %v3915 = vsel %vm585, %v3913, %v455
        %v3916 = vsel %vm585, %v3914, %v526
        %v3917 = vsel %vm588, %v3915, %v1896
        %v3918 = vsel %vm588, %v3916, %v2016
        %v3919 = vsel %vm591, %v3917, %v1902
        %v3920 = vsel %vm591, %v3918, %v2022
        %3921 = vrot.lane.b32.xlu0 %v396, 102
        %v3922 = vpop.permute.xlu0 %3921
        %3923 = vrot.lane.b32.xlu0 %v397, 102
        %v3924 = vpop.permute.xlu0 %3923
        %3927 = vrot.lane.b32.xlu0 %v494, 104
        %v3928 = vpop.permute.xlu0 %3927
        %3929 = vrot.lane.b32.xlu0 %v596, 104
        %v3930 = vpop.permute.xlu0 %3929
        %3933 = vrot.lane.b32.xlu0 %v502, 106
        %v3934 = vpop.permute.xlu0 %3933
        %3935 = vrot.lane.b32.xlu0 %v604, 106
        %v3936 = vpop.permute.xlu0 %3935
        %3939 = vrot.lane.b32.xlu0 %v510, 108
        %v3940 = vpop.permute.xlu0 %3939
        %3941 = vrot.lane.b32.xlu0 %v612, 108
        %v3942 = vpop.permute.xlu0 %3941
        %3945 = vrot.lane.b32.xlu0 %v518, 110
        %v3946 = vpop.permute.xlu0 %3945
        %3947 = vrot.lane.b32.xlu0 %v620, 110
        %v3948 = vpop.permute.xlu0 %3947
        %3951 = vrot.lane.b32.xlu0 %v526, 112
        %v3952 = vpop.permute.xlu0 %3951
        %3953 = vrot.lane.b32.xlu0 %v628, 112
        %v3954 = vpop.permute.xlu0 %3953
        %3957 = vrot.lane.b32.xlu0 %v534, 114
        %v3958 = vpop.permute.xlu0 %3957
        %3959 = vrot.lane.b32.xlu0 %v636, 114
        %v3960 = vpop.permute.xlu0 %3959
        %3963 = vrot.lane.b32.xlu0 %v542, 116
        %v3964 = vpop.permute.xlu0 %3963
        %3965 = vrot.lane.b32.xlu0 %v644, 116
        %v3966 = vpop.permute.xlu0 %3965
        %3969 = vrot.lane.b32.xlu0 %v398, 118
        %v3970 = vpop.permute.xlu0 %3969
        %v3972 = vsel %vm549, %v3922, %v3928
        %v3973 = vsel %vm549, %v3924, %v3930
        %v3974 = vsel %vm552, %v3972, %v3934
        %v3975 = vsel %vm552, %v3973, %v3936
        %v3976 = vsel %vm555, %v3974, %v3940
        %v3977 = vsel %vm555, %v3975, %v3942
        %v3978 = vsel %vm558, %v3976, %v3946
        %v3979 = vsel %vm558, %v3977, %v3948
        %v3980 = vsel %vm561, %v3978, %v3952
        %v3981 = vsel %vm561, %v3979, %v3954
        %v3982 = vsel %vm564, %v3980, %v3958
        %v3983 = vsel %vm564, %v3981, %v3960
        %v3984 = vsel %vm567, %v3982, %v3964
        %v3985 = vsel %vm567, %v3983, %v3966
        %v3986 = vsel %vm570, %v3984, %v1986
        %v3987 = vsel %vm570, %v3985, %v3970
        %3990 = vrot.lane.b32.xlu0 %v3986, 32
        %v3991 = vpop.permute.xlu0 %3990
        %3992 = vrot.lane.b32.xlu0 %v3987, 32
        %v3993 = vpop.permute.xlu0 %3992
        %v3996 = vsel %vm681, %v3919, %v3991
        %v3997 = vsel %vm681, %v3920, %v3993
        %v3998 = vpack.c.bf16 %v3997, %v3996
        %s3999 = scalar_lea.vmem [#allocation5], 364
        %v4000 = vld [vmem:[%s3999] sm:$0xf]
        %v4001 = vld [vmem:[%s3999 + $0x4] sm:$0xf]
        %v4002 = vld [vmem:[%s3999 + $0x8] sm:$0xf]
        %v4003 = vld [vmem:[%s3999 + $0xc] sm:$0xf]
        %v4004 = vld [vmem:[%s3999 + $0x10] sm:$0xf]
        %v4005 = vld [vmem:[%s3999 + $0x14] sm:$0xf]
        %v4006 = vld [vmem:[%s3999 + $0x18] sm:$0x1]
        %v4014 = vunpack.c.l.b16 %v4000
        %v4015 = vunpack.c.l.b16 %v4001
        %v4016 = vunpack.c.l.b16 %v4002
        %v4017 = vunpack.c.l.b16 %v4003
        %v4018 = vunpack.c.l.b16 %v4004
        %v4019 = vunpack.c.l.b16 %v4005
        %v4020 = vunpack.c.l.b16 %v4006
        %v4021 = vpack.c.b16 %v4015, %v4014
        %v4022 = vpack.c.b16 %v4017, %v4016
        %v4023 = vpack.c.b16 %v4019, %v4018
        %v4024 = vpack.c.b16 %v4020, %v4020
        %v4029 = vsel %vm713, %v3998, 0
        %v4032 = vsel %vm474, %v4024, 0
        %4034 = vmatprep.subr.bf16.mxu0 0
        %4035 = vmatpush1.bf16.msra.mxu0 %v4021
        %4036 = vmatprep.subr.bf16.mxu0 0
        %4037 = vmatpush1.bf16.msra.mxu0 %v4022
        %4038 = vmatprep.subr.bf16.mxu0 0
        %4039 = vmatpush1.bf16.msra.mxu0 %v4023
        %4040 = vmatprep.subr.bf16.mxu0 0
        %4041 = vmatpush1.bf16.msra.mxu0 %v4032
        %4042 = vmatprep.subr.bf16.mxu0 0
        %4043 = vmatpush1.bf16.msra.mxu0 0
        %4044 = vmatprep.subr.bf16.mxu0 0
        %4045 = vmatpush1.bf16.msra.mxu0 0
        %4046 = vmatprep.subr.bf16.mxu0 0
        %4047 = vmatpush1.bf16.msra.mxu0 0
        %4048 = vmatprep.subr.bf16.mxu0 0
        %4049 = vmatpush1.bf16.msra.mxu0 0
        %4050 = vmatprep.subr.bf16.mxu0 0
        %4051 = vmatpush1.bf16.msra.mxu0 0
        %4052 = vmatprep.subr.bf16.mxu0 0
        %4053 = vmatpush1.bf16.msra.mxu0 0
        %4054 = vmatprep.subr.bf16.mxu0 0
        %4055 = vmatpush1.bf16.msra.mxu0 0
        %4056 = vmatprep.subr.bf16.mxu0 0
        %4057 = vmatpush1.bf16.msra.mxu0 0
        %4058 = vmatprep.subr.bf16.mxu0 0
        %4059 = vmatpush1.bf16.msra.mxu0 0
        %4060 = vmatprep.subr.bf16.mxu0 0
        %4061 = vmatpush1.bf16.msra.mxu0 0
        %4062 = vmatprep.subr.bf16.mxu0 0
        %4063 = vmatpush1.bf16.msra.mxu0 0
        %4064 = vmatprep.subr.bf16.mxu0 0
        %4065 = vmatpush1.bf16.msra.mxu0 0
        %4066 = vmatprep.mubr.bf16.mxu0 0
        %4067 = vmatmul.mubr.bf16.gmra.mrb[0].mxu0 %v4029
        %v4068 = vpop.f32.mrb[0].mxu0
        %v4069 = vadd.f32 0.0, %v4068
        %v4070 = vpop.f32.mrb[0].mxu0
        %v4071 = vpop.f32.mrb[0].mxu0
        %v4072 = vadd.f32 0.0, %v4071
        %v4073 = vpop.f32.mrb[0].mxu0
        %4074 = vdwg.mxu0
        %4075 = vrot.lane.b32.xlu0 %v394, 100
        %v4076 = vpop.permute.xlu0 %4075
        %4077 = vrot.lane.b32.xlu0 %v395, 100
        %v4078 = vpop.permute.xlu0 %4077
        %4081 = vrot.lane.b32.xlu0 %v405, 102
        %v4082 = vpop.permute.xlu0 %4081
        %4083 = vrot.lane.b32.xlu0 %v407, 102
        %v4084 = vpop.permute.xlu0 %4083
        %4087 = vrot.lane.b32.xlu0 %v417, 104
        %v4088 = vpop.permute.xlu0 %4087
        %4089 = vrot.lane.b32.xlu0 %v419, 104
        %v4090 = vpop.permute.xlu0 %4089
        %4093 = vrot.lane.b32.xlu0 %v429, 106
        %v4094 = vpop.permute.xlu0 %4093
        %4095 = vrot.lane.b32.xlu0 %v431, 106
        %v4096 = vpop.permute.xlu0 %4095
        %4099 = vrot.lane.b32.xlu0 %v441, 108
        %v4100 = vpop.permute.xlu0 %4099
        %4101 = vrot.lane.b32.xlu0 %v443, 108
        %v4102 = vpop.permute.xlu0 %4101
        %4105 = vrot.lane.b32.xlu0 %v453, 110
        %v4106 = vpop.permute.xlu0 %4105
        %4107 = vrot.lane.b32.xlu0 %v455, 110
        %v4108 = vpop.permute.xlu0 %4107
        %4111 = vrot.lane.b32.xlu0 %v465, 112
        %v4112 = vpop.permute.xlu0 %4111
        %4113 = vrot.lane.b32.xlu0 %v467, 112
        %v4114 = vpop.permute.xlu0 %4113
        %4117 = vrot.lane.b32.xlu0 %v477, 114
        %v4118 = vpop.permute.xlu0 %4117
        %4119 = vrot.lane.b32.xlu0 %v479, 114
        %v4120 = vpop.permute.xlu0 %4119
        %v4123 = vsel %vm549, %v4076, %v4082
        %v4124 = vsel %vm549, %v4078, %v4084
        %v4125 = vsel %vm552, %v4123, %v4088
        %v4126 = vsel %vm552, %v4124, %v4090
        %v4127 = vsel %vm555, %v4125, %v4094
        %v4128 = vsel %vm555, %v4126, %v4096
        %v4129 = vsel %vm558, %v4127, %v4100
        %v4130 = vsel %vm558, %v4128, %v4102
        %v4131 = vsel %vm561, %v4129, %v4106
        %v4132 = vsel %vm561, %v4130, %v4108
        %v4133 = vsel %vm564, %v4131, %v4112
        %v4134 = vsel %vm564, %v4132, %v4114
        %v4135 = vsel %vm567, %v4133, %v4118
        %v4136 = vsel %vm567, %v4134, %v4120
        %v4137 = vsel %vm570, %v4135, %v2139
        %v4138 = vsel %vm570, %v4136, %v2259
        %v4139 = vsel %vm573, %v4137, %v2145
        %v4140 = vsel %vm573, %v4138, %v2265
        %v4141 = vsel %vm576, %v4139, %v2151
        %v4142 = vsel %vm576, %v4140, %v2271
        %v4143 = vsel %vm579, %v4141, %v2157
        %v4144 = vsel %vm579, %v4142, %v2277
        %v4145 = vsel %vm582, %v4143, %v2163
        %v4146 = vsel %vm582, %v4144, %v2283
        %v4147 = vsel %vm585, %v4145, %v2169
        %v4148 = vsel %vm585, %v4146, %v2289
        %v4149 = vsel %vm588, %v4147, %v467
        %v4150 = vsel %vm588, %v4148, %v534
        %v4151 = vsel %vm591, %v4149, %v2177
        %v4152 = vsel %vm591, %v4150, %v2297
        %4153 = vrot.lane.b32.xlu0 %v396, 100
        %v4154 = vpop.permute.xlu0 %4153
        %4155 = vrot.lane.b32.xlu0 %v397, 100
        %v4156 = vpop.permute.xlu0 %4155
        %4159 = vrot.lane.b32.xlu0 %v494, 102
        %v4160 = vpop.permute.xlu0 %4159
        %4161 = vrot.lane.b32.xlu0 %v596, 102
        %v4162 = vpop.permute.xlu0 %4161
        %4165 = vrot.lane.b32.xlu0 %v502, 104
        %v4166 = vpop.permute.xlu0 %4165
        %4167 = vrot.lane.b32.xlu0 %v604, 104
        %v4168 = vpop.permute.xlu0 %4167
        %4171 = vrot.lane.b32.xlu0 %v510, 106
        %v4172 = vpop.permute.xlu0 %4171
        %4173 = vrot.lane.b32.xlu0 %v612, 106
        %v4174 = vpop.permute.xlu0 %4173
        %4177 = vrot.lane.b32.xlu0 %v518, 108
        %v4178 = vpop.permute.xlu0 %4177
        %4179 = vrot.lane.b32.xlu0 %v620, 108
        %v4180 = vpop.permute.xlu0 %4179
        %4183 = vrot.lane.b32.xlu0 %v526, 110
        %v4184 = vpop.permute.xlu0 %4183
        %4185 = vrot.lane.b32.xlu0 %v628, 110
        %v4186 = vpop.permute.xlu0 %4185
        %4189 = vrot.lane.b32.xlu0 %v534, 112
        %v4190 = vpop.permute.xlu0 %4189
        %4191 = vrot.lane.b32.xlu0 %v636, 112
        %v4192 = vpop.permute.xlu0 %4191
        %4195 = vrot.lane.b32.xlu0 %v542, 114
        %v4196 = vpop.permute.xlu0 %4195
        %4197 = vrot.lane.b32.xlu0 %v644, 114
        %v4198 = vpop.permute.xlu0 %4197
        %4201 = vrot.lane.b32.xlu0 %v398, 116
        %v4202 = vpop.permute.xlu0 %4201
        %v4204 = vsel %vm549, %v4154, %v4160
        %v4205 = vsel %vm549, %v4156, %v4162
        %v4206 = vsel %vm552, %v4204, %v4166
        %v4207 = vsel %vm552, %v4205, %v4168
        %v4208 = vsel %vm555, %v4206, %v4172
        %v4209 = vsel %vm555, %v4207, %v4174
        %v4210 = vsel %vm558, %v4208, %v4178
        %v4211 = vsel %vm558, %v4209, %v4180
        %v4212 = vsel %vm561, %v4210, %v4184
        %v4213 = vsel %vm561, %v4211, %v4186
        %v4214 = vsel %vm564, %v4212, %v4190
        %v4215 = vsel %vm564, %v4213, %v4192
        %v4216 = vsel %vm567, %v4214, %v4196
        %v4217 = vsel %vm567, %v4215, %v4198
        %v4218 = vsel %vm570, %v4216, %v2261
        %v4219 = vsel %vm570, %v4217, %v4202
        %4222 = vrot.lane.b32.xlu0 %v4218, 32
        %v4223 = vpop.permute.xlu0 %4222
        %4224 = vrot.lane.b32.xlu0 %v4219, 32
        %v4225 = vpop.permute.xlu0 %4224
        %v4228 = vsel %vm681, %v4151, %v4223
        %v4229 = vsel %vm681, %v4152, %v4225
        %v4230 = vpack.c.bf16 %v4229, %v4228
        %s4231 = scalar_lea.vmem [#allocation5], 392
        %v4232 = vld [vmem:[%s4231] sm:$0xf]
        %v4233 = vld [vmem:[%s4231 + $0x4] sm:$0xf]
        %v4234 = vld [vmem:[%s4231 + $0x8] sm:$0xf]
        %v4235 = vld [vmem:[%s4231 + $0xc] sm:$0xf]
        %v4236 = vld [vmem:[%s4231 + $0x10] sm:$0xf]
        %v4237 = vld [vmem:[%s4231 + $0x14] sm:$0xf]
        %v4238 = vld [vmem:[%s4231 + $0x18] sm:$0x1]
        %v4246 = vunpack.c.l.b16 %v4232
        %v4247 = vunpack.c.l.b16 %v4233
        %v4248 = vunpack.c.l.b16 %v4234
        %v4249 = vunpack.c.l.b16 %v4235
        %v4250 = vunpack.c.l.b16 %v4236
        %v4251 = vunpack.c.l.b16 %v4237
        %v4252 = vunpack.c.l.b16 %v4238
        %v4253 = vpack.c.b16 %v4247, %v4246
        %v4254 = vpack.c.b16 %v4249, %v4248
        %v4255 = vpack.c.b16 %v4251, %v4250
        %v4256 = vpack.c.b16 %v4252, %v4252
        %v4261 = vsel %vm713, %v4230, 0
        %v4264 = vsel %vm474, %v4256, 0
        %4266 = vmatprep.subr.bf16.mxu0 0
        %4267 = vmatpush1.bf16.msra.mxu0 %v4253
        %4268 = vmatprep.subr.bf16.mxu0 0
        %4269 = vmatpush1.bf16.msra.mxu0 %v4254
        %4270 = vmatprep.subr.bf16.mxu0 0
        %4271 = vmatpush1.bf16.msra.mxu0 %v4255
        %4272 = vmatprep.subr.bf16.mxu0 0
        %4273 = vmatpush1.bf16.msra.mxu0 %v4264
        %4274 = vmatprep.subr.bf16.mxu0 0
        %4275 = vmatpush1.bf16.msra.mxu0 0
        %4276 = vmatprep.subr.bf16.mxu0 0
        %4277 = vmatpush1.bf16.msra.mxu0 0
        %4278 = vmatprep.subr.bf16.mxu0 0
        %4279 = vmatpush1.bf16.msra.mxu0 0
        %4280 = vmatprep.subr.bf16.mxu0 0
        %4281 = vmatpush1.bf16.msra.mxu0 0
        %4282 = vmatprep.subr.bf16.mxu0 0
        %4283 = vmatpush1.bf16.msra.mxu0 0
        %4284 = vmatprep.subr.bf16.mxu0 0
        %4285 = vmatpush1.bf16.msra.mxu0 0
        %4286 = vmatprep.subr.bf16.mxu0 0
        %4287 = vmatpush1.bf16.msra.mxu0 0
        %4288 = vmatprep.subr.bf16.mxu0 0
        %4289 = vmatpush1.bf16.msra.mxu0 0
        %4290 = vmatprep.subr.bf16.mxu0 0
        %4291 = vmatpush1.bf16.msra.mxu0 0
        %4292 = vmatprep.subr.bf16.mxu0 0
        %4293 = vmatpush1.bf16.msra.mxu0 0
        %4294 = vmatprep.subr.bf16.mxu0 0
        %4295 = vmatpush1.bf16.msra.mxu0 0
        %4296 = vmatprep.subr.bf16.mxu0 0
        %4297 = vmatpush1.bf16.msra.mxu0 0
        %4298 = vmatprep.mubr.bf16.mxu0 0
        %4299 = vmatmul.mubr.bf16.gmra.mrb[0].mxu0 %v4261
        %v4300 = vpop.f32.mrb[0].mxu0
        %v4301 = vadd.f32 0.0, %v4300
        %v4302 = vpop.f32.mrb[0].mxu0
        %v4303 = vpop.f32.mrb[0].mxu0
        %v4304 = vadd.f32 0.0, %v4303
        %v4305 = vpop.f32.mrb[0].mxu0
        %4306 = vdwg.mxu0
        %4307 = vrot.lane.b32.xlu0 %v394, 98
        %v4308 = vpop.permute.xlu0 %4307
        %4309 = vrot.lane.b32.xlu0 %v395, 98
        %v4310 = vpop.permute.xlu0 %4309
        %4313 = vrot.lane.b32.xlu0 %v405, 100
        %v4314 = vpop.permute.xlu0 %4313
        %4315 = vrot.lane.b32.xlu0 %v407, 100
        %v4316 = vpop.permute.xlu0 %4315
        %4319 = vrot.lane.b32.xlu0 %v417, 102
        %v4320 = vpop.permute.xlu0 %4319
        %4321 = vrot.lane.b32.xlu0 %v419, 102
        %v4322 = vpop.permute.xlu0 %4321
        %4325 = vrot.lane.b32.xlu0 %v429, 104
        %v4326 = vpop.permute.xlu0 %4325
        %4327 = vrot.lane.b32.xlu0 %v431, 104
        %v4328 = vpop.permute.xlu0 %4327
        %4331 = vrot.lane.b32.xlu0 %v441, 106
        %v4332 = vpop.permute.xlu0 %4331
        %4333 = vrot.lane.b32.xlu0 %v443, 106
        %v4334 = vpop.permute.xlu0 %4333
        %4337 = vrot.lane.b32.xlu0 %v453, 108
        %v4338 = vpop.permute.xlu0 %4337
        %4339 = vrot.lane.b32.xlu0 %v455, 108
        %v4340 = vpop.permute.xlu0 %4339
        %4343 = vrot.lane.b32.xlu0 %v465, 110
        %v4344 = vpop.permute.xlu0 %4343
        %4345 = vrot.lane.b32.xlu0 %v467, 110
        %v4346 = vpop.permute.xlu0 %4345
        %4349 = vrot.lane.b32.xlu0 %v477, 112
        %v4350 = vpop.permute.xlu0 %4349
        %4351 = vrot.lane.b32.xlu0 %v479, 112
        %v4352 = vpop.permute.xlu0 %4351
        %v4355 = vsel %vm549, %v4308, %v4314
        %v4356 = vsel %vm549, %v4310, %v4316
        %v4357 = vsel %vm552, %v4355, %v4320
        %v4358 = vsel %vm552, %v4356, %v4322
        %v4359 = vsel %vm555, %v4357, %v4326
        %v4360 = vsel %vm555, %v4358, %v4328
        %v4361 = vsel %vm558, %v4359, %v4332
        %v4362 = vsel %vm558, %v4360, %v4334
        %v4363 = vsel %vm561, %v4361, %v4338
        %v4364 = vsel %vm561, %v4362, %v4340
        %v4365 = vsel %vm564, %v4363, %v4344
        %v4366 = vsel %vm564, %v4364, %v4346
        %v4367 = vsel %vm567, %v4365, %v4350
        %v4368 = vsel %vm567, %v4366, %v4352
        %v4369 = vsel %vm570, %v4367, %v2414
        %v4370 = vsel %vm570, %v4368, %v2534
        %v4371 = vsel %vm573, %v4369, %v2420
        %v4372 = vsel %vm573, %v4370, %v2540
        %v4373 = vsel %vm576, %v4371, %v2426
        %v4374 = vsel %vm576, %v4372, %v2546
        %v4375 = vsel %vm579, %v4373, %v2432
        %v4376 = vsel %vm579, %v4374, %v2552
        %v4377 = vsel %vm582, %v4375, %v2438
        %v4378 = vsel %vm582, %v4376, %v2558
        %v4379 = vsel %vm585, %v4377, %v2444
        %v4380 = vsel %vm585, %v4378, %v2564
        %v4381 = vsel %vm588, %v4379, %v2450
        %v4382 = vsel %vm588, %v4380, %v2570
        %v4383 = vsel %vm591, %v4381, %v479
        %v4384 = vsel %vm591, %v4382, %v542
        %4385 = vrot.lane.b32.xlu0 %v396, 98
        %v4386 = vpop.permute.xlu0 %4385
        %4387 = vrot.lane.b32.xlu0 %v397, 98
        %v4388 = vpop.permute.xlu0 %4387
        %4391 = vrot.lane.b32.xlu0 %v494, 100
        %v4392 = vpop.permute.xlu0 %4391
        %4393 = vrot.lane.b32.xlu0 %v596, 100
        %v4394 = vpop.permute.xlu0 %4393
        %4397 = vrot.lane.b32.xlu0 %v502, 102
        %v4398 = vpop.permute.xlu0 %4397
        %4399 = vrot.lane.b32.xlu0 %v604, 102
        %v4400 = vpop.permute.xlu0 %4399
        %4403 = vrot.lane.b32.xlu0 %v510, 104
        %v4404 = vpop.permute.xlu0 %4403
        %4405 = vrot.lane.b32.xlu0 %v612, 104
        %v4406 = vpop.permute.xlu0 %4405
        %4409 = vrot.lane.b32.xlu0 %v518, 106
        %v4410 = vpop.permute.xlu0 %4409
        %4411 = vrot.lane.b32.xlu0 %v620, 106
        %v4412 = vpop.permute.xlu0 %4411
        %4415 = vrot.lane.b32.xlu0 %v526, 108
        %v4416 = vpop.permute.xlu0 %4415
        %4417 = vrot.lane.b32.xlu0 %v628, 108
        %v4418 = vpop.permute.xlu0 %4417
        %4421 = vrot.lane.b32.xlu0 %v534, 110
        %v4422 = vpop.permute.xlu0 %4421
        %4423 = vrot.lane.b32.xlu0 %v636, 110
        %v4424 = vpop.permute.xlu0 %4423
        %4427 = vrot.lane.b32.xlu0 %v542, 112
        %v4428 = vpop.permute.xlu0 %4427
        %4429 = vrot.lane.b32.xlu0 %v644, 112
        %v4430 = vpop.permute.xlu0 %4429
        %4433 = vrot.lane.b32.xlu0 %v398, 114
        %v4434 = vpop.permute.xlu0 %4433
        %v4436 = vsel %vm549, %v4386, %v4392
        %v4437 = vsel %vm549, %v4388, %v4394
        %v4438 = vsel %vm552, %v4436, %v4398
        %v4439 = vsel %vm552, %v4437, %v4400
        %v4440 = vsel %vm555, %v4438, %v4404
        %v4441 = vsel %vm555, %v4439, %v4406
        %v4442 = vsel %vm558, %v4440, %v4410
        %v4443 = vsel %vm558, %v4441, %v4412
        %v4444 = vsel %vm561, %v4442, %v4416
        %v4445 = vsel %vm561, %v4443, %v4418
        %v4446 = vsel %vm564, %v4444, %v4422
        %v4447 = vsel %vm564, %v4445, %v4424
        %v4448 = vsel %vm567, %v4446, %v4428
        %v4449 = vsel %vm567, %v4447, %v4430
        %v4450 = vsel %vm570, %v4448, %v2536
        %v4451 = vsel %vm570, %v4449, %v4434
        %4454 = vrot.lane.b32.xlu0 %v4450, 32
        %v4455 = vpop.permute.xlu0 %4454
        %4456 = vrot.lane.b32.xlu0 %v4451, 32
        %v4457 = vpop.permute.xlu0 %4456
        %v4460 = vsel %vm681, %v4383, %v4455
        %v4461 = vsel %vm681, %v4384, %v4457
        %v4462 = vpack.c.bf16 %v4461, %v4460
        %s4463 = scalar_lea.vmem [#allocation5], 420
        %v4464 = vld [vmem:[%s4463] sm:$0xf]
        %v4465 = vld [vmem:[%s4463 + $0x4] sm:$0xf]
        %v4466 = vld [vmem:[%s4463 + $0x8] sm:$0xf]
        %v4467 = vld [vmem:[%s4463 + $0xc] sm:$0xf]
        %v4468 = vld [vmem:[%s4463 + $0x10] sm:$0xf]
        %v4469 = vld [vmem:[%s4463 + $0x14] sm:$0xf]
        %v4470 = vld [vmem:[%s4463 + $0x18] sm:$0x1]
        %v4478 = vunpack.c.l.b16 %v4464
        %v4479 = vunpack.c.l.b16 %v4465
        %v4480 = vunpack.c.l.b16 %v4466
        %v4481 = vunpack.c.l.b16 %v4467
        %v4482 = vunpack.c.l.b16 %v4468
        %v4483 = vunpack.c.l.b16 %v4469
        %v4484 = vunpack.c.l.b16 %v4470
        %v4485 = vpack.c.b16 %v4479, %v4478
        %v4486 = vpack.c.b16 %v4481, %v4480
        %v4487 = vpack.c.b16 %v4483, %v4482
        %v4488 = vpack.c.b16 %v4484, %v4484
        %v4493 = vsel %vm713, %v4462, 0
        %v4496 = vsel %vm474, %v4488, 0
        %4498 = vmatprep.subr.bf16.mxu0 0
        %4499 = vmatpush1.bf16.msra.mxu0 %v4485
        %4500 = vmatprep.subr.bf16.mxu0 0
        %4501 = vmatpush1.bf16.msra.mxu0 %v4486
        %4502 = vmatprep.subr.bf16.mxu0 0
        %4503 = vmatpush1.bf16.msra.mxu0 %v4487
        %4504 = vmatprep.subr.bf16.mxu0 0
        %4505 = vmatpush1.bf16.msra.mxu0 %v4496
        %4506 = vmatprep.subr.bf16.mxu0 0
        %4507 = vmatpush1.bf16.msra.mxu0 0
        %4508 = vmatprep.subr.bf16.mxu0 0
        %4509 = vmatpush1.bf16.msra.mxu0 0
        %4510 = vmatprep.subr.bf16.mxu0 0
        %4511 = vmatpush1.bf16.msra.mxu0 0
        %4512 = vmatprep.subr.bf16.mxu0 0
        %4513 = vmatpush1.bf16.msra.mxu0 0
        %4514 = vmatprep.subr.bf16.mxu0 0
        %4515 = vmatpush1.bf16.msra.mxu0 0
        %4516 = vmatprep.subr.bf16.mxu0 0
        %4517 = vmatpush1.bf16.msra.mxu0 0
        %4518 = vmatprep.subr.bf16.mxu0 0
        %4519 = vmatpush1.bf16.msra.mxu0 0
        %4520 = vmatprep.subr.bf16.mxu0 0
        %4521 = vmatpush1.bf16.msra.mxu0 0
        %4522 = vmatprep.subr.bf16.mxu0 0
        %4523 = vmatpush1.bf16.msra.mxu0 0
        %4524 = vmatprep.subr.bf16.mxu0 0
        %4525 = vmatpush1.bf16.msra.mxu0 0
        %4526 = vmatprep.subr.bf16.mxu0 0
        %4527 = vmatpush1.bf16.msra.mxu0 0
        %4528 = vmatprep.subr.bf16.mxu0 0
        %4529 = vmatpush1.bf16.msra.mxu0 0
        %4530 = vmatprep.mubr.bf16.mxu0 0
        %4531 = vmatmul.mubr.bf16.gmra.mrb[0].mxu0 %v4493
        %v4532 = vpop.f32.mrb[0].mxu0
        %v4533 = vadd.f32 0.0, %v4532
        %v4534 = vpop.f32.mrb[0].mxu0
        %v4535 = vpop.f32.mrb[0].mxu0
        %v4536 = vadd.f32 0.0, %v4535
        %v4537 = vpop.f32.mrb[0].mxu0
        %4538 = vdwg.mxu0
        %4541 = vrot.lane.b32.xlu0 %v1030, 2
        %v4542 = vpop.permute.xlu0 %4541
        %4543 = vrot.lane.b32.xlu0 %v1033, 2
        %v4544 = vpop.permute.xlu0 %4543
        %4549 = vrot.lane.b32.xlu0 %v1305, 4
        %v4550 = vpop.permute.xlu0 %4549
        %4551 = vrot.lane.b32.xlu0 %v1308, 4
        %v4552 = vpop.permute.xlu0 %4551
        %4557 = vrot.lane.b32.xlu0 %v1580, 6
        %v4558 = vpop.permute.xlu0 %4557
        %4559 = vrot.lane.b32.xlu0 %v1583, 6
        %v4560 = vpop.permute.xlu0 %4559
        %4565 = vrot.lane.b32.xlu0 %v1855, 8
        %v4566 = vpop.permute.xlu0 %4565
        %4567 = vrot.lane.b32.xlu0 %v1858, 8
        %v4568 = vpop.permute.xlu0 %4567
        %4573 = vrot.lane.b32.xlu0 %v2130, 10
        %v4574 = vpop.permute.xlu0 %4573
        %4575 = vrot.lane.b32.xlu0 %v2133, 10
        %v4576 = vpop.permute.xlu0 %4575
        %4581 = vrot.lane.b32.xlu0 %v2405, 12
        %v4582 = vpop.permute.xlu0 %4581
        %4583 = vrot.lane.b32.xlu0 %v2408, 12
        %v4584 = vpop.permute.xlu0 %4583
        %4589 = vrot.lane.b32.xlu0 %v2680, 14
        %v4590 = vpop.permute.xlu0 %4589
        %4591 = vrot.lane.b32.xlu0 %v2683, 14
        %v4592 = vpop.permute.xlu0 %4591
        %4597 = vrot.lane.b32.xlu0 %v2909, 16
        %v4598 = vpop.permute.xlu0 %4597
        %4599 = vrot.lane.b32.xlu0 %v2912, 16
        %v4600 = vpop.permute.xlu0 %4599
        %4605 = vrot.lane.b32.xlu0 %v3141, 18
        %v4606 = vpop.permute.xlu0 %4605
        %4607 = vrot.lane.b32.xlu0 %v3144, 18
        %v4608 = vpop.permute.xlu0 %4607
        %4613 = vrot.lane.b32.xlu0 %v3373, 20
        %v4614 = vpop.permute.xlu0 %4613
        %4615 = vrot.lane.b32.xlu0 %v3376, 20
        %v4616 = vpop.permute.xlu0 %4615
        %4621 = vrot.lane.b32.xlu0 %v3605, 22
        %v4622 = vpop.permute.xlu0 %4621
        %4623 = vrot.lane.b32.xlu0 %v3608, 22
        %v4624 = vpop.permute.xlu0 %4623
        %4629 = vrot.lane.b32.xlu0 %v3837, 24
        %v4630 = vpop.permute.xlu0 %4629
        %4631 = vrot.lane.b32.xlu0 %v3840, 24
        %v4632 = vpop.permute.xlu0 %4631
        %4637 = vrot.lane.b32.xlu0 %v4069, 26
        %v4638 = vpop.permute.xlu0 %4637
        %4639 = vrot.lane.b32.xlu0 %v4072, 26
        %v4640 = vpop.permute.xlu0 %4639
        %4645 = vrot.lane.b32.xlu0 %v4301, 28
        %v4646 = vpop.permute.xlu0 %4645
        %4647 = vrot.lane.b32.xlu0 %v4304, 28
        %v4648 = vpop.permute.xlu0 %4647
        %4653 = vrot.lane.b32.xlu0 %v4533, 30
        %v4654 = vpop.permute.xlu0 %4653
        %4655 = vrot.lane.b32.xlu0 %v4536, 30
        %v4656 = vpop.permute.xlu0 %4655
        %v4659 = vsel %vm549, %v755, %v4542
        %v4660 = vsel %vm549, %v758, %v4544
        %v4661 = vsel %vm552, %v4659, %v4550
        %v4662 = vsel %vm552, %v4660, %v4552
        %v4663 = vsel %vm555, %v4661, %v4558
        %v4664 = vsel %vm555, %v4662, %v4560
        %v4665 = vsel %vm558, %v4663, %v4566
        %v4666 = vsel %vm558, %v4664, %v4568
        %v4667 = vsel %vm561, %v4665, %v4574
        %v4668 = vsel %vm561, %v4666, %v4576
        %v4669 = vsel %vm564, %v4667, %v4582
        %v4670 = vsel %vm564, %v4668, %v4584
        %v4671 = vsel %vm567, %v4669, %v4590
        %v4672 = vsel %vm567, %v4670, %v4592
        %v4673 = vsel %vm570, %v4671, %v4598
        %v4674 = vsel %vm570, %v4672, %v4600
        %v4675 = vsel %vm573, %v4673, %v4606
        %v4676 = vsel %vm573, %v4674, %v4608
        %v4677 = vsel %vm576, %v4675, %v4614
        %v4678 = vsel %vm576, %v4676, %v4616
        %v4679 = vsel %vm579, %v4677, %v4622
        %v4680 = vsel %vm579, %v4678, %v4624
        %v4681 = vsel %vm582, %v4679, %v4630
        %v4682 = vsel %vm582, %v4680, %v4632
        %v4683 = vsel %vm585, %v4681, %v4638
        %v4684 = vsel %vm585, %v4682, %v4640
        %v4685 = vsel %vm588, %v4683, %v4646
        %v4686 = vsel %vm588, %v4684, %v4648
        %v4687 = vsel %vm591, %v4685, %v4654
        %v4688 = vsel %vm591, %v4686, %v4656
        %v4689 = vld [vmem:[#allocation7] sm:$0x1]
        %v4691 = vlaneseq
        %v4692 = vshrl.u32 %v4691, 7
        %v4693 = vsub.s32 0, %v4692
        %v4694 = vrot.slane %v4689, %v4693
        %v4696 = vadd.f32 %v4687, %v4694
        %v4697 = vadd.f32 %v4688, %v4694
        %v4698 = vmul.f32 %v4696, 0.5
        %v4699 = vmul.f32 %v4697, 0.5
        %v4700 = vmul.f32 %v4696, 0.70710677
        %v4701 = vmul.f32 %v4697, 0.70710677
        %v4702 = verf.f32.pop %v4700
        %v4703 = verf.f32.pop %v4701
        %v4704 = vadd.f32 %v4702, 1.0
        %v4705 = vadd.f32 %v4703, 1.0
        %v4706 = vmul.f32 %v4698, %v4704
        %v4707 = vmul.f32 %v4699, %v4705
        %v4710 = vrot.slane %v4706, 4
        %v4711 = vrot.slane %v4707, 4
        %v4712 = vsel %vm438, %v4710, %v4711
        %v4716 = vadd.f32 %v395, %v4710
        %v4717 = vadd.f32 %v396, %v4712
        %v4718 = vadd.f32 %v397, %v4711
        %vm4719 = vcmask 261124
        %v4720 = vsel %vm4719, %v4716, 0.0
        %4721 = vadd.xlane.f32.xlu0 %v4720
        %v4722 = vpop.xlane.xlu0 %4721
        %v4723 = vsel %vm681, %v4717, 0.0
        %4724 = vadd.xlane.f32.xlu0 %v4723
        %v4725 = vpop.xlane.xlu0 %4724
        %vm4726 = vcmask 257024
        %v4727 = vsel %vm4726, %v4718, 0.0
        %4728 = vadd.xlane.f32.xlu0 %v4727
        %v4729 = vpop.xlane.xlu0 %4728
        %v4730 = vrcp.pop 32.0
        %v4731 = vmul.f32 %v4722, %v4730
        %v4732 = vmul.f32 %v4725, %v4730
        %v4733 = vmul.f32 %v4729, %v4730
        %v4734 = vsub.f32 %v4716, %v4731
        %v4735 = vsub.f32 %v4717, %v4732
        %v4736 = vsub.f32 %v4718, %v4733
        %v4737 = vmul.f32 %v4734, %v4734
        %v4738 = vmul.f32 %v4735, %v4735
        %v4739 = vmul.f32 %v4736, %v4736
        %v4740 = vsel %vm4719, %v4737, 0.0
        %4741 = vadd.xlane.f32.xlu0 %v4740
        %v4742 = vpop.xlane.xlu0 %4741
        %v4743 = vsel %vm681, %v4738, 0.0
        %4744 = vadd.xlane.f32.xlu0 %v4743
        %v4745 = vpop.xlane.xlu0 %4744
        %v4746 = vsel %vm4726, %v4739, 0.0
        %4747 = vadd.xlane.f32.xlu0 %v4746
        %v4748 = vpop.xlane.xlu0 %4747
        %v4749 = vmul.f32 %v4742, %v4730
        %v4750 = vmul.f32 %v4745, %v4730
        %v4751 = vmul.f32 %v4748, %v4730
        %v4752 = vadd.f32 %v4749, 1e-05
        %v4753 = vadd.f32 %v4750, 1e-05
        %v4754 = vadd.f32 %v4751, 1e-05
        %v4755 = vrsqrt.pop %v4752
        %v4756 = vrsqrt.pop %v4753
        %v4757 = vrsqrt.pop %v4754
        %v4758 = vmul.f32 %v4734, %v4755
        %v4759 = vmul.f32 %v4735, %v4756
        %v4760 = vmul.f32 %v4736, %v4757
        %v4761 = vld [vmem:[#allocation8] sm:$0x1]
        %v4763 = vlaneseq
        %v4764 = vshrl.u32 %v4763, 7
        %v4765 = vsub.s32 0, %v4764
        %v4766 = vrot.slane %v4761, %v4765
        %v4768 = vmul.f32 %v4758, %v4766
        %v4769 = vmul.f32 %v4759, %v4766
        %v4770 = vmul.f32 %v4760, %v4766
        %v4771 = vld [vmem:[#allocation10] sm:$0x1]
        %v4773 = vlaneseq
        %v4774 = vshrl.u32 %v4773, 7
        %v4775 = vsub.s32 0, %v4774
        %v4776 = vrot.slane %v4771, %v4775
        %v4778 = vadd.f32 %v4768, %v4776
        %v4779 = vadd.f32 %v4769, %v4776
        %v4780 = vadd.f32 %v4770, %v4776
        %v4781 = vpack.c.bf16 %v4779, %v4778
        %v4782 = vpack.c.bf16 %v4780, %v4780
        %v4783 = vld [vmem:[#allocation11] sm:$0xf]
        %v4784 = vld [vmem:[#allocation11 + $0x4] sm:$0xf]
        %v4785 = vld [vmem:[#allocation11 + $0x8] sm:$0xf]
        %v4786 = vld [vmem:[#allocation11 + $0xc] sm:$0xf]
        %v4787 = vld [vmem:[#allocation13] sm:$0x1]
        %v4789 = vlaneseq
        %v4790 = vshrl.u32 %v4789, 7
        %v4791 = vsub.s32 0, %v4790
        %v4792 = vrot.slane %v4787, %v4791
        %vm4796 = vcmask 1045504
        %v4797 = vrot.slane %v4781, 2
        %v4798 = vrot.slane %v4782, 2
        %v4799 = vsel %vm4796, %v4797, %v4798
        %v4804 = vunpack.c.l.b16 %v4783
        %v4805 = vunpack.c.l.b16 %v4784
        %v4806 = vunpack.c.l.b16 %v4785
        %v4807 = vunpack.c.l.b16 %v4786
        %v4808 = vpack.c.b16 %v4805, %v4804
        %v4809 = vpack.c.b16 %v4807, %v4806
        %v4813 = vsel %vm681, %v4799, 0
        %4815 = vmatprep.subr.bf16.mxu0 0
        %4816 = vmatpush1.bf16.msra.mxu0 %v4808
        %4817 = vmatprep.subr.bf16.mxu0 0
        %4818 = vmatpush1.bf16.msra.mxu0 %v4809
        %4819 = vmatprep.subr.bf16.mxu0 0
        %4820 = vmatpush1.bf16.msra.mxu0 0
        %4821 = vmatprep.subr.bf16.mxu0 0
        %4822 = vmatpush1.bf16.msra.mxu0 0
        %4823 = vmatprep.subr.bf16.mxu0 0
        %4824 = vmatpush1.bf16.msra.mxu0 0
        %4825 = vmatprep.subr.bf16.mxu0 0
        %4826 = vmatpush1.bf16.msra.mxu0 0
        %4827 = vmatprep.subr.bf16.mxu0 0
        %4828 = vmatpush1.bf16.msra.mxu0 0
        %4829 = vmatprep.subr.bf16.mxu0 0
        %4830 = vmatpush1.bf16.msra.mxu0 0
        %4831 = vmatprep.subr.bf16.mxu0 0
        %4832 = vmatpush1.bf16.msra.mxu0 0
        %4833 = vmatprep.subr.bf16.mxu0 0
        %4834 = vmatpush1.bf16.msra.mxu0 0
        %4835 = vmatprep.subr.bf16.mxu0 0
        %4836 = vmatpush1.bf16.msra.mxu0 0
        %4837 = vmatprep.subr.bf16.mxu0 0
        %4838 = vmatpush1.bf16.msra.mxu0 0
        %4839 = vmatprep.subr.bf16.mxu0 0
        %4840 = vmatpush1.bf16.msra.mxu0 0
        %4841 = vmatprep.subr.bf16.mxu0 0
        %4842 = vmatpush1.bf16.msra.mxu0 0
        %4843 = vmatprep.subr.bf16.mxu0 0
        %4844 = vmatpush1.bf16.msra.mxu0 0
        %4845 = vmatprep.subr.bf16.mxu0 0
        %4846 = vmatpush1.bf16.msra.mxu0 0
        %4847 = vmatprep.mubr.bf16.mxu0 0
        %4848 = vmatmul.mubr.bf16.gmra.mrb[0].mxu0 %v4813
        %v4849 = vpop.f32.mrb[0].mxu0
        %v4850 = vadd.f32 %v4792, %v4849
        %v4851 = vpop.f32.mrb[0].mxu0
        %v4852 = vpop.f32.mrb[0].mxu0
        %v4853 = vadd.f32 %v4792, %v4852
        %v4854 = vpop.f32.mrb[0].mxu0
        %4855 = vdwg.mxu0
        %vm4856 = vcmask 785408
        %4857 = vst.msk [vmem:[%s389] sm:$0xff] %vm4856, %v4850
        %4858 = vst.msk [vmem:[%s389 + $0x8] sm:$0xff] %vm4856, %v4853
        %s4859 = sand.u32 %s201, 1
        %s4860 = scalar_lea.sflag [#allocation4], %s4859
        %s4861 = sand.u32 %s201, 1
        %s4862 = smul.addr %s4861, 16
        %s4863 = scalar_lea.vmem [#allocation14], %s4862
        // Predicated region
        $region77: #{tpu_custom_call.1} parent=47 // pred_check
          %p4864 = pneg %p211
        $region78: #{tpu_custom_call.1} parent=47 // pred_check_branch
          %4866 = sbr.rel (%p4864) target = $region80
        $region79: #{tpu_custom_call.1} parent=47 // pred_region
          %s4867 = smul.u32 2, %s32
          %s4869 = ssub.s32 256, 256
          %4870 = vsyncadd %s4860, %s4869
          %s4871 = smul.addr %s31, 2
          %s4872 = sadd.s32 %s4867, %s4871
          %s4873 = smul.addr %s4872, 128
          %s4874 = scalar_lea.hbm %s7, %s4873
          %s4875 = sshll.u32 %s4863, 4
          %s4876 = int_to_ptr.vmem [resolvable:$true] %s4875
          %4881 = dma.vmem_to_hbm [thread:$0]  %s4876, 256, %s4874, %s4860, 128, 128, 8
        $region80: #{tpu_custom_call.1} parent=47 // pred_fallthru
          _
      $region48: #{tpu_custom_call.1} parent=5 // pred_fallthru
        _
      %p4882 = scmp.le.s32.totalorder 2, %s22
      // Predicated region
      $region81: #{tpu_custom_call.1} parent=5 // pred_check
        %p4883 = pneg %p4882
      $region82: #{tpu_custom_call.1} parent=5 // pred_check_branch
        %4885 = sbr.rel (%p4883) target = $region84
      $region83: #{tpu_custom_call.1} parent=5 // pred_region
        %s4886 = ssub.s32 %s22, 2
        // Predicated region
        $region85: #{tpu_custom_call.1} parent=83 // pred_check
          %p4887 = pneg %p217
        $region86: #{tpu_custom_call.1} parent=83 // pred_check_branch
          %4889 = sbr.rel (%p4887) target = $region88
        $region87: #{tpu_custom_call.1} parent=83 // pred_region
          %s4890 = sand.u32 %s202, 1
          %s4891 = scalar_lea.sflag [#allocation4], %s4890
          %s4892 = sand.u32 %s202, 1
          %s4893 = smul.addr %s4892, 16
          %s4894 = scalar_lea.vmem [#allocation14], %s4893
          %4895 = dma.done %s4891, 256
        $region88: #{tpu_custom_call.1} parent=83 // pred_fallthru
          _
      $region84: #{tpu_custom_call.1} parent=5 // pred_fallthru
        _
    $region6: #{tpu_custom_call.1} parent=1 // loop_footer
      %s26 = sadd.s32 1, %s22
    $region7: #{tpu_custom_call.1} parent=1 // loop_footer_branch
      %21 = sbr.rel target = $region3
    $region8: #{tpu_custom_call.1} parent=1 // loop_exit
      _
    %4896 = vsyncpa [#allocation3], 1
    %s4897 = scalar_lea.sflag [#allocation3], 1
    %4898 = vsyncpa %s4897, 1
    %4899 = vsyncpa [#allocation6], 1
    %4900 = vsyncpa [#allocation9], 1
    %4901 = vsyncpa [#allocation12], 1
    %4902 = vsyncpa [#allocation4], 1
    %s4903 = scalar_lea.sflag [#allocation4], 1
    %4904 = vsyncpa %s4903, 1

</llo_original>
